<compile_context>
chip_gen: v5e
topology: v5e:2x2
jax: 0.10.0
libtpu: 0.0.40
codegen_flags: <defaults>
</compile_context>

<pallas_src>
import functools

import jax
import jax.numpy as jnp
from jax.experimental import pallas as pl
from jax.experimental.pallas import tpu as pltpu  # noqa: F401  (TPU backend)

# Small AlexNet-style config (mirrors the keys the PyTorch module expects).
CONFIG = {
    "features": {
        "in_channels1": 3,  "out_channels1": 16, "kernel_size1": 3, "stride1": 1, "padding1": 1,
        "kernel_size_pool1": 2, "stride_pool1": 2,
        "in_channels2": 16, "out_channels2": 32, "kernel_size2": 3, "stride2": 1, "padding2": 1,
        "kernel_size_pool2": 2, "stride_pool2": 2,
        "in_channels3": 32, "out_channels3": 48, "kernel_size3": 3, "stride3": 1, "padding3": 1,
        "in_channels4": 48, "out_channels4": 48, "kernel_size4": 3, "stride4": 1, "padding4": 1,
        "in_channels5": 48, "out_channels5": 32, "kernel_size5": 3, "stride5": 1, "padding5": 1,
        "kernel_size_pool3": 2, "stride_pool3": 2,
    },
    "classifier": {
        "linear_input": 32 * 4 * 4,   # 512, matches features output for 32x32 input
        "linear_hidden1": 64,
        "linear_hidden2": 64,
        "num_classes": 10,
    },
}


# ---------------------------------------------------------------------------
# Pallas kernels
# ---------------------------------------------------------------------------
def _conv_relu_pool_kernel(w_ref, b_ref, *refs, nq):
    """out(O, M) = relu( max_q( W(O,K) @ colsT_q(K,M) ) + b(O,1) ).

    nq == pool_k**2 pool-window offsets (nq == 1 means no pooling).  Operands
    are bf16, MXU accumulation and the bias/ReLU/max epilogue are f32.  The
    output's last (lane) dim is the large spatial dim M, so stores are
    lane-dense.
    """
    col_refs, o_ref = refs[:-1], refs[-1]
    w = w_ref[...]
    acc = jnp.dot(w, col_refs[0][...], preferred_element_type=jnp.float32)
    for q in range(1, nq):
        acc = jnp.maximum(
            acc, jnp.dot(w, col_refs[q][...], preferred_element_type=jnp.float32))
    acc = jnp.maximum(acc + b_ref[...], 0.0)
    o_ref[...] = acc.astype(o_ref.dtype)


def _classifier_kernel(x_ref, w1_ref, b1_ref, w2_ref, b2_ref, w3_ref, b3_ref, o_ref):
    """Fused fc1+ReLU+fc2+ReLU+fc3 (Dropout = inference identity)."""
    h = jnp.dot(x_ref[...], w1_ref[...], preferred_element_type=jnp.float32) + b1_ref[...]
    h = jnp.maximum(h, 0.0).astype(jnp.bfloat16)
    h = jnp.dot(h, w2_ref[...], preferred_element_type=jnp.float32) + b2_ref[...]
    h = jnp.maximum(h, 0.0).astype(jnp.bfloat16)
    o_ref[...] = jnp.dot(h, w3_ref[...], preferred_element_type=jnp.float32) + b3_ref[...]


# ---------------------------------------------------------------------------
# Layer wrappers (XLA glue builds transposed im2col slabs; Pallas does the math)
# ---------------------------------------------------------------------------
def conv_relu_pool(x, wt, b, *, ks, stride, pad, pool_k=None, pool_s=None):
    """x: (C, N, H, W) bf16 channel-major.  wt: (O, Kpad) bf16.  b: (O, 1) f32.

    Returns (O, N, PH, PW) bf16 (post conv+ReLU[+maxpool]).
    """
    c, n, h, w = x.shape
    if pool_k is None:
        pool_k, pool_s = 1, 1
    xp = jnp.pad(x, ((0, 0), (0, 0), (pad, pad), (pad, pad)))
    oh = (h + 2 * pad - ks) // stride + 1
    ow = (w + 2 * pad - ks) // stride + 1
    ph = (oh - pool_k) // pool_s + 1
    pw = (ow - pool_k) // pool_s + 1
    m = n * ph * pw
    k_real = ks * ks * c
    k_pad = wt.shape[1]
    rstep = pool_s * stride

    groups = []
    for qi in range(pool_k):
        for qj in range(pool_k):
            slabs = []
            for di in range(ks):
                for dj in range(ks):
                    r0 = qi * stride + di
                    c0 = qj * stride + dj
                    sl = xp[:, :,
                            r0: r0 + rstep * (ph - 1) + 1: rstep,
                            c0: c0 + rstep * (pw - 1) + 1: rstep]
                    slabs.append(sl.reshape(c, m))
            g = jnp.concatenate(slabs, axis=0)          # (k_real, M), K = (di,dj,c)
            if k_pad > k_real:
                g = jnp.pad(g, ((0, k_pad - k_real), (0, 0)))
            groups.append(g.astype(jnp.bfloat16))

    o = wt.shape[0]
    out = pl.pallas_call(
        functools.partial(_conv_relu_pool_kernel, nq=len(groups)),
        out_shape=jax.ShapeDtypeStruct((o, m), jnp.bfloat16),
    )(wt, b, *groups)
    return out.reshape(o, n, ph, pw)


def classifier(x_flat, pp):
    """x_flat: (N, 512) in torch flatten order. Returns (N, num_classes) f32."""
    w1, b1 = pp["fc1"]
    w2, b2 = pp["fc2"]
    w3, b3 = pp["fc3"]
    n = x_flat.shape[0]
    return pl.pallas_call(
        _classifier_kernel,
        out_shape=jax.ShapeDtypeStruct((n, w3.shape[1]), jnp.float32),
    )(x_flat.astype(jnp.bfloat16), w1, b1, w2, b2, w3, b3)


# ---------------------------------------------------------------------------
# Deterministic parameter init (PyTorch default: U(-1/sqrt(fan_in), 1/sqrt(fan_in)))
# ---------------------------------------------------------------------------
def _init_conv(key, o, i, k):
    kw_, kb = jax.random.split(key)
    bound = 1.0 / (i * k * k) ** 0.5
    w = jax.random.uniform(kw_, (o, i, k, k), jnp.float32, -bound, bound)
    b = jax.random.uniform(kb, (o,), jnp.float32, -bound, bound)
    return w, b


def _init_linear(key, in_f, out_f):
    kw_, kb = jax.random.split(key)
    bound = 1.0 / in_f ** 0.5
    # stored already transposed to (in, out) so the kernel computes x @ W^T + b
    w = jax.random.uniform(kw_, (in_f, out_f), jnp.float32, -bound, bound)
    b = jax.random.uniform(kb, (out_f,), jnp.float32, -bound, bound)
    return w, b


def init_params(key):
    f, cl = CONFIG["features"], CONFIG["classifier"]
    keys = jax.random.split(key, 8)
    return {
        "conv1": _init_conv(keys[0], f["out_channels1"], f["in_channels1"], f["kernel_size1"]),
        "conv2": _init_conv(keys[1], f["out_channels2"], f["in_channels2"], f["kernel_size2"]),
        "conv3": _init_conv(keys[2], f["out_channels3"], f["in_channels3"], f["kernel_size3"]),
        "conv4": _init_conv(keys[3], f["out_channels4"], f["in_channels4"], f["kernel_size4"]),
        "conv5": _init_conv(keys[4], f["out_channels5"], f["in_channels5"], f["kernel_size5"]),
        "fc1": _init_linear(keys[5], cl["linear_input"], cl["linear_hidden1"]),
        "fc2": _init_linear(keys[6], cl["linear_hidden1"], cl["linear_hidden2"]),
        "fc3": _init_linear(keys[7], cl["linear_hidden2"], cl["num_classes"]),
    }


def prepare_params(params):
    """One-time weight prep: transpose to (O, K) with K=(kh,kw,cin), pad K to a
    multiple of 16 (bf16 sublane pack), cast operands to bf16, biases to f32."""
    pp = {}
    for i in range(1, 6):
        w, b = params[f"conv{i}"]                       # (O, I, KH, KW), (O,)
        o, ic, kh, kw = w.shape
        k_real = kh * kw * ic
        k_pad = ((k_real + 15) // 16) * 16
        wt = jnp.transpose(w, (0, 2, 3, 1)).reshape(o, k_real)
        if k_pad > k_real:
            wt = jnp.pad(wt, ((0, 0), (0, k_pad - k_real)))
        pp[f"conv{i}"] = (wt.astype(jnp.bfloat16), b.reshape(o, 1).astype(jnp.float32))
    for name in ("fc1", "fc2", "fc3"):
        w, b = params[name]                             # (in, out), (out,)
        pp[name] = (w.astype(jnp.bfloat16), b.reshape(1, -1).astype(jnp.float32))
    return pp


# ---------------------------------------------------------------------------
# Forward pass (matches AlexNet.forward)
# ---------------------------------------------------------------------------
def alexnet_forward(pp, x_nchw):
    f = CONFIG["features"]
    # NCHW -> channel-major (C, N, H, W), bf16 operands for the MXU.
    x = jnp.transpose(x_nchw, (1, 0, 2, 3)).astype(jnp.bfloat16)

    # features: conv+ReLU(+fused maxpool) kernels
    x = conv_relu_pool(x, *pp["conv1"], ks=f["kernel_size1"], stride=f["stride1"],
                       pad=f["padding1"], pool_k=f["kernel_size_pool1"],
                       pool_s=f["stride_pool1"])
    x = conv_relu_pool(x, *pp["conv2"], ks=f["kernel_size2"], stride=f["stride2"],
                       pad=f["padding2"], pool_k=f["kernel_size_pool2"],
                       pool_s=f["stride_pool2"])
    x = conv_relu_pool(x, *pp["conv3"], ks=f["kernel_size3"], stride=f["stride3"],
                       pad=f["padding3"])
    x = conv_relu_pool(x, *pp["conv4"], ks=f["kernel_size4"], stride=f["stride4"],
                       pad=f["padding4"])
    x = conv_relu_pool(x, *pp["conv5"], ks=f["kernel_size5"], stride=f["stride5"],
                       pad=f["padding5"], pool_k=f["kernel_size_pool3"],
                       pool_s=f["stride_pool3"])

    # torch.flatten(x, 1) on NCHW == bring batch back to the front (tiny: 1 KiB).
    c, n, ph, pw = x.shape
    x_flat = jnp.transpose(x, (1, 0, 2, 3)).reshape(n, c * ph * pw)

    # classifier (single fused kernel)
    # TODO(synk): nn.Dropout(p=0.5) is stochastic at train time; modeled as
    # inference-mode identity here.
    return classifier(x_flat, pp)


if __name__ == "__main__":
    key = jax.random.PRNGKey(0)
    pkey, xkey = jax.random.split(key)
    params = init_params(pkey)
    pp = prepare_params(params)
    x = jax.random.normal(xkey, (2, 3, 32, 32), jnp.float32)  # NCHW, like PyTorch

    fwd = jax.jit(alexnet_forward)
    out = fwd(pp, x)
    jax.block_until_ready(out)
    assert out.shape == (2, CONFIG["classifier"]["num_classes"]), out.shape
    print("KERNEL_OK")
</pallas_src>

<mosaic_0001>
module attributes {stable_mosaic.version = 11 : i64} {
  func.func @_conv_relu_pool_kernel(%arg0: memref<16x32xbf16, #tpu.memory_space<vmem>>, %arg1: memref<16x1xf32, #tpu.memory_space<vmem>>, %arg2: memref<32x512xbf16, #tpu.memory_space<vmem>>, %arg3: memref<32x512xbf16, #tpu.memory_space<vmem>>, %arg4: memref<32x512xbf16, #tpu.memory_space<vmem>>, %arg5: memref<32x512xbf16, #tpu.memory_space<vmem>>, %arg6: memref<16x512xbf16, #tpu.memory_space<vmem>>) attributes {dimension_semantics = [], scalar_prefetch = 0 : i64, scratch_operands = 0 : i64, tpu.core_type = #tpu.core_type<tc>} {
    %c0 = arith.constant 0 : index
    %c0_0 = arith.constant 0 : index
    %0 = vector.load %arg0[%c0, %c0_0] : memref<16x32xbf16, #tpu.memory_space<vmem>>, vector<16x32xbf16>
    %c0_1 = arith.constant 0 : index
    %c0_2 = arith.constant 0 : index
    %1 = vector.load %arg2[%c0_1, %c0_2] : memref<32x512xbf16, #tpu.memory_space<vmem>>, vector<32x512xbf16>
    %cst = arith.constant dense<0.000000e+00> : vector<16x512xf32>
    %2 = tpu.matmul %0, %1, %cst {dimension_numbers = #tpu.dot_dimension_numbers<[1], [0], [0], [1], [0, 0, 1, 1], [], []>} : vector<16x32xbf16>, vector<32x512xbf16>, vector<16x512xf32> -> vector<16x512xf32>
    %c0_3 = arith.constant 0 : index
    %c0_4 = arith.constant 0 : index
    %3 = vector.load %arg3[%c0_3, %c0_4] : memref<32x512xbf16, #tpu.memory_space<vmem>>, vector<32x512xbf16>
    %cst_5 = arith.constant dense<0.000000e+00> : vector<16x512xf32>
    %4 = tpu.matmul %0, %3, %cst_5 {dimension_numbers = #tpu.dot_dimension_numbers<[1], [0], [0], [1], [0, 0, 1, 1], [], []>} : vector<16x32xbf16>, vector<32x512xbf16>, vector<16x512xf32> -> vector<16x512xf32>
    %5 = arith.maximumf %2, %4 : vector<16x512xf32>
    %c0_6 = arith.constant 0 : index
    %c0_7 = arith.constant 0 : index
    %6 = vector.load %arg4[%c0_6, %c0_7] : memref<32x512xbf16, #tpu.memory_space<vmem>>, vector<32x512xbf16>
    %cst_8 = arith.constant dense<0.000000e+00> : vector<16x512xf32>
    %7 = tpu.matmul %0, %6, %cst_8 {dimension_numbers = #tpu.dot_dimension_numbers<[1], [0], [0], [1], [0, 0, 1, 1], [], []>} : vector<16x32xbf16>, vector<32x512xbf16>, vector<16x512xf32> -> vector<16x512xf32>
    %8 = arith.maximumf %5, %7 : vector<16x512xf32>
    %c0_9 = arith.constant 0 : index
    %c0_10 = arith.constant 0 : index
    %9 = vector.load %arg5[%c0_9, %c0_10] : memref<32x512xbf16, #tpu.memory_space<vmem>>, vector<32x512xbf16>
    %cst_11 = arith.constant dense<0.000000e+00> : vector<16x512xf32>
    %10 = tpu.matmul %0, %9, %cst_11 {dimension_numbers = #tpu.dot_dimension_numbers<[1], [0], [0], [1], [0, 0, 1, 1], [], []>} : vector<16x32xbf16>, vector<32x512xbf16>, vector<16x512xf32> -> vector<16x512xf32>
    %11 = arith.maximumf %8, %10 : vector<16x512xf32>
    %c0_12 = arith.constant 0 : index
    %c0_13 = arith.constant 0 : index
    %12 = vector.load %arg1[%c0_12, %c0_13] : memref<16x1xf32, #tpu.memory_space<vmem>>, vector<16x1xf32>
    %13 = vector.broadcast %12 : vector<16x1xf32> to vector<16x512xf32>
    %14 = arith.addf %11, %13 : vector<16x512xf32>
    %cst_14 = arith.constant 0.000000e+00 : f32
    %15 = vector.broadcast %cst_14 : f32 to vector<16x512xf32>
    %16 = arith.maximumf %14, %15 : vector<16x512xf32>
    %17 = arith.truncf %16 : vector<16x512xf32> to vector<16x512xbf16>
    %c0_15 = arith.constant 0 : index
    %c0_16 = arith.constant 0 : index
    %18 = vector.load %arg6[%c0_15, %c0_16] : memref<16x512xbf16, #tpu.memory_space<vmem>>, vector<16x512xbf16>
    tpu.vector_store %arg6[%c0_15, %c0_16], %17 {strides = array<i32>} : memref<16x512xbf16, #tpu.memory_space<vmem>>, vector<16x512xbf16>,
    return
  }
}

module attributes {stable_mosaic.version = 11 : i64} {
  func.func @_conv_relu_pool_kernel(%arg0: memref<32x144xbf16, #tpu.memory_space<vmem>>, %arg1: memref<32x1xf32, #tpu.memory_space<vmem>>, %arg2: memref<144x128xbf16, #tpu.memory_space<vmem>>, %arg3: memref<144x128xbf16, #tpu.memory_space<vmem>>, %arg4: memref<144x128xbf16, #tpu.memory_space<vmem>>, %arg5: memref<144x128xbf16, #tpu.memory_space<vmem>>, %arg6: memref<32x128xbf16, #tpu.memory_space<vmem>>) attributes {dimension_semantics = [], scalar_prefetch = 0 : i64, scratch_operands = 0 : i64, tpu.core_type = #tpu.core_type<tc>} {
    %c0 = arith.constant 0 : index
    %c0_0 = arith.constant 0 : index
    %0 = vector.load %arg0[%c0, %c0_0] : memref<32x144xbf16, #tpu.memory_space<vmem>>, vector<32x144xbf16>
    %c0_1 = arith.constant 0 : index
    %c0_2 = arith.constant 0 : index
    %1 = vector.load %arg2[%c0_1, %c0_2] : memref<144x128xbf16, #tpu.memory_space<vmem>>, vector<144x128xbf16>
    %cst = arith.constant dense<0.000000e+00> : vector<32x128xf32>
    %2 = tpu.matmul %0, %1, %cst {dimension_numbers = #tpu.dot_dimension_numbers<[1], [0], [0], [1], [0, 0, 1, 1], [], []>} : vector<32x144xbf16>, vector<144x128xbf16>, vector<32x128xf32> -> vector<32x128xf32>
    %c0_3 = arith.constant 0 : index
    %c0_4 = arith.constant 0 : index
    %3 = vector.load %arg3[%c0_3, %c0_4] : memref<144x128xbf16, #tpu.memory_space<vmem>>, vector<144x128xbf16>
    %cst_5 = arith.constant dense<0.000000e+00> : vector<32x128xf32>
    %4 = tpu.matmul %0, %3, %cst_5 {dimension_numbers = #tpu.dot_dimension_numbers<[1], [0], [0], [1], [0, 0, 1, 1], [], []>} : vector<32x144xbf16>, vector<144x128xbf16>, vector<32x128xf32> -> vector<32x128xf32>
    %5 = arith.maximumf %2, %4 : vector<32x128xf32>
    %c0_6 = arith.constant 0 : index
    %c0_7 = arith.constant 0 : index
    %6 = vector.load %arg4[%c0_6, %c0_7] : memref<144x128xbf16, #tpu.memory_space<vmem>>, vector<144x128xbf16>
    %cst_8 = arith.constant dense<0.000000e+00> : vector<32x128xf32>
    %7 = tpu.matmul %0, %6, %cst_8 {dimension_numbers = #tpu.dot_dimension_numbers<[1], [0], [0], [1], [0, 0, 1, 1], [], []>} : vector<32x144xbf16>, vector<144x128xbf16>, vector<32x128xf32> -> vector<32x128xf32>
    %8 = arith.maximumf %5, %7 : vector<32x128xf32>
    %c0_9 = arith.constant 0 : index
    %c0_10 = arith.constant 0 : index
    %9 = vector.load %arg5[%c0_9, %c0_10] : memref<144x128xbf16, #tpu.memory_space<vmem>>, vector<144x128xbf16>
    %cst_11 = arith.constant dense<0.000000e+00> : vector<32x128xf32>
    %10 = tpu.matmul %0, %9, %cst_11 {dimension_numbers = #tpu.dot_dimension_numbers<[1], [0], [0], [1], [0, 0, 1, 1], [], []>} : vector<32x144xbf16>, vector<144x128xbf16>, vector<32x128xf32> -> vector<32x128xf32>
    %11 = arith.maximumf %8, %10 : vector<32x128xf32>
    %c0_12 = arith.constant 0 : index
    %c0_13 = arith.constant 0 : index
    %12 = vector.load %arg1[%c0_12, %c0_13] : memref<32x1xf32, #tpu.memory_space<vmem>>, vector<32x1xf32>
    %13 = vector.broadcast %12 : vector<32x1xf32> to vector<32x128xf32>
    %14 = arith.addf %11, %13 : vector<32x128xf32>
    %cst_14 = arith.constant 0.000000e+00 : f32
    %15 = vector.broadcast %cst_14 : f32 to vector<32x128xf32>
    %16 = arith.maximumf %14, %15 : vector<32x128xf32>
    %17 = arith.truncf %16 : vector<32x128xf32> to vector<32x128xbf16>
    %c0_15 = arith.constant 0 : index
    %c0_16 = arith.constant 0 : index
    %18 = vector.load %arg6[%c0_15, %c0_16] : memref<32x128xbf16, #tpu.memory_space<vmem>>, vector<32x128xbf16>
    tpu.vector_store %arg6[%c0_15, %c0_16], %17 {strides = array<i32>} : memref<32x128xbf16, #tpu.memory_space<vmem>>, vector<32x128xbf16>,
    return
  }
}

module attributes {stable_mosaic.version = 11 : i64} {
  func.func @_conv_relu_pool_kernel(%arg0: memref<48x288xbf16, #tpu.memory_space<vmem>>, %arg1: memref<48x1xf32, #tpu.memory_space<vmem>>, %arg2: memref<288x128xbf16, #tpu.memory_space<vmem>>, %arg3: memref<48x128xbf16, #tpu.memory_space<vmem>>) attributes {dimension_semantics = [], scalar_prefetch = 0 : i64, scratch_operands = 0 : i64, tpu.core_type = #tpu.core_type<tc>} {
    %c0 = arith.constant 0 : index
    %c0_0 = arith.constant 0 : index
    %0 = vector.load %arg0[%c0, %c0_0] : memref<48x288xbf16, #tpu.memory_space<vmem>>, vector<48x288xbf16>
    %c0_1 = arith.constant 0 : index
    %c0_2 = arith.constant 0 : index
    %1 = vector.load %arg2[%c0_1, %c0_2] : memref<288x128xbf16, #tpu.memory_space<vmem>>, vector<288x128xbf16>
    %cst = arith.constant dense<0.000000e+00> : vector<48x128xf32>
    %2 = tpu.matmul %0, %1, %cst {dimension_numbers = #tpu.dot_dimension_numbers<[1], [0], [0], [1], [0, 0, 1, 1], [], []>} : vector<48x288xbf16>, vector<288x128xbf16>, vector<48x128xf32> -> vector<48x128xf32>
    %c0_3 = arith.constant 0 : index
    %c0_4 = arith.constant 0 : index
    %3 = vector.load %arg1[%c0_3, %c0_4] : memref<48x1xf32, #tpu.memory_space<vmem>>, vector<48x1xf32>
    %4 = vector.broadcast %3 : vector<48x1xf32> to vector<48x128xf32>
    %5 = arith.addf %2, %4 : vector<48x128xf32>
    %cst_5 = arith.constant 0.000000e+00 : f32
    %6 = vector.broadcast %cst_5 : f32 to vector<48x128xf32>
    %7 = arith.maximumf %5, %6 : vector<48x128xf32>
    %8 = arith.truncf %7 : vector<48x128xf32> to vector<48x128xbf16>
    %c0_6 = arith.constant 0 : index
    %c0_7 = arith.constant 0 : index
    %9 = vector.load %arg3[%c0_6, %c0_7] : memref<48x128xbf16, #tpu.memory_space<vmem>>, vector<48x128xbf16>
    tpu.vector_store %arg3[%c0_6, %c0_7], %8 {strides = array<i32>} : memref<48x128xbf16, #tpu.memory_space<vmem>>, vector<48x128xbf16>,
    return
  }
}

module attributes {stable_mosaic.version = 11 : i64} {
  func.func @_conv_relu_pool_kernel(%arg0: memref<48x432xbf16, #tpu.memory_space<vmem>>, %arg1: memref<48x1xf32, #tpu.memory_space<vmem>>, %arg2: memref<432x128xbf16, #tpu.memory_space<vmem>>, %arg3: memref<48x128xbf16, #tpu.memory_space<vmem>>) attributes {dimension_semantics = [], scalar_prefetch = 0 : i64, scratch_operands = 0 : i64, tpu.core_type = #tpu.core_type<tc>} {
    %c0 = arith.constant 0 : index
    %c0_0 = arith.constant 0 : index
    %0 = vector.load %arg0[%c0, %c0_0] : memref<48x432xbf16, #tpu.memory_space<vmem>>, vector<48x432xbf16>
    %c0_1 = arith.constant 0 : index
    %c0_2 = arith.constant 0 : index
    %1 = vector.load %arg2[%c0_1, %c0_2] : memref<432x128xbf16, #tpu.memory_space<vmem>>, vector<432x128xbf16>
    %cst = arith.constant dense<0.000000e+00> : vector<48x128xf32>
    %2 = tpu.matmul %0, %1, %cst {dimension_numbers = #tpu.dot_dimension_numbers<[1], [0], [0], [1], [0, 0, 1, 1], [], []>} : vector<48x432xbf16>, vector<432x128xbf16>, vector<48x128xf32> -> vector<48x128xf32>
    %c0_3 = arith.constant 0 : index
    %c0_4 = arith.constant 0 : index
    %3 = vector.load %arg1[%c0_3, %c0_4] : memref<48x1xf32, #tpu.memory_space<vmem>>, vector<48x1xf32>
    %4 = vector.broadcast %3 : vector<48x1xf32> to vector<48x128xf32>
    %5 = arith.addf %2, %4 : vector<48x128xf32>
    %cst_5 = arith.constant 0.000000e+00 : f32
    %6 = vector.broadcast %cst_5 : f32 to vector<48x128xf32>
    %7 = arith.maximumf %5, %6 : vector<48x128xf32>
    %8 = arith.truncf %7 : vector<48x128xf32> to vector<48x128xbf16>
    %c0_6 = arith.constant 0 : index
    %c0_7 = arith.constant 0 : index
    %9 = vector.load %arg3[%c0_6, %c0_7] : memref<48x128xbf16, #tpu.memory_space<vmem>>, vector<48x128xbf16>
    tpu.vector_store %arg3[%c0_6, %c0_7], %8 {strides = array<i32>} : memref<48x128xbf16, #tpu.memory_space<vmem>>, vector<48x128xbf16>,
    return
  }
}

module attributes {stable_mosaic.version = 11 : i64} {
  func.func @_conv_relu_pool_kernel(%arg0: memref<32x432xbf16, #tpu.memory_space<vmem>>, %arg1: memref<32x1xf32, #tpu.memory_space<vmem>>, %arg2: memref<432x32xbf16, #tpu.memory_space<vmem>>, %arg3: memref<432x32xbf16, #tpu.memory_space<vmem>>, %arg4: memref<432x32xbf16, #tpu.memory_space<vmem>>, %arg5: memref<432x32xbf16, #tpu.memory_space<vmem>>, %arg6: memref<32x32xbf16, #tpu.memory_space<vmem>>) attributes {dimension_semantics = [], scalar_prefetch = 0 : i64, scratch_operands = 0 : i64, tpu.core_type = #tpu.core_type<tc>} {
    %c0 = arith.constant 0 : index
    %c0_0 = arith.constant 0 : index
    %0 = vector.load %arg0[%c0, %c0_0] : memref<32x432xbf16, #tpu.memory_space<vmem>>, vector<32x432xbf16>
    %c0_1 = arith.constant 0 : index
    %c0_2 = arith.constant 0 : index
    %1 = vector.load %arg2[%c0_1, %c0_2] : memref<432x32xbf16, #tpu.memory_space<vmem>>, vector<432x32xbf16>
    %cst = arith.constant dense<0.000000e+00> : vector<32x32xf32>
    %2 = tpu.matmul %0, %1, %cst {dimension_numbers = #tpu.dot_dimension_numbers<[1], [0], [0], [1], [0, 0, 1, 1], [], []>} : vector<32x432xbf16>, vector<432x32xbf16>, vector<32x32xf32> -> vector<32x32xf32>
    %c0_3 = arith.constant 0 : index
    %c0_4 = arith.constant 0 : index
    %3 = vector.load %arg3[%c0_3, %c0_4] : memref<432x32xbf16, #tpu.memory_space<vmem>>, vector<432x32xbf16>
    %cst_5 = arith.constant dense<0.000000e+00> : vector<32x32xf32>
    %4 = tpu.matmul %0, %3, %cst_5 {dimension_numbers = #tpu.dot_dimension_numbers<[1], [0], [0], [1], [0, 0, 1, 1], [], []>} : vector<32x432xbf16>, vector<432x32xbf16>, vector<32x32xf32> -> vector<32x32xf32>
    %5 = arith.maximumf %2, %4 : vector<32x32xf32>
    %c0_6 = arith.constant 0 : index
    %c0_7 = arith.constant 0 : index
    %6 = vector.load %arg4[%c0_6, %c0_7] : memref<432x32xbf16, #tpu.memory_space<vmem>>, vector<432x32xbf16>
    %cst_8 = arith.constant dense<0.000000e+00> : vector<32x32xf32>
    %7 = tpu.matmul %0, %6, %cst_8 {dimension_numbers = #tpu.dot_dimension_numbers<[1], [0], [0], [1], [0, 0, 1, 1], [], []>} : vector<32x432xbf16>, vector<432x32xbf16>, vector<32x32xf32> -> vector<32x32xf32>
    %8 = arith.maximumf %5, %7 : vector<32x32xf32>
    %c0_9 = arith.constant 0 : index
    %c0_10 = arith.constant 0 : index
    %9 = vector.load %arg5[%c0_9, %c0_10] : memref<432x32xbf16, #tpu.memory_space<vmem>>, vector<432x32xbf16>
    %cst_11 = arith.constant dense<0.000000e+00> : vector<32x32xf32>
    %10 = tpu.matmul %0, %9, %cst_11 {dimension_numbers = #tpu.dot_dimension_numbers<[1], [0], [0], [1], [0, 0, 1, 1], [], []>} : vector<32x432xbf16>, vector<432x32xbf16>, vector<32x32xf32> -> vector<32x32xf32>
    %11 = arith.maximumf %8, %10 : vector<32x32xf32>
    %c0_12 = arith.constant 0 : index
    %c0_13 = arith.constant 0 : index
    %12 = vector.load %arg1[%c0_12, %c0_13] : memref<32x1xf32, #tpu.memory_space<vmem>>, vector<32x1xf32>
    %13 = vector.broadcast %12 : vector<32x1xf32> to vector<32x32xf32>
    %14 = arith.addf %11, %13 : vector<32x32xf32>
    %cst_14 = arith.constant 0.000000e+00 : f32
    %15 = vector.broadcast %cst_14 : f32 to vector<32x32xf32>
    %16 = arith.maximumf %14, %15 : vector<32x32xf32>
    %17 = arith.truncf %16 : vector<32x32xf32> to vector<32x32xbf16>
    %c0_15 = arith.constant 0 : index
    %c0_16 = arith.constant 0 : index
    %18 = vector.load %arg6[%c0_15, %c0_16] : memref<32x32xbf16, #tpu.memory_space<vmem>>, vector<32x32xbf16>
    tpu.vector_store %arg6[%c0_15, %c0_16], %17 {strides = array<i32>} : memref<32x32xbf16, #tpu.memory_space<vmem>>, vector<32x32xbf16>,
    return
  }
}

module attributes {stable_mosaic.version = 11 : i64} {
  func.func @_classifier_kernel(%arg0: memref<2x512xbf16, #tpu.memory_space<vmem>>, %arg1: memref<512x64xbf16, #tpu.memory_space<vmem>>, %arg2: memref<1x64xf32, #tpu.memory_space<vmem>>, %arg3: memref<64x64xbf16, #tpu.memory_space<vmem>>, %arg4: memref<1x64xf32, #tpu.memory_space<vmem>>, %arg5: memref<64x10xbf16, #tpu.memory_space<vmem>>, %arg6: memref<1x10xf32, #tpu.memory_space<vmem>>, %arg7: memref<2x10xf32, #tpu.memory_space<vmem>>) attributes {dimension_semantics = [], scalar_prefetch = 0 : i64, scratch_operands = 0 : i64, tpu.core_type = #tpu.core_type<tc>} {
    %c0 = arith.constant 0 : index
    %c0_0 = arith.constant 0 : index
    %0 = vector.load %arg0[%c0, %c0_0] : memref<2x512xbf16, #tpu.memory_space<vmem>>, vector<2x512xbf16>
    %c0_1 = arith.constant 0 : index
    %c0_2 = arith.constant 0 : index
    %1 = vector.load %arg1[%c0_1, %c0_2] : memref<512x64xbf16, #tpu.memory_space<vmem>>, vector<512x64xbf16>
    %cst = arith.constant dense<0.000000e+00> : vector<2x64xf32>
    %2 = tpu.matmul %0, %1, %cst {dimension_numbers = #tpu.dot_dimension_numbers<[1], [0], [0], [1], [0, 0, 1, 1], [], []>} : vector<2x512xbf16>, vector<512x64xbf16>, vector<2x64xf32> -> vector<2x64xf32>
    %c0_3 = arith.constant 0 : index
    %c0_4 = arith.constant 0 : index
    %3 = vector.load %arg2[%c0_3, %c0_4] : memref<1x64xf32, #tpu.memory_space<vmem>>, vector<1x64xf32>
    %4 = vector.broadcast %3 : vector<1x64xf32> to vector<2x64xf32>
    %5 = arith.addf %2, %4 : vector<2x64xf32>
    %cst_5 = arith.constant 0.000000e+00 : f32
    %6 = vector.broadcast %cst_5 : f32 to vector<2x64xf32>
    %7 = arith.maximumf %5, %6 : vector<2x64xf32>
    %8 = arith.truncf %7 : vector<2x64xf32> to vector<2x64xbf16>
    %c0_6 = arith.constant 0 : index
    %c0_7 = arith.constant 0 : index
    %9 = vector.load %arg3[%c0_6, %c0_7] : memref<64x64xbf16, #tpu.memory_space<vmem>>, vector<64x64xbf16>
    %cst_8 = arith.constant dense<0.000000e+00> : vector<2x64xf32>
    %10 = tpu.matmul %8, %9, %cst_8 {dimension_numbers = #tpu.dot_dimension_numbers<[1], [0], [0], [1], [0, 0, 1, 1], [], []>} : vector<2x64xbf16>, vector<64x64xbf16>, vector<2x64xf32> -> vector<2x64xf32>
    %c0_9 = arith.constant 0 : index
    %c0_10 = arith.constant 0 : index
    %11 = vector.load %arg4[%c0_9, %c0_10] : memref<1x64xf32, #tpu.memory_space<vmem>>, vector<1x64xf32>
    %12 = vector.broadcast %11 : vector<1x64xf32> to vector<2x64xf32>
    %13 = arith.addf %10, %12 : vector<2x64xf32>
    %cst_11 = arith.constant 0.000000e+00 : f32
    %14 = vector.broadcast %cst_11 : f32 to vector<2x64xf32>
    %15 = arith.maximumf %13, %14 : vector<2x64xf32>
    %16 = arith.truncf %15 : vector<2x64xf32> to vector<2x64xbf16>
    %c0_12 = arith.constant 0 : index
    %c0_13 = arith.constant 0 : index
    %17 = vector.load %arg5[%c0_12, %c0_13] : memref<64x10xbf16, #tpu.memory_space<vmem>>, vector<64x10xbf16>
    %cst_14 = arith.constant dense<0.000000e+00> : vector<2x10xf32>
    %18 = tpu.matmul %16, %17, %cst_14 {dimension_numbers = #tpu.dot_dimension_numbers<[1], [0], [0], [1], [0, 0, 1, 1], [], []>} : vector<2x64xbf16>, vector<64x10xbf16>, vector<2x10xf32> -> vector<2x10xf32>
    %c0_15 = arith.constant 0 : index
    %c0_16 = arith.constant 0 : index
    %19 = vector.load %arg6[%c0_15, %c0_16] : memref<1x10xf32, #tpu.memory_space<vmem>>, vector<1x10xf32>
    %20 = vector.broadcast %19 : vector<1x10xf32> to vector<2x10xf32>
    %21 = arith.addf %18, %20 : vector<2x10xf32>
    %c0_17 = arith.constant 0 : index
    %c0_18 = arith.constant 0 : index
    %22 = vector.load %arg7[%c0_17, %c0_18] : memref<2x10xf32, #tpu.memory_space<vmem>>, vector<2x10xf32>
    tpu.vector_store %arg7[%c0_17, %c0_18], %21 {strides = array<i32>} : memref<2x10xf32, #tpu.memory_space<vmem>>, vector<2x10xf32>,
    return
  }
}

</mosaic_0001>

<llo_original>
// kernel: alexnet_forward.6
$region0: #{alexnet_forward.6}
  #allocation0 [shape = 'u32[]', space=smem, size = 0x4, offset = 0x4, fixed_abs, tag = 'smem constant byte address 0x4 - core index']
  #allocation1 [shape = 'u32[72,128]{1,0:T(1,128)}', space=vmem, size = 0x9000, scoped, tag = 'internal scratch']
  %s0 = inlined_call_operand.vmem [shape: bf16[16,32], index: 0, kind: input, shape index: {}]
  %s1 = inlined_call_operand.vmem [shape: f32[16,1], index: 1, kind: input, shape index: {}]
  %s2 = inlined_call_operand.vmem [shape: bf16[32,512], index: 2, kind: input, shape index: {}]
  %s3 = inlined_call_operand.vmem [shape: bf16[32,512], index: 3, kind: input, shape index: {}]
  %s4 = inlined_call_operand.vmem [shape: bf16[32,512], index: 4, kind: input, shape index: {}]
  %s5 = inlined_call_operand.vmem [shape: bf16[32,512], index: 5, kind: input, shape index: {}]
  %s6 = inlined_call_operand.vmem [shape: bf16[16,512], index: 6, kind: output, shape index: {}]
  %s7 = sld [smem:[#allocation0]]
  $region34: #{alexnet_forward.6} parent=0
    _
  %s9 = ssub.s32 1, %s7
  %s10 = scalar_select 0, %s9, %s7
  // Predicated region
  $region2: #{alexnet_forward.6} parent=0 // pred_check
    _
  $region3: #{alexnet_forward.6} parent=0 // pred_check_branch
    %12 = sbr.rel (0) target = $region5
  $region4: #{alexnet_forward.6} parent=0 // pred_region
    _
  $region5: #{alexnet_forward.6} parent=0 // pred_fallthru
    _
  // Predicated region
  $region6: #{alexnet_forward.6} parent=0 // pred_check
    _
  $region7: #{alexnet_forward.6} parent=0 // pred_check_branch
    %14 = sbr.rel (0) target = $region9
  $region8: #{alexnet_forward.6} parent=0 // pred_region
    _
  $region9: #{alexnet_forward.6} parent=0 // pred_fallthru
    _
  // Predicated region
  $region10: #{alexnet_forward.6} parent=0 // pred_check
    _
  $region11: #{alexnet_forward.6} parent=0 // pred_check_branch
    %16 = sbr.rel (0) target = $region13
  $region12: #{alexnet_forward.6} parent=0 // pred_region
    _
  $region13: #{alexnet_forward.6} parent=0 // pred_fallthru
    _
  // Predicated region
  $region14: #{alexnet_forward.6} parent=0 // pred_check
    _
  $region15: #{alexnet_forward.6} parent=0 // pred_check_branch
    %18 = sbr.rel (0) target = $region17
  $region16: #{alexnet_forward.6} parent=0 // pred_region
    _
  $region17: #{alexnet_forward.6} parent=0 // pred_fallthru
    _
  // Predicated region
  $region18: #{alexnet_forward.6} parent=0 // pred_check
    _
  $region19: #{alexnet_forward.6} parent=0 // pred_check_branch
    %20 = sbr.rel (0) target = $region21
  $region20: #{alexnet_forward.6} parent=0 // pred_region
    _
  $region21: #{alexnet_forward.6} parent=0 // pred_fallthru
    _
  // Predicated region
  $region22: #{alexnet_forward.6} parent=0 // pred_check
    _
  $region23: #{alexnet_forward.6} parent=0 // pred_check_branch
    %22 = sbr.rel (0) target = $region25
  $region24: #{alexnet_forward.6} parent=0 // pred_region
    _
  $region25: #{alexnet_forward.6} parent=0 // pred_fallthru
    _
  %v24 = vld [vmem:[%s0] sm:$0xf]
  %v25 = vld [vmem:[%s0 + $0x4] sm:$0xf]
  %v26 = vld [vmem:[%s2] sm:$0xff]
  %v27 = vld [vmem:[%s2 + $0x8] sm:$0xff]
  %v28 = vld [vmem:[%s2 + $0x10] sm:$0xff]
  %v29 = vld [vmem:[%s2 + $0x18] sm:$0xff]
  %v30 = vld [vmem:[%s2 + $0x20] sm:$0xff]
  %v31 = vld [vmem:[%s2 + $0x28] sm:$0xff]
  %v32 = vld [vmem:[%s2 + $0x30] sm:$0xff]
  %v33 = vld [vmem:[%s2 + $0x38] sm:$0xff]
  %v36 = vunpack.c.l.b16 %v24
  %v37 = vunpack.c.l.b16 %v25
  %v38 = vpack.c.b16 %v37, %v36
  %v47 = vunpack.c.l.b16 %v26
  %v48 = vunpack.c.h.b16 %v26
  %v49 = vunpack.c.l.b16 %v27
  %v50 = vunpack.c.h.b16 %v27
  %v51 = vunpack.c.l.b16 %v28
  %v52 = vunpack.c.h.b16 %v28
  %v53 = vunpack.c.l.b16 %v29
  %v54 = vunpack.c.h.b16 %v29
  %v55 = vunpack.c.l.b16 %v30
  %v56 = vunpack.c.h.b16 %v30
  %v57 = vunpack.c.l.b16 %v31
  %v58 = vunpack.c.h.b16 %v31
  %v59 = vunpack.c.l.b16 %v32
  %v60 = vunpack.c.h.b16 %v32
  %v61 = vunpack.c.l.b16 %v33
  %v62 = vunpack.c.h.b16 %v33
  %v63 = vpack.c.b16 %v51, %v47
  %v64 = vpack.c.b16 %v52, %v48
  %v65 = vpack.c.b16 %v53, %v49
  %v66 = vpack.c.b16 %v54, %v50
  %v67 = vpack.c.b16 %v59, %v55
  %v68 = vpack.c.b16 %v60, %v56
  %v69 = vpack.c.b16 %v61, %v57
  %v70 = vpack.c.b16 %v62, %v58
  %vm79 = vcmask 261120
  %v81 = vsel %vm79, %v38, 0
  %83 = vmatpush.bf16.msra.mxu0 0
  %84 = vmatpush.bf16.msra.mxu0 0
  %85 = vmatpush.bf16.msra.mxu0 0
  %86 = vmatpush.bf16.msra.mxu0 0
  %87 = vmatpush.bf16.msra.mxu0 0
  %88 = vmatpush.bf16.msra.mxu0 0
  %89 = vmatpush.bf16.msra.mxu0 %v67
  %90 = vmatpush.bf16.msra.mxu0 %v63
  %91 = vmatmul.bf16.gmra.mxu0 %v81
  %v92 = vpop.f32.mrf.mxu0
  %v93 = vadd.f32 0.0, %v92
  %v94 = vpop.f32.mrf.mxu0
  %v95 = vadd.f32 0.0, %v94
  %96 = vdwg.mxu0
  %97 = vmatpush.bf16.msra.mxu0 0
  %98 = vmatpush.bf16.msra.mxu0 0
  %99 = vmatpush.bf16.msra.mxu0 0
  %100 = vmatpush.bf16.msra.mxu0 0
  %101 = vmatpush.bf16.msra.mxu0 0
  %102 = vmatpush.bf16.msra.mxu0 0
  %103 = vmatpush.bf16.msra.mxu0 %v68
  %104 = vmatpush.bf16.msra.mxu0 %v64
  %105 = vmatmul.bf16.gmra.mxu0 %v81
  %v106 = vpop.f32.mrf.mxu0
  %v107 = vadd.f32 0.0, %v106
  %v108 = vpop.f32.mrf.mxu0
  %v109 = vadd.f32 0.0, %v108
  %110 = vdwg.mxu0
  %111 = vmatpush.bf16.msra.mxu0 0
  %112 = vmatpush.bf16.msra.mxu0 0
  %113 = vmatpush.bf16.msra.mxu0 0
  %114 = vmatpush.bf16.msra.mxu0 0
  %115 = vmatpush.bf16.msra.mxu0 0
  %116 = vmatpush.bf16.msra.mxu0 0
  %117 = vmatpush.bf16.msra.mxu0 %v69
  %118 = vmatpush.bf16.msra.mxu0 %v65
  %119 = vmatmul.bf16.gmra.mxu0 %v81
  %v120 = vpop.f32.mrf.mxu0
  %v121 = vadd.f32 0.0, %v120
  %v122 = vpop.f32.mrf.mxu0
  %v123 = vadd.f32 0.0, %v122
  %124 = vdwg.mxu0
  %125 = vmatpush.bf16.msra.mxu0 0
  %126 = vmatpush.bf16.msra.mxu0 0
  %127 = vmatpush.bf16.msra.mxu0 0
  %128 = vmatpush.bf16.msra.mxu0 0
  %129 = vmatpush.bf16.msra.mxu0 0
  %130 = vmatpush.bf16.msra.mxu0 0
  %131 = vmatpush.bf16.msra.mxu0 %v70
  %132 = vmatpush.bf16.msra.mxu0 %v66
  %133 = vmatmul.bf16.gmra.mxu0 %v81
  %v134 = vpop.f32.mrf.mxu0
  %v135 = vadd.f32 0.0, %v134
  %v136 = vpop.f32.mrf.mxu0
  %v137 = vadd.f32 0.0, %v136
  %138 = vdwg.mxu0
  %v139 = vld [vmem:[%s3] sm:$0xff]
  %v140 = vld [vmem:[%s3 + $0x8] sm:$0xff]
  %v141 = vld [vmem:[%s3 + $0x10] sm:$0xff]
  %v142 = vld [vmem:[%s3 + $0x18] sm:$0xff]
  %v143 = vld [vmem:[%s3 + $0x20] sm:$0xff]
  %v144 = vld [vmem:[%s3 + $0x28] sm:$0xff]
  %v145 = vld [vmem:[%s3 + $0x30] sm:$0xff]
  %v146 = vld [vmem:[%s3 + $0x38] sm:$0xff]
  %v155 = vunpack.c.l.b16 %v139
  %v156 = vunpack.c.h.b16 %v139
  %v157 = vunpack.c.l.b16 %v140
  %v158 = vunpack.c.h.b16 %v140
  %v159 = vunpack.c.l.b16 %v141
  %v160 = vunpack.c.h.b16 %v141
  %v161 = vunpack.c.l.b16 %v142
  %v162 = vunpack.c.h.b16 %v142
  %v163 = vunpack.c.l.b16 %v143
  %v164 = vunpack.c.h.b16 %v143
  %v165 = vunpack.c.l.b16 %v144
  %v166 = vunpack.c.h.b16 %v144
  %v167 = vunpack.c.l.b16 %v145
  %v168 = vunpack.c.h.b16 %v145
  %v169 = vunpack.c.l.b16 %v146
  %v170 = vunpack.c.h.b16 %v146
  %v171 = vpack.c.b16 %v159, %v155
  %v172 = vpack.c.b16 %v160, %v156
  %v173 = vpack.c.b16 %v161, %v157
  %v174 = vpack.c.b16 %v162, %v158
  %v175 = vpack.c.b16 %v167, %v163
  %v176 = vpack.c.b16 %v168, %v164
  %v177 = vpack.c.b16 %v169, %v165
  %v178 = vpack.c.b16 %v170, %v166
  %187 = vmatpush.bf16.msra.mxu0 0
  %188 = vmatpush.bf16.msra.mxu0 0
  %189 = vmatpush.bf16.msra.mxu0 0
  %190 = vmatpush.bf16.msra.mxu0 0
  %191 = vmatpush.bf16.msra.mxu0 0
  %192 = vmatpush.bf16.msra.mxu0 0
  %193 = vmatpush.bf16.msra.mxu0 %v175
  %194 = vmatpush.bf16.msra.mxu0 %v171
  %195 = vmatmul.bf16.gmra.mxu0 %v81
  %v196 = vpop.f32.mrf.mxu0
  %v197 = vadd.f32 0.0, %v196
  %v198 = vpop.f32.mrf.mxu0
  %v199 = vadd.f32 0.0, %v198
  %200 = vdwg.mxu0
  %201 = vmatpush.bf16.msra.mxu0 0
  %202 = vmatpush.bf16.msra.mxu0 0
  %203 = vmatpush.bf16.msra.mxu0 0
  %204 = vmatpush.bf16.msra.mxu0 0
  %205 = vmatpush.bf16.msra.mxu0 0
  %206 = vmatpush.bf16.msra.mxu0 0
  %207 = vmatpush.bf16.msra.mxu0 %v176
  %208 = vmatpush.bf16.msra.mxu0 %v172
  %209 = vmatmul.bf16.gmra.mxu0 %v81
  %v210 = vpop.f32.mrf.mxu0
  %v211 = vadd.f32 0.0, %v210
  %v212 = vpop.f32.mrf.mxu0
  %v213 = vadd.f32 0.0, %v212
  %214 = vdwg.mxu0
  %215 = vmatpush.bf16.msra.mxu0 0
  %216 = vmatpush.bf16.msra.mxu0 0
  %217 = vmatpush.bf16.msra.mxu0 0
  %218 = vmatpush.bf16.msra.mxu0 0
  %219 = vmatpush.bf16.msra.mxu0 0
  %220 = vmatpush.bf16.msra.mxu0 0
  %221 = vmatpush.bf16.msra.mxu0 %v177
  %222 = vmatpush.bf16.msra.mxu0 %v173
  %223 = vmatmul.bf16.gmra.mxu0 %v81
  %v224 = vpop.f32.mrf.mxu0
  %v225 = vadd.f32 0.0, %v224
  %v226 = vpop.f32.mrf.mxu0
  %v227 = vadd.f32 0.0, %v226
  %228 = vdwg.mxu0
  %229 = vmatpush.bf16.msra.mxu0 0
  %230 = vmatpush.bf16.msra.mxu0 0
  %231 = vmatpush.bf16.msra.mxu0 0
  %232 = vmatpush.bf16.msra.mxu0 0
  %233 = vmatpush.bf16.msra.mxu0 0
  %234 = vmatpush.bf16.msra.mxu0 0
  %235 = vmatpush.bf16.msra.mxu0 %v178
  %236 = vmatpush.bf16.msra.mxu0 %v174
  %237 = vmatmul.bf16.gmra.mxu0 %v81
  %v238 = vpop.f32.mrf.mxu0
  %v239 = vadd.f32 0.0, %v238
  %v240 = vpop.f32.mrf.mxu0
  %v241 = vadd.f32 0.0, %v240
  %242 = vdwg.mxu0
  %v243 = vmax.f32 %v93, %v197
  %v244 = vmax.f32 %v107, %v211
  %v245 = vmax.f32 %v121, %v225
  %v246 = vmax.f32 %v135, %v239
  %v247 = vmax.f32 %v95, %v199
  %v248 = vmax.f32 %v109, %v213
  %v249 = vmax.f32 %v123, %v227
  %v250 = vmax.f32 %v137, %v241
  %v251 = vld [vmem:[%s4] sm:$0xff]
  %v252 = vld [vmem:[%s4 + $0x8] sm:$0xff]
  %v253 = vld [vmem:[%s4 + $0x10] sm:$0xff]
  %v254 = vld [vmem:[%s4 + $0x18] sm:$0xff]
  %v255 = vld [vmem:[%s4 + $0x20] sm:$0xff]
  %v256 = vld [vmem:[%s4 + $0x28] sm:$0xff]
  %v257 = vld [vmem:[%s4 + $0x30] sm:$0xff]
  %v258 = vld [vmem:[%s4 + $0x38] sm:$0xff]
  %v267 = vunpack.c.l.b16 %v251
  %v268 = vunpack.c.h.b16 %v251
  %v269 = vunpack.c.l.b16 %v252
  %v270 = vunpack.c.h.b16 %v252
  %v271 = vunpack.c.l.b16 %v253
  %v272 = vunpack.c.h.b16 %v253
  %v273 = vunpack.c.l.b16 %v254
  %v274 = vunpack.c.h.b16 %v254
  %v275 = vunpack.c.l.b16 %v255
  %v276 = vunpack.c.h.b16 %v255
  %v277 = vunpack.c.l.b16 %v256
  %v278 = vunpack.c.h.b16 %v256
  %v279 = vunpack.c.l.b16 %v257
  %v280 = vunpack.c.h.b16 %v257
  %v281 = vunpack.c.l.b16 %v258
  %v282 = vunpack.c.h.b16 %v258
  %v283 = vpack.c.b16 %v271, %v267
  %v284 = vpack.c.b16 %v272, %v268
  %v285 = vpack.c.b16 %v273, %v269
  %v286 = vpack.c.b16 %v274, %v270
  %v287 = vpack.c.b16 %v279, %v275
  %v288 = vpack.c.b16 %v280, %v276
  %v289 = vpack.c.b16 %v281, %v277
  %v290 = vpack.c.b16 %v282, %v278
  %299 = vmatpush.bf16.msra.mxu0 0
  %300 = vmatpush.bf16.msra.mxu0 0
  %301 = vmatpush.bf16.msra.mxu0 0
  %302 = vmatpush.bf16.msra.mxu0 0
  %303 = vmatpush.bf16.msra.mxu0 0
  %304 = vmatpush.bf16.msra.mxu0 0
  %305 = vmatpush.bf16.msra.mxu0 %v287
  %306 = vmatpush.bf16.msra.mxu0 %v283
  %307 = vmatmul.bf16.gmra.mxu0 %v81
  %v308 = vpop.f32.mrf.mxu0
  %v309 = vadd.f32 0.0, %v308
  %v310 = vpop.f32.mrf.mxu0
  %v311 = vadd.f32 0.0, %v310
  %312 = vdwg.mxu0
  %313 = vmatpush.bf16.msra.mxu0 0
  %314 = vmatpush.bf16.msra.mxu0 0
  %315 = vmatpush.bf16.msra.mxu0 0
  %316 = vmatpush.bf16.msra.mxu0 0
  %317 = vmatpush.bf16.msra.mxu0 0
  %318 = vmatpush.bf16.msra.mxu0 0
  %319 = vmatpush.bf16.msra.mxu0 %v288
  %320 = vmatpush.bf16.msra.mxu0 %v284
  %321 = vmatmul.bf16.gmra.mxu0 %v81
  %v322 = vpop.f32.mrf.mxu0
  %v323 = vadd.f32 0.0, %v322
  %v324 = vpop.f32.mrf.mxu0
  %v325 = vadd.f32 0.0, %v324
  %326 = vdwg.mxu0
  %327 = vmatpush.bf16.msra.mxu0 0
  %328 = vmatpush.bf16.msra.mxu0 0
  %329 = vmatpush.bf16.msra.mxu0 0
  %330 = vmatpush.bf16.msra.mxu0 0
  %331 = vmatpush.bf16.msra.mxu0 0
  %332 = vmatpush.bf16.msra.mxu0 0
  %333 = vmatpush.bf16.msra.mxu0 %v289
  %334 = vmatpush.bf16.msra.mxu0 %v285
  %335 = vmatmul.bf16.gmra.mxu0 %v81
  %v336 = vpop.f32.mrf.mxu0
  %v337 = vadd.f32 0.0, %v336
  %v338 = vpop.f32.mrf.mxu0
  %v339 = vadd.f32 0.0, %v338
  %340 = vdwg.mxu0
  %341 = vmatpush.bf16.msra.mxu0 0
  %342 = vmatpush.bf16.msra.mxu0 0
  %343 = vmatpush.bf16.msra.mxu0 0
  %344 = vmatpush.bf16.msra.mxu0 0
  %345 = vmatpush.bf16.msra.mxu0 0
  %346 = vmatpush.bf16.msra.mxu0 0
  %347 = vmatpush.bf16.msra.mxu0 %v290
  %348 = vmatpush.bf16.msra.mxu0 %v286
  %349 = vmatmul.bf16.gmra.mxu0 %v81
  %v350 = vpop.f32.mrf.mxu0
  %v351 = vadd.f32 0.0, %v350
  %v352 = vpop.f32.mrf.mxu0
  %v353 = vadd.f32 0.0, %v352
  %354 = vdwg.mxu0
  %v355 = vmax.f32 %v243, %v309
  %v356 = vmax.f32 %v244, %v323
  %v357 = vmax.f32 %v245, %v337
  %v358 = vmax.f32 %v246, %v351
  %v359 = vmax.f32 %v247, %v311
  %v360 = vmax.f32 %v248, %v325
  %v361 = vmax.f32 %v249, %v339
  %v362 = vmax.f32 %v250, %v353
  %v363 = vld [vmem:[%s5] sm:$0xff]
  %v364 = vld [vmem:[%s5 + $0x8] sm:$0xff]
  %v365 = vld [vmem:[%s5 + $0x10] sm:$0xff]
  %v366 = vld [vmem:[%s5 + $0x18] sm:$0xff]
  %v367 = vld [vmem:[%s5 + $0x20] sm:$0xff]
  %v368 = vld [vmem:[%s5 + $0x28] sm:$0xff]
  %v369 = vld [vmem:[%s5 + $0x30] sm:$0xff]
  %v370 = vld [vmem:[%s5 + $0x38] sm:$0xff]
  %v379 = vunpack.c.l.b16 %v363
  %v380 = vunpack.c.h.b16 %v363
  %v381 = vunpack.c.l.b16 %v364
  %v382 = vunpack.c.h.b16 %v364
  %v383 = vunpack.c.l.b16 %v365
  %v384 = vunpack.c.h.b16 %v365
  %v385 = vunpack.c.l.b16 %v366
  %v386 = vunpack.c.h.b16 %v366
  %v387 = vunpack.c.l.b16 %v367
  %v388 = vunpack.c.h.b16 %v367
  %v389 = vunpack.c.l.b16 %v368
  %v390 = vunpack.c.h.b16 %v368
  %v391 = vunpack.c.l.b16 %v369
  %v392 = vunpack.c.h.b16 %v369
  %v393 = vunpack.c.l.b16 %v370
  %v394 = vunpack.c.h.b16 %v370
  %v395 = vpack.c.b16 %v383, %v379
  %v396 = vpack.c.b16 %v384, %v380
  %v397 = vpack.c.b16 %v385, %v381
  %v398 = vpack.c.b16 %v386, %v382
  %v399 = vpack.c.b16 %v391, %v387
  %v400 = vpack.c.b16 %v392, %v388
  %v401 = vpack.c.b16 %v393, %v389
  %v402 = vpack.c.b16 %v394, %v390
  %411 = vmatpush.bf16.msra.mxu0 0
  %412 = vmatpush.bf16.msra.mxu0 0
  %413 = vmatpush.bf16.msra.mxu0 0
  %414 = vmatpush.bf16.msra.mxu0 0
  %415 = vmatpush.bf16.msra.mxu0 0
  %416 = vmatpush.bf16.msra.mxu0 0
  %417 = vmatpush.bf16.msra.mxu0 %v399
  %418 = vmatpush.bf16.msra.mxu0 %v395
  %419 = vmatmul.bf16.gmra.mxu0 %v81
  %v420 = vpop.f32.mrf.mxu0
  %v421 = vadd.f32 0.0, %v420
  %v422 = vpop.f32.mrf.mxu0
  %v423 = vadd.f32 0.0, %v422
  %424 = vdwg.mxu0
  %425 = vmatpush.bf16.msra.mxu0 0
  %426 = vmatpush.bf16.msra.mxu0 0
  %427 = vmatpush.bf16.msra.mxu0 0
  %428 = vmatpush.bf16.msra.mxu0 0
  %429 = vmatpush.bf16.msra.mxu0 0
  %430 = vmatpush.bf16.msra.mxu0 0
  %431 = vmatpush.bf16.msra.mxu0 %v400
  %432 = vmatpush.bf16.msra.mxu0 %v396
  %433 = vmatmul.bf16.gmra.mxu0 %v81
  %v434 = vpop.f32.mrf.mxu0
  %v435 = vadd.f32 0.0, %v434
  %v436 = vpop.f32.mrf.mxu0
  %v437 = vadd.f32 0.0, %v436
  %438 = vdwg.mxu0
  %439 = vmatpush.bf16.msra.mxu0 0
  %440 = vmatpush.bf16.msra.mxu0 0
  %441 = vmatpush.bf16.msra.mxu0 0
  %442 = vmatpush.bf16.msra.mxu0 0
  %443 = vmatpush.bf16.msra.mxu0 0
  %444 = vmatpush.bf16.msra.mxu0 0
  %445 = vmatpush.bf16.msra.mxu0 %v401
  %446 = vmatpush.bf16.msra.mxu0 %v397
  %447 = vmatmul.bf16.gmra.mxu0 %v81
  %v448 = vpop.f32.mrf.mxu0
  %v449 = vadd.f32 0.0, %v448
  %v450 = vpop.f32.mrf.mxu0
  %v451 = vadd.f32 0.0, %v450
  %452 = vdwg.mxu0
  %453 = vmatpush.bf16.msra.mxu0 0
  %454 = vmatpush.bf16.msra.mxu0 0
  %455 = vmatpush.bf16.msra.mxu0 0
  %456 = vmatpush.bf16.msra.mxu0 0
  %457 = vmatpush.bf16.msra.mxu0 0
  %458 = vmatpush.bf16.msra.mxu0 0
  %459 = vmatpush.bf16.msra.mxu0 %v402
  %460 = vmatpush.bf16.msra.mxu0 %v398
  %461 = vmatmul.bf16.gmra.mxu0 %v81
  %v462 = vpop.f32.mrf.mxu0
  %v463 = vadd.f32 0.0, %v462
  %v464 = vpop.f32.mrf.mxu0
  %v465 = vadd.f32 0.0, %v464
  %466 = vdwg.mxu0
  %v467 = vmax.f32 %v355, %v421
  %v468 = vmax.f32 %v356, %v435
  %v469 = vmax.f32 %v357, %v449
  %v470 = vmax.f32 %v358, %v463
  %v471 = vmax.f32 %v359, %v423
  %v472 = vmax.f32 %v360, %v437
  %v473 = vmax.f32 %v361, %v451
  %v474 = vmax.f32 %v362, %v465
  %v475 = vld [vmem:[%s1] sm:$0xff]
  %v476 = vld [vmem:[%s1 + $0x8] sm:$0xff]
  %478 = vset.pattern.permute.xlu0 0
  %479 = vperm.xlu0 %478, %v475
  %v480 = vpop.permute.xlu0 %479
  %483 = vset.pattern.permute.xlu0 0
  %484 = vperm.xlu0 %483, %v476
  %v485 = vpop.permute.xlu0 %484
  %v487 = vadd.f32 %v467, %v480
  %v488 = vadd.f32 %v468, %v480
  %v489 = vadd.f32 %v469, %v480
  %v490 = vadd.f32 %v470, %v480
  %v491 = vadd.f32 %v471, %v485
  %v492 = vadd.f32 %v472, %v485
  %v493 = vadd.f32 %v473, %v485
  %v494 = vadd.f32 %v474, %v485
  %v495 = vmax.f32 %v487, 0.0
  %v496 = vmax.f32 %v488, 0.0
  %v497 = vmax.f32 %v489, 0.0
  %v498 = vmax.f32 %v490, 0.0
  %v499 = vmax.f32 %v491, 0.0
  %v500 = vmax.f32 %v492, 0.0
  %v501 = vmax.f32 %v493, 0.0
  %v502 = vmax.f32 %v494, 0.0
  %v503 = vpack.c.bf16 %v496, %v495
  %v504 = vpack.c.bf16 %v498, %v497
  %v505 = vpack.c.bf16 %v500, %v499
  %v506 = vpack.c.bf16 %v502, %v501
  %507 = vst [vmem:[%s6] sm:$0xff] %v503
  %508 = vst [vmem:[%s6 + $0x8] sm:$0xff] %v504
  %509 = vst [vmem:[%s6 + $0x10] sm:$0xff] %v505
  %510 = vst [vmem:[%s6 + $0x18] sm:$0xff] %v506
  // Predicated region
  $region26: #{alexnet_forward.6} parent=0 // pred_check
    _
  $region27: #{alexnet_forward.6} parent=0 // pred_check_branch
    %512 = sbr.rel (0) target = $region29
  $region28: #{alexnet_forward.6} parent=0 // pred_region
    _
  $region29: #{alexnet_forward.6} parent=0 // pred_fallthru
    _
  // Predicated region
  $region30: #{alexnet_forward.6} parent=0 // pred_check
    _
  $region31: #{alexnet_forward.6} parent=0 // pred_check_branch
    %514 = sbr.rel (0) target = $region33
  $region32: #{alexnet_forward.6} parent=0 // pred_region
    _
  $region33: #{alexnet_forward.6} parent=0 // pred_fallthru
    _

// kernel: alexnet_forward.7
$region0: #{alexnet_forward.7}
  #allocation0 [shape = 'u32[]', space=smem, size = 0x4, offset = 0x4, fixed_abs, tag = 'smem constant byte address 0x4 - core index']
  #allocation1 [shape = 'u32[72,128]{1,0:T(1,128)}', space=vmem, size = 0x9000, scoped, tag = 'internal scratch']
  %s0 = inlined_call_operand.vmem [shape: bf16[32,144], index: 0, kind: input, shape index: {}]
  %s1 = inlined_call_operand.vmem [shape: f32[32,1], index: 1, kind: input, shape index: {}]
  %s2 = inlined_call_operand.vmem [shape: bf16[144,128], index: 2, kind: input, shape index: {}]
  %s3 = inlined_call_operand.vmem [shape: bf16[144,128], index: 3, kind: input, shape index: {}]
  %s4 = inlined_call_operand.vmem [shape: bf16[144,128], index: 4, kind: input, shape index: {}]
  %s5 = inlined_call_operand.vmem [shape: bf16[144,128], index: 5, kind: input, shape index: {}]
  %s6 = inlined_call_operand.vmem [shape: bf16[32,128], index: 6, kind: output, shape index: {}]
  %s7 = sld [smem:[#allocation0]]
  $region34: #{alexnet_forward.7} parent=0
    _
  %s9 = ssub.s32 1, %s7
  %s10 = scalar_select 0, %s9, %s7
  // Predicated region
  $region2: #{alexnet_forward.7} parent=0 // pred_check
    _
  $region3: #{alexnet_forward.7} parent=0 // pred_check_branch
    %12 = sbr.rel (0) target = $region5
  $region4: #{alexnet_forward.7} parent=0 // pred_region
    _
  $region5: #{alexnet_forward.7} parent=0 // pred_fallthru
    _
  // Predicated region
  $region6: #{alexnet_forward.7} parent=0 // pred_check
    _
  $region7: #{alexnet_forward.7} parent=0 // pred_check_branch
    %14 = sbr.rel (0) target = $region9
  $region8: #{alexnet_forward.7} parent=0 // pred_region
    _
  $region9: #{alexnet_forward.7} parent=0 // pred_fallthru
    _
  // Predicated region
  $region10: #{alexnet_forward.7} parent=0 // pred_check
    _
  $region11: #{alexnet_forward.7} parent=0 // pred_check_branch
    %16 = sbr.rel (0) target = $region13
  $region12: #{alexnet_forward.7} parent=0 // pred_region
    _
  $region13: #{alexnet_forward.7} parent=0 // pred_fallthru
    _
  // Predicated region
  $region14: #{alexnet_forward.7} parent=0 // pred_check
    _
  $region15: #{alexnet_forward.7} parent=0 // pred_check_branch
    %18 = sbr.rel (0) target = $region17
  $region16: #{alexnet_forward.7} parent=0 // pred_region
    _
  $region17: #{alexnet_forward.7} parent=0 // pred_fallthru
    _
  // Predicated region
  $region18: #{alexnet_forward.7} parent=0 // pred_check
    _
  $region19: #{alexnet_forward.7} parent=0 // pred_check_branch
    %20 = sbr.rel (0) target = $region21
  $region20: #{alexnet_forward.7} parent=0 // pred_region
    _
  $region21: #{alexnet_forward.7} parent=0 // pred_fallthru
    _
  // Predicated region
  $region22: #{alexnet_forward.7} parent=0 // pred_check
    _
  $region23: #{alexnet_forward.7} parent=0 // pred_check_branch
    %22 = sbr.rel (0) target = $region25
  $region24: #{alexnet_forward.7} parent=0 // pred_region
    _
  $region25: #{alexnet_forward.7} parent=0 // pred_fallthru
    _
  %v24 = vld [vmem:[%s0] sm:$0xff]
  %v25 = vld [vmem:[%s0 + $0x8] sm:$0xff]
  %v26 = vld [vmem:[%s0 + $0x10] sm:$0xff]
  %v27 = vld [vmem:[%s0 + $0x18] sm:$0xff]
  %v28 = vld [vmem:[%s2] sm:$0xf]
  %v29 = vld [vmem:[%s2 + $0x4] sm:$0xf]
  %v30 = vld [vmem:[%s2 + $0x8] sm:$0xf]
  %v31 = vld [vmem:[%s2 + $0xc] sm:$0xf]
  %v32 = vld [vmem:[%s2 + $0x10] sm:$0xf]
  %v33 = vld [vmem:[%s2 + $0x14] sm:$0xf]
  %v34 = vld [vmem:[%s2 + $0x18] sm:$0xf]
  %v35 = vld [vmem:[%s2 + $0x1c] sm:$0xf]
  %v36 = vld [vmem:[%s2 + $0x20] sm:$0xf]
  %v37 = vld [vmem:[%s2 + $0x24] sm:$0xf]
  %v38 = vld [vmem:[%s2 + $0x28] sm:$0xf]
  %v39 = vld [vmem:[%s2 + $0x2c] sm:$0xf]
  %v40 = vld [vmem:[%s2 + $0x30] sm:$0xf]
  %v41 = vld [vmem:[%s2 + $0x34] sm:$0xf]
  %v42 = vld [vmem:[%s2 + $0x38] sm:$0xf]
  %v43 = vld [vmem:[%s2 + $0x3c] sm:$0xf]
  %v44 = vld [vmem:[%s2 + $0x40] sm:$0xf]
  %v45 = vld [vmem:[%s2 + $0x44] sm:$0xf]
  %v50 = vunpack.c.l.b16 %v24
  %v51 = vunpack.c.h.b16 %v24
  %v52 = vunpack.c.l.b16 %v25
  %v53 = vunpack.c.h.b16 %v25
  %v54 = vunpack.c.l.b16 %v26
  %v55 = vunpack.c.h.b16 %v26
  %v56 = vunpack.c.l.b16 %v27
  %v57 = vunpack.c.h.b16 %v27
  %v58 = vpack.c.b16 %v52, %v50
  %v59 = vpack.c.b16 %v53, %v51
  %v60 = vpack.c.b16 %v56, %v54
  %v61 = vpack.c.b16 %v57, %v55
  %v82 = vunpack.c.l.b16 %v28
  %v83 = vunpack.c.l.b16 %v29
  %v84 = vunpack.c.l.b16 %v30
  %v85 = vunpack.c.l.b16 %v31
  %v86 = vunpack.c.l.b16 %v32
  %v87 = vunpack.c.l.b16 %v33
  %v88 = vunpack.c.l.b16 %v34
  %v89 = vunpack.c.l.b16 %v35
  %v90 = vunpack.c.l.b16 %v36
  %v91 = vunpack.c.l.b16 %v37
  %v92 = vunpack.c.l.b16 %v38
  %v93 = vunpack.c.l.b16 %v39
  %v94 = vunpack.c.l.b16 %v40
  %v95 = vunpack.c.l.b16 %v41
  %v96 = vunpack.c.l.b16 %v42
  %v97 = vunpack.c.l.b16 %v43
  %v98 = vunpack.c.l.b16 %v44
  %v99 = vunpack.c.l.b16 %v45
  %v100 = vpack.c.b16 %v83, %v82
  %v101 = vpack.c.b16 %v85, %v84
  %v102 = vpack.c.b16 %v87, %v86
  %v103 = vpack.c.b16 %v89, %v88
  %v104 = vpack.c.b16 %v91, %v90
  %v105 = vpack.c.b16 %v93, %v92
  %v106 = vpack.c.b16 %v95, %v94
  %v107 = vpack.c.b16 %v97, %v96
  %v108 = vpack.c.b16 %v99, %v98
  %vm118 = vcmask 130048
  %v120 = vsel %vm118, %v59, 0
  %v123 = vsel %vm118, %v61, 0
  %125 = vmatpush.bf16.msra.mxu0 %v107
  %126 = vmatpush.bf16.msra.mxu0 %v106
  %127 = vmatpush.bf16.msra.mxu0 %v105
  %128 = vmatpush.bf16.msra.mxu0 %v104
  %129 = vmatpush.bf16.msra.mxu0 %v103
  %130 = vmatpush.bf16.msra.mxu0 %v102
  %131 = vmatpush.bf16.msra.mxu0 %v101
  %132 = vmatpush.bf16.msra.mxu0 %v100
  %133 = vmatmul.bf16.gmra.mxu0 %v58
  %v134 = vpop.f32.mrf.mxu0
  %v135 = vadd.f32 0.0, %v134
  %v136 = vpop.f32.mrf.mxu0
  %v137 = vadd.f32 0.0, %v136
  %138 = vmatmul.bf16.gmra.mxu0 %v60
  %v139 = vpop.f32.mrf.mxu0
  %v140 = vadd.f32 0.0, %v139
  %v141 = vpop.f32.mrf.mxu0
  %v142 = vadd.f32 0.0, %v141
  %143 = vdwg.mxu0
  %144 = vmatpush.bf16.msra.mxu0 0
  %145 = vmatpush.bf16.msra.mxu0 0
  %146 = vmatpush.bf16.msra.mxu0 0
  %147 = vmatpush.bf16.msra.mxu0 0
  %148 = vmatpush.bf16.msra.mxu0 0
  %149 = vmatpush.bf16.msra.mxu0 0
  %150 = vmatpush.bf16.msra.mxu0 0
  %151 = vmatpush.bf16.msra.mxu0 %v108
  %152 = vmatmul.bf16.gmra.mxu0 %v120
  %v153 = vpop.f32.mrf.mxu0
  %v154 = vadd.f32 %v135, %v153
  %v155 = vpop.f32.mrf.mxu0
  %v156 = vadd.f32 %v137, %v155
  %157 = vmatmul.bf16.gmra.mxu0 %v123
  %v158 = vpop.f32.mrf.mxu0
  %v159 = vadd.f32 %v140, %v158
  %v160 = vpop.f32.mrf.mxu0
  %v161 = vadd.f32 %v142, %v160
  %162 = vdwg.mxu0
  %v163 = vld [vmem:[%s3] sm:$0xf]
  %v164 = vld [vmem:[%s3 + $0x4] sm:$0xf]
  %v165 = vld [vmem:[%s3 + $0x8] sm:$0xf]
  %v166 = vld [vmem:[%s3 + $0xc] sm:$0xf]
  %v167 = vld [vmem:[%s3 + $0x10] sm:$0xf]
  %v168 = vld [vmem:[%s3 + $0x14] sm:$0xf]
  %v169 = vld [vmem:[%s3 + $0x18] sm:$0xf]
  %v170 = vld [vmem:[%s3 + $0x1c] sm:$0xf]
  %v171 = vld [vmem:[%s3 + $0x20] sm:$0xf]
  %v172 = vld [vmem:[%s3 + $0x24] sm:$0xf]
  %v173 = vld [vmem:[%s3 + $0x28] sm:$0xf]
  %v174 = vld [vmem:[%s3 + $0x2c] sm:$0xf]
  %v175 = vld [vmem:[%s3 + $0x30] sm:$0xf]
  %v176 = vld [vmem:[%s3 + $0x34] sm:$0xf]
  %v177 = vld [vmem:[%s3 + $0x38] sm:$0xf]
  %v178 = vld [vmem:[%s3 + $0x3c] sm:$0xf]
  %v179 = vld [vmem:[%s3 + $0x40] sm:$0xf]
  %v180 = vld [vmem:[%s3 + $0x44] sm:$0xf]
  %v199 = vunpack.c.l.b16 %v163
  %v200 = vunpack.c.l.b16 %v164
  %v201 = vunpack.c.l.b16 %v165
  %v202 = vunpack.c.l.b16 %v166
  %v203 = vunpack.c.l.b16 %v167
  %v204 = vunpack.c.l.b16 %v168
  %v205 = vunpack.c.l.b16 %v169
  %v206 = vunpack.c.l.b16 %v170
  %v207 = vunpack.c.l.b16 %v171
  %v208 = vunpack.c.l.b16 %v172
  %v209 = vunpack.c.l.b16 %v173
  %v210 = vunpack.c.l.b16 %v174
  %v211 = vunpack.c.l.b16 %v175
  %v212 = vunpack.c.l.b16 %v176
  %v213 = vunpack.c.l.b16 %v177
  %v214 = vunpack.c.l.b16 %v178
  %v215 = vunpack.c.l.b16 %v179
  %v216 = vunpack.c.l.b16 %v180
  %v217 = vpack.c.b16 %v200, %v199
  %v218 = vpack.c.b16 %v202, %v201
  %v219 = vpack.c.b16 %v204, %v203
  %v220 = vpack.c.b16 %v206, %v205
  %v221 = vpack.c.b16 %v208, %v207
  %v222 = vpack.c.b16 %v210, %v209
  %v223 = vpack.c.b16 %v212, %v211
  %v224 = vpack.c.b16 %v214, %v213
  %v225 = vpack.c.b16 %v216, %v215
  %235 = vmatpush.bf16.msra.mxu0 %v224
  %236 = vmatpush.bf16.msra.mxu0 %v223
  %237 = vmatpush.bf16.msra.mxu0 %v222
  %238 = vmatpush.bf16.msra.mxu0 %v221
  %239 = vmatpush.bf16.msra.mxu0 %v220
  %240 = vmatpush.bf16.msra.mxu0 %v219
  %241 = vmatpush.bf16.msra.mxu0 %v218
  %242 = vmatpush.bf16.msra.mxu0 %v217
  %243 = vmatmul.bf16.gmra.mxu0 %v58
  %v244 = vpop.f32.mrf.mxu0
  %v245 = vadd.f32 0.0, %v244
  %v246 = vpop.f32.mrf.mxu0
  %v247 = vadd.f32 0.0, %v246
  %248 = vmatmul.bf16.gmra.mxu0 %v60
  %v249 = vpop.f32.mrf.mxu0
  %v250 = vadd.f32 0.0, %v249
  %v251 = vpop.f32.mrf.mxu0
  %v252 = vadd.f32 0.0, %v251
  %253 = vdwg.mxu0
  %254 = vmatpush.bf16.msra.mxu0 0
  %255 = vmatpush.bf16.msra.mxu0 0
  %256 = vmatpush.bf16.msra.mxu0 0
  %257 = vmatpush.bf16.msra.mxu0 0
  %258 = vmatpush.bf16.msra.mxu0 0
  %259 = vmatpush.bf16.msra.mxu0 0
  %260 = vmatpush.bf16.msra.mxu0 0
  %261 = vmatpush.bf16.msra.mxu0 %v225
  %262 = vmatmul.bf16.gmra.mxu0 %v120
  %v263 = vpop.f32.mrf.mxu0
  %v264 = vadd.f32 %v245, %v263
  %v265 = vpop.f32.mrf.mxu0
  %v266 = vadd.f32 %v247, %v265
  %267 = vmatmul.bf16.gmra.mxu0 %v123
  %v268 = vpop.f32.mrf.mxu0
  %v269 = vadd.f32 %v250, %v268
  %v270 = vpop.f32.mrf.mxu0
  %v271 = vadd.f32 %v252, %v270
  %272 = vdwg.mxu0
  %v273 = vmax.f32 %v154, %v264
  %v274 = vmax.f32 %v156, %v266
  %v275 = vmax.f32 %v159, %v269
  %v276 = vmax.f32 %v161, %v271
  %v277 = vld [vmem:[%s4] sm:$0xf]
  %v278 = vld [vmem:[%s4 + $0x4] sm:$0xf]
  %v279 = vld [vmem:[%s4 + $0x8] sm:$0xf]
  %v280 = vld [vmem:[%s4 + $0xc] sm:$0xf]
  %v281 = vld [vmem:[%s4 + $0x10] sm:$0xf]
  %v282 = vld [vmem:[%s4 + $0x14] sm:$0xf]
  %v283 = vld [vmem:[%s4 + $0x18] sm:$0xf]
  %v284 = vld [vmem:[%s4 + $0x1c] sm:$0xf]
  %v285 = vld [vmem:[%s4 + $0x20] sm:$0xf]
  %v286 = vld [vmem:[%s4 + $0x24] sm:$0xf]
  %v287 = vld [vmem:[%s4 + $0x28] sm:$0xf]
  %v288 = vld [vmem:[%s4 + $0x2c] sm:$0xf]
  %v289 = vld [vmem:[%s4 + $0x30] sm:$0xf]
  %v290 = vld [vmem:[%s4 + $0x34] sm:$0xf]
  %v291 = vld [vmem:[%s4 + $0x38] sm:$0xf]
  %v292 = vld [vmem:[%s4 + $0x3c] sm:$0xf]
  %v293 = vld [vmem:[%s4 + $0x40] sm:$0xf]
  %v294 = vld [vmem:[%s4 + $0x44] sm:$0xf]
  %v313 = vunpack.c.l.b16 %v277
  %v314 = vunpack.c.l.b16 %v278
  %v315 = vunpack.c.l.b16 %v279
  %v316 = vunpack.c.l.b16 %v280
  %v317 = vunpack.c.l.b16 %v281
  %v318 = vunpack.c.l.b16 %v282
  %v319 = vunpack.c.l.b16 %v283
  %v320 = vunpack.c.l.b16 %v284
  %v321 = vunpack.c.l.b16 %v285
  %v322 = vunpack.c.l.b16 %v286
  %v323 = vunpack.c.l.b16 %v287
  %v324 = vunpack.c.l.b16 %v288
  %v325 = vunpack.c.l.b16 %v289
  %v326 = vunpack.c.l.b16 %v290
  %v327 = vunpack.c.l.b16 %v291
  %v328 = vunpack.c.l.b16 %v292
  %v329 = vunpack.c.l.b16 %v293
  %v330 = vunpack.c.l.b16 %v294
  %v331 = vpack.c.b16 %v314, %v313
  %v332 = vpack.c.b16 %v316, %v315
  %v333 = vpack.c.b16 %v318, %v317
  %v334 = vpack.c.b16 %v320, %v319
  %v335 = vpack.c.b16 %v322, %v321
  %v336 = vpack.c.b16 %v324, %v323
  %v337 = vpack.c.b16 %v326, %v325
  %v338 = vpack.c.b16 %v328, %v327
  %v339 = vpack.c.b16 %v330, %v329
  %349 = vmatpush.bf16.msra.mxu0 %v338
  %350 = vmatpush.bf16.msra.mxu0 %v337
  %351 = vmatpush.bf16.msra.mxu0 %v336
  %352 = vmatpush.bf16.msra.mxu0 %v335
  %353 = vmatpush.bf16.msra.mxu0 %v334
  %354 = vmatpush.bf16.msra.mxu0 %v333
  %355 = vmatpush.bf16.msra.mxu0 %v332
  %356 = vmatpush.bf16.msra.mxu0 %v331
  %357 = vmatmul.bf16.gmra.mxu0 %v58
  %v358 = vpop.f32.mrf.mxu0
  %v359 = vadd.f32 0.0, %v358
  %v360 = vpop.f32.mrf.mxu0
  %v361 = vadd.f32 0.0, %v360
  %362 = vmatmul.bf16.gmra.mxu0 %v60
  %v363 = vpop.f32.mrf.mxu0
  %v364 = vadd.f32 0.0, %v363
  %v365 = vpop.f32.mrf.mxu0
  %v366 = vadd.f32 0.0, %v365
  %367 = vdwg.mxu0
  %368 = vmatpush.bf16.msra.mxu0 0
  %369 = vmatpush.bf16.msra.mxu0 0
  %370 = vmatpush.bf16.msra.mxu0 0
  %371 = vmatpush.bf16.msra.mxu0 0
  %372 = vmatpush.bf16.msra.mxu0 0
  %373 = vmatpush.bf16.msra.mxu0 0
  %374 = vmatpush.bf16.msra.mxu0 0
  %375 = vmatpush.bf16.msra.mxu0 %v339
  %376 = vmatmul.bf16.gmra.mxu0 %v120
  %v377 = vpop.f32.mrf.mxu0
  %v378 = vadd.f32 %v359, %v377
  %v379 = vpop.f32.mrf.mxu0
  %v380 = vadd.f32 %v361, %v379
  %381 = vmatmul.bf16.gmra.mxu0 %v123
  %v382 = vpop.f32.mrf.mxu0
  %v383 = vadd.f32 %v364, %v382
  %v384 = vpop.f32.mrf.mxu0
  %v385 = vadd.f32 %v366, %v384
  %386 = vdwg.mxu0
  %v387 = vmax.f32 %v273, %v378
  %v388 = vmax.f32 %v274, %v380
  %v389 = vmax.f32 %v275, %v383
  %v390 = vmax.f32 %v276, %v385
  %v391 = vld [vmem:[%s5] sm:$0xf]
  %v392 = vld [vmem:[%s5 + $0x4] sm:$0xf]
  %v393 = vld [vmem:[%s5 + $0x8] sm:$0xf]
  %v394 = vld [vmem:[%s5 + $0xc] sm:$0xf]
  %v395 = vld [vmem:[%s5 + $0x10] sm:$0xf]
  %v396 = vld [vmem:[%s5 + $0x14] sm:$0xf]
  %v397 = vld [vmem:[%s5 + $0x18] sm:$0xf]
  %v398 = vld [vmem:[%s5 + $0x1c] sm:$0xf]
  %v399 = vld [vmem:[%s5 + $0x20] sm:$0xf]
  %v400 = vld [vmem:[%s5 + $0x24] sm:$0xf]
  %v401 = vld [vmem:[%s5 + $0x28] sm:$0xf]
  %v402 = vld [vmem:[%s5 + $0x2c] sm:$0xf]
  %v403 = vld [vmem:[%s5 + $0x30] sm:$0xf]
  %v404 = vld [vmem:[%s5 + $0x34] sm:$0xf]
  %v405 = vld [vmem:[%s5 + $0x38] sm:$0xf]
  %v406 = vld [vmem:[%s5 + $0x3c] sm:$0xf]
  %v407 = vld [vmem:[%s5 + $0x40] sm:$0xf]
  %v408 = vld [vmem:[%s5 + $0x44] sm:$0xf]
  %v427 = vunpack.c.l.b16 %v391
  %v428 = vunpack.c.l.b16 %v392
  %v429 = vunpack.c.l.b16 %v393
  %v430 = vunpack.c.l.b16 %v394
  %v431 = vunpack.c.l.b16 %v395
  %v432 = vunpack.c.l.b16 %v396
  %v433 = vunpack.c.l.b16 %v397
  %v434 = vunpack.c.l.b16 %v398
  %v435 = vunpack.c.l.b16 %v399
  %v436 = vunpack.c.l.b16 %v400
  %v437 = vunpack.c.l.b16 %v401
  %v438 = vunpack.c.l.b16 %v402
  %v439 = vunpack.c.l.b16 %v403
  %v440 = vunpack.c.l.b16 %v404
  %v441 = vunpack.c.l.b16 %v405
  %v442 = vunpack.c.l.b16 %v406
  %v443 = vunpack.c.l.b16 %v407
  %v444 = vunpack.c.l.b16 %v408
  %v445 = vpack.c.b16 %v428, %v427
  %v446 = vpack.c.b16 %v430, %v429
  %v447 = vpack.c.b16 %v432, %v431
  %v448 = vpack.c.b16 %v434, %v433
  %v449 = vpack.c.b16 %v436, %v435
  %v450 = vpack.c.b16 %v438, %v437
  %v451 = vpack.c.b16 %v440, %v439
  %v452 = vpack.c.b16 %v442, %v441
  %v453 = vpack.c.b16 %v444, %v443
  %463 = vmatpush.bf16.msra.mxu0 %v452
  %464 = vmatpush.bf16.msra.mxu0 %v451
  %465 = vmatpush.bf16.msra.mxu0 %v450
  %466 = vmatpush.bf16.msra.mxu0 %v449
  %467 = vmatpush.bf16.msra.mxu0 %v448
  %468 = vmatpush.bf16.msra.mxu0 %v447
  %469 = vmatpush.bf16.msra.mxu0 %v446
  %470 = vmatpush.bf16.msra.mxu0 %v445
  %471 = vmatmul.bf16.gmra.mxu0 %v58
  %v472 = vpop.f32.mrf.mxu0
  %v473 = vadd.f32 0.0, %v472
  %v474 = vpop.f32.mrf.mxu0
  %v475 = vadd.f32 0.0, %v474
  %476 = vmatmul.bf16.gmra.mxu0 %v60
  %v477 = vpop.f32.mrf.mxu0
  %v478 = vadd.f32 0.0, %v477
  %v479 = vpop.f32.mrf.mxu0
  %v480 = vadd.f32 0.0, %v479
  %481 = vdwg.mxu0
  %482 = vmatpush.bf16.msra.mxu0 0
  %483 = vmatpush.bf16.msra.mxu0 0
  %484 = vmatpush.bf16.msra.mxu0 0
  %485 = vmatpush.bf16.msra.mxu0 0
  %486 = vmatpush.bf16.msra.mxu0 0
  %487 = vmatpush.bf16.msra.mxu0 0
  %488 = vmatpush.bf16.msra.mxu0 0
  %489 = vmatpush.bf16.msra.mxu0 %v453
  %490 = vmatmul.bf16.gmra.mxu0 %v120
  %v491 = vpop.f32.mrf.mxu0
  %v492 = vadd.f32 %v473, %v491
  %v493 = vpop.f32.mrf.mxu0
  %v494 = vadd.f32 %v475, %v493
  %495 = vmatmul.bf16.gmra.mxu0 %v123
  %v496 = vpop.f32.mrf.mxu0
  %v497 = vadd.f32 %v478, %v496
  %v498 = vpop.f32.mrf.mxu0
  %v499 = vadd.f32 %v480, %v498
  %500 = vdwg.mxu0
  %v501 = vmax.f32 %v387, %v492
  %v502 = vmax.f32 %v388, %v494
  %v503 = vmax.f32 %v389, %v497
  %v504 = vmax.f32 %v390, %v499
  %v505 = vld [vmem:[%s1] sm:$0xff]
  %v506 = vld [vmem:[%s1 + $0x8] sm:$0xff]
  %v507 = vld [vmem:[%s1 + $0x10] sm:$0xff]
  %v508 = vld [vmem:[%s1 + $0x18] sm:$0xff]
  %510 = vset.pattern.permute.xlu0 0
  %511 = vperm.xlu0 %510, %v505
  %v512 = vpop.permute.xlu0 %511
  %515 = vset.pattern.permute.xlu0 0
  %516 = vperm.xlu0 %515, %v506
  %v517 = vpop.permute.xlu0 %516
  %520 = vset.pattern.permute.xlu0 0
  %521 = vperm.xlu0 %520, %v507
  %v522 = vpop.permute.xlu0 %521
  %525 = vset.pattern.permute.xlu0 0
  %526 = vperm.xlu0 %525, %v508
  %v527 = vpop.permute.xlu0 %526
  %v529 = vadd.f32 %v501, %v512
  %v530 = vadd.f32 %v502, %v517
  %v531 = vadd.f32 %v503, %v522
  %v532 = vadd.f32 %v504, %v527
  %v533 = vmax.f32 %v529, 0.0
  %v534 = vmax.f32 %v530, 0.0
  %v535 = vmax.f32 %v531, 0.0
  %v536 = vmax.f32 %v532, 0.0
  %v537 = vpack.c.bf16 %v533, %v533
  %v538 = vpack.c.bf16 %v534, %v534
  %v539 = vpack.c.bf16 %v535, %v535
  %v540 = vpack.c.bf16 %v536, %v536
  %541 = vst [vmem:[%s6] sm:$0xf] %v537
  %542 = vst [vmem:[%s6 + $0x4] sm:$0xf] %v538
  %543 = vst [vmem:[%s6 + $0x8] sm:$0xf] %v539
  %544 = vst [vmem:[%s6 + $0xc] sm:$0xf] %v540
  // Predicated region
  $region26: #{alexnet_forward.7} parent=0 // pred_check
    _
  $region27: #{alexnet_forward.7} parent=0 // pred_check_branch
    %546 = sbr.rel (0) target = $region29
  $region28: #{alexnet_forward.7} parent=0 // pred_region
    _
  $region29: #{alexnet_forward.7} parent=0 // pred_fallthru
    _
  // Predicated region
  $region30: #{alexnet_forward.7} parent=0 // pred_check
    _
  $region31: #{alexnet_forward.7} parent=0 // pred_check_branch
    %548 = sbr.rel (0) target = $region33
  $region32: #{alexnet_forward.7} parent=0 // pred_region
    _
  $region33: #{alexnet_forward.7} parent=0 // pred_fallthru
    _

// kernel: alexnet_forward.8
$region0: #{alexnet_forward.8}
  #allocation0 [shape = 'u32[]', space=smem, size = 0x4, offset = 0x4, fixed_abs, tag = 'smem constant byte address 0x4 - core index']
  #allocation1 [shape = 'u32[72,128]{1,0:T(1,128)}', space=vmem, size = 0x9000, scoped, tag = 'internal scratch']
  %s0 = inlined_call_operand.vmem [shape: bf16[48,288], index: 0, kind: input, shape index: {}]
  %s1 = inlined_call_operand.vmem [shape: f32[48,1], index: 1, kind: input, shape index: {}]
  %s2 = inlined_call_operand.vmem [shape: bf16[288,128], index: 2, kind: input, shape index: {}]
  %s3 = inlined_call_operand.vmem [shape: bf16[48,128], index: 3, kind: output, shape index: {}]
  %s4 = sld [smem:[#allocation0]]
  $region22: #{alexnet_forward.8} parent=0
    _
  %s6 = ssub.s32 1, %s4
  %s7 = scalar_select 0, %s6, %s4
  // Predicated region
  $region2: #{alexnet_forward.8} parent=0 // pred_check
    _
  $region3: #{alexnet_forward.8} parent=0 // pred_check_branch
    %9 = sbr.rel (0) target = $region5
  $region4: #{alexnet_forward.8} parent=0 // pred_region
    _
  $region5: #{alexnet_forward.8} parent=0 // pred_fallthru
    _
  // Predicated region
  $region6: #{alexnet_forward.8} parent=0 // pred_check
    _
  $region7: #{alexnet_forward.8} parent=0 // pred_check_branch
    %11 = sbr.rel (0) target = $region9
  $region8: #{alexnet_forward.8} parent=0 // pred_region
    _
  $region9: #{alexnet_forward.8} parent=0 // pred_fallthru
    _
  // Predicated region
  $region10: #{alexnet_forward.8} parent=0 // pred_check
    _
  $region11: #{alexnet_forward.8} parent=0 // pred_check_branch
    %13 = sbr.rel (0) target = $region13
  $region12: #{alexnet_forward.8} parent=0 // pred_region
    _
  $region13: #{alexnet_forward.8} parent=0 // pred_fallthru
    _
  %v15 = vld [vmem:[%s0] sm:$0xff]
  %v16 = vld [vmem:[%s0 + $0x8] sm:$0xf]
  %v17 = vld [vmem:[%s0 + $0xc] sm:$0xff]
  %v18 = vld [vmem:[%s0 + $0x14] sm:$0xf]
  %v19 = vld [vmem:[%s0 + $0x18] sm:$0xff]
  %v20 = vld [vmem:[%s0 + $0x20] sm:$0xf]
  %v21 = vld [vmem:[%s0 + $0x24] sm:$0xff]
  %v22 = vld [vmem:[%s0 + $0x2c] sm:$0xf]
  %v23 = vld [vmem:[%s0 + $0x30] sm:$0xff]
  %v24 = vld [vmem:[%s0 + $0x38] sm:$0xf]
  %v25 = vld [vmem:[%s0 + $0x3c] sm:$0xff]
  %v26 = vld [vmem:[%s0 + $0x44] sm:$0xf]
  %v27 = vld [vmem:[%s2] sm:$0xf]
  %v28 = vld [vmem:[%s2 + $0x4] sm:$0xf]
  %v29 = vld [vmem:[%s2 + $0x8] sm:$0xf]
  %v30 = vld [vmem:[%s2 + $0xc] sm:$0xf]
  %v31 = vld [vmem:[%s2 + $0x10] sm:$0xf]
  %v32 = vld [vmem:[%s2 + $0x14] sm:$0xf]
  %v33 = vld [vmem:[%s2 + $0x18] sm:$0xf]
  %v34 = vld [vmem:[%s2 + $0x1c] sm:$0xf]
  %v35 = vld [vmem:[%s2 + $0x20] sm:$0xf]
  %v36 = vld [vmem:[%s2 + $0x24] sm:$0xf]
  %v37 = vld [vmem:[%s2 + $0x28] sm:$0xf]
  %v38 = vld [vmem:[%s2 + $0x2c] sm:$0xf]
  %v39 = vld [vmem:[%s2 + $0x30] sm:$0xf]
  %v40 = vld [vmem:[%s2 + $0x34] sm:$0xf]
  %v41 = vld [vmem:[%s2 + $0x38] sm:$0xf]
  %v42 = vld [vmem:[%s2 + $0x3c] sm:$0xf]
  %v43 = vld [vmem:[%s2 + $0x40] sm:$0xf]
  %v44 = vld [vmem:[%s2 + $0x44] sm:$0xf]
  %v45 = vld [vmem:[%s2 + $0x48] sm:$0xf]
  %v46 = vld [vmem:[%s2 + $0x4c] sm:$0xf]
  %v47 = vld [vmem:[%s2 + $0x50] sm:$0xf]
  %v48 = vld [vmem:[%s2 + $0x54] sm:$0xf]
  %v49 = vld [vmem:[%s2 + $0x58] sm:$0xf]
  %v50 = vld [vmem:[%s2 + $0x5c] sm:$0xf]
  %v51 = vld [vmem:[%s2 + $0x60] sm:$0xf]
  %v52 = vld [vmem:[%s2 + $0x64] sm:$0xf]
  %v53 = vld [vmem:[%s2 + $0x68] sm:$0xf]
  %v54 = vld [vmem:[%s2 + $0x6c] sm:$0xf]
  %v55 = vld [vmem:[%s2 + $0x70] sm:$0xf]
  %v56 = vld [vmem:[%s2 + $0x74] sm:$0xf]
  %v57 = vld [vmem:[%s2 + $0x78] sm:$0xf]
  %v58 = vld [vmem:[%s2 + $0x7c] sm:$0xf]
  %v59 = vld [vmem:[%s2 + $0x80] sm:$0xf]
  %v60 = vld [vmem:[%s2 + $0x84] sm:$0xf]
  %v61 = vld [vmem:[%s2 + $0x88] sm:$0xf]
  %v62 = vld [vmem:[%s2 + $0x8c] sm:$0xf]
  %v63 = vld [vmem:[%s1] sm:$0xff]
  %v64 = vld [vmem:[%s1 + $0x8] sm:$0xff]
  %v65 = vld [vmem:[%s1 + $0x10] sm:$0xff]
  %v66 = vld [vmem:[%s1 + $0x18] sm:$0xff]
  %v67 = vld [vmem:[%s1 + $0x20] sm:$0xff]
  %v68 = vld [vmem:[%s1 + $0x28] sm:$0xff]
  %70 = vset.pattern.permute.xlu0 0
  %71 = vperm.xlu0 %70, %v63
  %v72 = vpop.permute.xlu0 %71
  %75 = vset.pattern.permute.xlu0 0
  %76 = vperm.xlu0 %75, %v64
  %v77 = vpop.permute.xlu0 %76
  %80 = vset.pattern.permute.xlu0 0
  %81 = vperm.xlu0 %80, %v65
  %v82 = vpop.permute.xlu0 %81
  %85 = vset.pattern.permute.xlu0 0
  %86 = vperm.xlu0 %85, %v66
  %v87 = vpop.permute.xlu0 %86
  %90 = vset.pattern.permute.xlu0 0
  %91 = vperm.xlu0 %90, %v67
  %v92 = vpop.permute.xlu0 %91
  %95 = vset.pattern.permute.xlu0 0
  %96 = vperm.xlu0 %95, %v68
  %v97 = vpop.permute.xlu0 %96
  %v111 = vunpack.c.l.b16 %v15
  %v112 = vunpack.c.h.b16 %v15
  %v113 = vunpack.c.l.b16 %v16
  %v114 = vunpack.c.l.b16 %v17
  %v115 = vunpack.c.h.b16 %v17
  %v116 = vunpack.c.l.b16 %v18
  %v117 = vunpack.c.l.b16 %v19
  %v118 = vunpack.c.h.b16 %v19
  %v119 = vunpack.c.l.b16 %v20
  %v120 = vunpack.c.l.b16 %v21
  %v121 = vunpack.c.h.b16 %v21
  %v122 = vunpack.c.l.b16 %v22
  %v123 = vunpack.c.l.b16 %v23
  %v124 = vunpack.c.h.b16 %v23
  %v125 = vunpack.c.l.b16 %v24
  %v126 = vunpack.c.l.b16 %v25
  %v127 = vunpack.c.h.b16 %v25
  %v128 = vunpack.c.l.b16 %v26
  %v129 = vpack.c.b16 %v114, %v111
  %v130 = vpack.c.b16 %v115, %v112
  %v131 = vpack.c.b16 %v116, %v113
  %v132 = vpack.c.b16 %v120, %v117
  %v133 = vpack.c.b16 %v121, %v118
  %v134 = vpack.c.b16 %v122, %v119
  %v135 = vpack.c.b16 %v126, %v123
  %v136 = vpack.c.b16 %v127, %v124
  %v137 = vpack.c.b16 %v128, %v125
  %v180 = vunpack.c.l.b16 %v27
  %v181 = vunpack.c.l.b16 %v28
  %v182 = vunpack.c.l.b16 %v29
  %v183 = vunpack.c.l.b16 %v30
  %v184 = vunpack.c.l.b16 %v31
  %v185 = vunpack.c.l.b16 %v32
  %v186 = vunpack.c.l.b16 %v33
  %v187 = vunpack.c.l.b16 %v34
  %v188 = vunpack.c.l.b16 %v35
  %v189 = vunpack.c.l.b16 %v36
  %v190 = vunpack.c.l.b16 %v37
  %v191 = vunpack.c.l.b16 %v38
  %v192 = vunpack.c.l.b16 %v39
  %v193 = vunpack.c.l.b16 %v40
  %v194 = vunpack.c.l.b16 %v41
  %v195 = vunpack.c.l.b16 %v42
  %v196 = vunpack.c.l.b16 %v43
  %v197 = vunpack.c.l.b16 %v44
  %v198 = vunpack.c.l.b16 %v45
  %v199 = vunpack.c.l.b16 %v46
  %v200 = vunpack.c.l.b16 %v47
  %v201 = vunpack.c.l.b16 %v48
  %v202 = vunpack.c.l.b16 %v49
  %v203 = vunpack.c.l.b16 %v50
  %v204 = vunpack.c.l.b16 %v51
  %v205 = vunpack.c.l.b16 %v52
  %v206 = vunpack.c.l.b16 %v53
  %v207 = vunpack.c.l.b16 %v54
  %v208 = vunpack.c.l.b16 %v55
  %v209 = vunpack.c.l.b16 %v56
  %v210 = vunpack.c.l.b16 %v57
  %v211 = vunpack.c.l.b16 %v58
  %v212 = vunpack.c.l.b16 %v59
  %v213 = vunpack.c.l.b16 %v60
  %v214 = vunpack.c.l.b16 %v61
  %v215 = vunpack.c.l.b16 %v62
  %v216 = vpack.c.b16 %v181, %v180
  %v217 = vpack.c.b16 %v183, %v182
  %v218 = vpack.c.b16 %v185, %v184
  %v219 = vpack.c.b16 %v187, %v186
  %v220 = vpack.c.b16 %v189, %v188
  %v221 = vpack.c.b16 %v191, %v190
  %v222 = vpack.c.b16 %v193, %v192
  %v223 = vpack.c.b16 %v195, %v194
  %v224 = vpack.c.b16 %v197, %v196
  %v225 = vpack.c.b16 %v199, %v198
  %v226 = vpack.c.b16 %v201, %v200
  %v227 = vpack.c.b16 %v203, %v202
  %v228 = vpack.c.b16 %v205, %v204
  %v229 = vpack.c.b16 %v207, %v206
  %v230 = vpack.c.b16 %v209, %v208
  %v231 = vpack.c.b16 %v211, %v210
  %v232 = vpack.c.b16 %v213, %v212
  %v233 = vpack.c.b16 %v215, %v214
  %vm252 = vcmask 261120
  %v254 = vsel %vm252, %v131, 0
  %v257 = vsel %vm252, %v134, 0
  %v260 = vsel %vm252, %v137, 0
  %262 = vmatpush.bf16.msra.mxu0 %v223
  %263 = vmatpush.bf16.msra.mxu0 %v222
  %264 = vmatpush.bf16.msra.mxu0 %v221
  %265 = vmatpush.bf16.msra.mxu0 %v220
  %266 = vmatpush.bf16.msra.mxu0 %v219
  %267 = vmatpush.bf16.msra.mxu0 %v218
  %268 = vmatpush.bf16.msra.mxu0 %v217
  %269 = vmatpush.bf16.msra.mxu0 %v216
  %270 = vmatmul.bf16.gmra.mxu0 %v129
  %v271 = vpop.f32.mrf.mxu0
  %v272 = vadd.f32 %v72, %v271
  %v273 = vpop.f32.mrf.mxu0
  %v274 = vadd.f32 %v77, %v273
  %275 = vmatmul.bf16.gmra.mxu0 %v132
  %v276 = vpop.f32.mrf.mxu0
  %v277 = vadd.f32 %v82, %v276
  %v278 = vpop.f32.mrf.mxu0
  %v279 = vadd.f32 %v87, %v278
  %280 = vmatmul.bf16.gmra.mxu0 %v135
  %v281 = vpop.f32.mrf.mxu0
  %v282 = vadd.f32 %v92, %v281
  %v283 = vpop.f32.mrf.mxu0
  %v284 = vadd.f32 %v97, %v283
  %285 = vdwg.mxu0
  %286 = vmatpush.bf16.msra.mxu0 %v231
  %287 = vmatpush.bf16.msra.mxu0 %v230
  %288 = vmatpush.bf16.msra.mxu0 %v229
  %289 = vmatpush.bf16.msra.mxu0 %v228
  %290 = vmatpush.bf16.msra.mxu0 %v227
  %291 = vmatpush.bf16.msra.mxu0 %v226
  %292 = vmatpush.bf16.msra.mxu0 %v225
  %293 = vmatpush.bf16.msra.mxu0 %v224
  %294 = vmatmul.bf16.gmra.mxu0 %v130
  %v295 = vpop.f32.mrf.mxu0
  %v296 = vadd.f32 %v272, %v295
  %v297 = vpop.f32.mrf.mxu0
  %v298 = vadd.f32 %v274, %v297
  %299 = vmatmul.bf16.gmra.mxu0 %v133
  %v300 = vpop.f32.mrf.mxu0
  %v301 = vadd.f32 %v277, %v300
  %v302 = vpop.f32.mrf.mxu0
  %v303 = vadd.f32 %v279, %v302
  %304 = vmatmul.bf16.gmra.mxu0 %v136
  %v305 = vpop.f32.mrf.mxu0
  %v306 = vadd.f32 %v282, %v305
  %v307 = vpop.f32.mrf.mxu0
  %v308 = vadd.f32 %v284, %v307
  %309 = vdwg.mxu0
  %310 = vmatpush.bf16.msra.mxu0 0
  %311 = vmatpush.bf16.msra.mxu0 0
  %312 = vmatpush.bf16.msra.mxu0 0
  %313 = vmatpush.bf16.msra.mxu0 0
  %314 = vmatpush.bf16.msra.mxu0 0
  %315 = vmatpush.bf16.msra.mxu0 0
  %316 = vmatpush.bf16.msra.mxu0 %v233
  %317 = vmatpush.bf16.msra.mxu0 %v232
  %318 = vmatmul.bf16.gmra.mxu0 %v254
  %v319 = vpop.f32.mrf.mxu0
  %v320 = vadd.f32 %v296, %v319
  %v321 = vpop.f32.mrf.mxu0
  %v322 = vadd.f32 %v298, %v321
  %323 = vmatmul.bf16.gmra.mxu0 %v257
  %v324 = vpop.f32.mrf.mxu0
  %v325 = vadd.f32 %v301, %v324
  %v326 = vpop.f32.mrf.mxu0
  %v327 = vadd.f32 %v303, %v326
  %328 = vmatmul.bf16.gmra.mxu0 %v260
  %v329 = vpop.f32.mrf.mxu0
  %v330 = vadd.f32 %v306, %v329
  %v331 = vpop.f32.mrf.mxu0
  %v332 = vadd.f32 %v308, %v331
  %333 = vdwg.mxu0
  %v334 = vmax.f32 %v320, 0.0
  %v335 = vmax.f32 %v322, 0.0
  %v336 = vmax.f32 %v325, 0.0
  %v337 = vmax.f32 %v327, 0.0
  %v338 = vmax.f32 %v330, 0.0
  %v339 = vmax.f32 %v332, 0.0
  %v340 = vpack.c.bf16 %v334, %v334
  %v341 = vpack.c.bf16 %v335, %v335
  %v342 = vpack.c.bf16 %v336, %v336
  %v343 = vpack.c.bf16 %v337, %v337
  %v344 = vpack.c.bf16 %v338, %v338
  %v345 = vpack.c.bf16 %v339, %v339
  %346 = vst [vmem:[%s3] sm:$0xf] %v340
  %347 = vst [vmem:[%s3 + $0x4] sm:$0xf] %v341
  %348 = vst [vmem:[%s3 + $0x8] sm:$0xf] %v342
  %349 = vst [vmem:[%s3 + $0xc] sm:$0xf] %v343
  %350 = vst [vmem:[%s3 + $0x10] sm:$0xf] %v344
  %351 = vst [vmem:[%s3 + $0x14] sm:$0xf] %v345
  // Predicated region
  $region14: #{alexnet_forward.8} parent=0 // pred_check
    _
  $region15: #{alexnet_forward.8} parent=0 // pred_check_branch
    %353 = sbr.rel (0) target = $region17
  $region16: #{alexnet_forward.8} parent=0 // pred_region
    _
  $region17: #{alexnet_forward.8} parent=0 // pred_fallthru
    _
  // Predicated region
  $region18: #{alexnet_forward.8} parent=0 // pred_check
    _
  $region19: #{alexnet_forward.8} parent=0 // pred_check_branch
    %355 = sbr.rel (0) target = $region21
  $region20: #{alexnet_forward.8} parent=0 // pred_region
    _
  $region21: #{alexnet_forward.8} parent=0 // pred_fallthru
    _

// kernel: alexnet_forward.9
$region0: #{alexnet_forward.9}
  #allocation0 [shape = 'u32[]', space=smem, size = 0x4, offset = 0x4, fixed_abs, tag = 'smem constant byte address 0x4 - core index']
  #allocation1 [shape = 'u32[72,128]{1,0:T(1,128)}', space=vmem, size = 0x9000, scoped, tag = 'internal scratch']
  %s0 = inlined_call_operand.vmem [shape: bf16[48,432], index: 0, kind: input, shape index: {}]
  %s1 = inlined_call_operand.vmem [shape: f32[48,1], index: 1, kind: input, shape index: {}]
  %s2 = inlined_call_operand.vmem [shape: bf16[432,128], index: 2, kind: input, shape index: {}]
  %s3 = inlined_call_operand.vmem [shape: bf16[48,128], index: 3, kind: output, shape index: {}]
  %s4 = sld [smem:[#allocation0]]
  $region22: #{alexnet_forward.9} parent=0
    _
  %s6 = ssub.s32 1, %s4
  %s7 = scalar_select 0, %s6, %s4
  // Predicated region
  $region2: #{alexnet_forward.9} parent=0 // pred_check
    _
  $region3: #{alexnet_forward.9} parent=0 // pred_check_branch
    %9 = sbr.rel (0) target = $region5
  $region4: #{alexnet_forward.9} parent=0 // pred_region
    _
  $region5: #{alexnet_forward.9} parent=0 // pred_fallthru
    _
  // Predicated region
  $region6: #{alexnet_forward.9} parent=0 // pred_check
    _
  $region7: #{alexnet_forward.9} parent=0 // pred_check_branch
    %11 = sbr.rel (0) target = $region9
  $region8: #{alexnet_forward.9} parent=0 // pred_region
    _
  $region9: #{alexnet_forward.9} parent=0 // pred_fallthru
    _
  // Predicated region
  $region10: #{alexnet_forward.9} parent=0 // pred_check
    _
  $region11: #{alexnet_forward.9} parent=0 // pred_check_branch
    %13 = sbr.rel (0) target = $region13
  $region12: #{alexnet_forward.9} parent=0 // pred_region
    _
  $region13: #{alexnet_forward.9} parent=0 // pred_fallthru
    _
  %v15 = vld [vmem:[%s0] sm:$0xff]
  %v16 = vld [vmem:[%s0 + $0x8] sm:$0xff]
  %v17 = vld [vmem:[%s0 + $0x10] sm:$0xff]
  %v18 = vld [vmem:[%s0 + $0x18] sm:$0xff]
  %v19 = vld [vmem:[%s0 + $0x20] sm:$0xff]
  %v20 = vld [vmem:[%s0 + $0x28] sm:$0xff]
  %v21 = vld [vmem:[%s0 + $0x30] sm:$0xff]
  %v22 = vld [vmem:[%s0 + $0x38] sm:$0xff]
  %v23 = vld [vmem:[%s0 + $0x40] sm:$0xff]
  %v24 = vld [vmem:[%s0 + $0x48] sm:$0xff]
  %v25 = vld [vmem:[%s0 + $0x50] sm:$0xff]
  %v26 = vld [vmem:[%s0 + $0x58] sm:$0xff]
  %v27 = vld [vmem:[%s2] sm:$0xf]
  %v28 = vld [vmem:[%s2 + $0x4] sm:$0xf]
  %v29 = vld [vmem:[%s2 + $0x8] sm:$0xf]
  %v30 = vld [vmem:[%s2 + $0xc] sm:$0xf]
  %v31 = vld [vmem:[%s2 + $0x10] sm:$0xf]
  %v32 = vld [vmem:[%s2 + $0x14] sm:$0xf]
  %v33 = vld [vmem:[%s2 + $0x18] sm:$0xf]
  %v34 = vld [vmem:[%s2 + $0x1c] sm:$0xf]
  %v35 = vld [vmem:[%s2 + $0x20] sm:$0xf]
  %v36 = vld [vmem:[%s2 + $0x24] sm:$0xf]
  %v37 = vld [vmem:[%s2 + $0x28] sm:$0xf]
  %v38 = vld [vmem:[%s2 + $0x2c] sm:$0xf]
  %v39 = vld [vmem:[%s2 + $0x30] sm:$0xf]
  %v40 = vld [vmem:[%s2 + $0x34] sm:$0xf]
  %v41 = vld [vmem:[%s2 + $0x38] sm:$0xf]
  %v42 = vld [vmem:[%s2 + $0x3c] sm:$0xf]
  %v43 = vld [vmem:[%s2 + $0x40] sm:$0xf]
  %v44 = vld [vmem:[%s2 + $0x44] sm:$0xf]
  %v45 = vld [vmem:[%s2 + $0x48] sm:$0xf]
  %v46 = vld [vmem:[%s2 + $0x4c] sm:$0xf]
  %v47 = vld [vmem:[%s2 + $0x50] sm:$0xf]
  %v48 = vld [vmem:[%s2 + $0x54] sm:$0xf]
  %v49 = vld [vmem:[%s2 + $0x58] sm:$0xf]
  %v50 = vld [vmem:[%s2 + $0x5c] sm:$0xf]
  %v51 = vld [vmem:[%s2 + $0x60] sm:$0xf]
  %v52 = vld [vmem:[%s2 + $0x64] sm:$0xf]
  %v53 = vld [vmem:[%s2 + $0x68] sm:$0xf]
  %v54 = vld [vmem:[%s2 + $0x6c] sm:$0xf]
  %v55 = vld [vmem:[%s2 + $0x70] sm:$0xf]
  %v56 = vld [vmem:[%s2 + $0x74] sm:$0xf]
  %v57 = vld [vmem:[%s2 + $0x78] sm:$0xf]
  %v58 = vld [vmem:[%s2 + $0x7c] sm:$0xf]
  %v59 = vld [vmem:[%s2 + $0x80] sm:$0xf]
  %v60 = vld [vmem:[%s2 + $0x84] sm:$0xf]
  %v61 = vld [vmem:[%s2 + $0x88] sm:$0xf]
  %v62 = vld [vmem:[%s2 + $0x8c] sm:$0xf]
  %v63 = vld [vmem:[%s2 + $0x90] sm:$0xf]
  %v64 = vld [vmem:[%s2 + $0x94] sm:$0xf]
  %v65 = vld [vmem:[%s2 + $0x98] sm:$0xf]
  %v66 = vld [vmem:[%s2 + $0x9c] sm:$0xf]
  %v67 = vld [vmem:[%s2 + $0xa0] sm:$0xf]
  %v68 = vld [vmem:[%s2 + $0xa4] sm:$0xf]
  %v69 = vld [vmem:[%s2 + $0xa8] sm:$0xf]
  %v70 = vld [vmem:[%s2 + $0xac] sm:$0xf]
  %v71 = vld [vmem:[%s2 + $0xb0] sm:$0xf]
  %v72 = vld [vmem:[%s2 + $0xb4] sm:$0xf]
  %v73 = vld [vmem:[%s2 + $0xb8] sm:$0xf]
  %v74 = vld [vmem:[%s2 + $0xbc] sm:$0xf]
  %v75 = vld [vmem:[%s2 + $0xc0] sm:$0xf]
  %v76 = vld [vmem:[%s2 + $0xc4] sm:$0xf]
  %v77 = vld [vmem:[%s2 + $0xc8] sm:$0xf]
  %v78 = vld [vmem:[%s2 + $0xcc] sm:$0xf]
  %v79 = vld [vmem:[%s2 + $0xd0] sm:$0xf]
  %v80 = vld [vmem:[%s2 + $0xd4] sm:$0xf]
  %v81 = vld [vmem:[%s1] sm:$0xff]
  %v82 = vld [vmem:[%s1 + $0x8] sm:$0xff]
  %v83 = vld [vmem:[%s1 + $0x10] sm:$0xff]
  %v84 = vld [vmem:[%s1 + $0x18] sm:$0xff]
  %v85 = vld [vmem:[%s1 + $0x20] sm:$0xff]
  %v86 = vld [vmem:[%s1 + $0x28] sm:$0xff]
  %88 = vset.pattern.permute.xlu0 0
  %89 = vperm.xlu0 %88, %v81
  %v90 = vpop.permute.xlu0 %89
  %93 = vset.pattern.permute.xlu0 0
  %94 = vperm.xlu0 %93, %v82
  %v95 = vpop.permute.xlu0 %94
  %98 = vset.pattern.permute.xlu0 0
  %99 = vperm.xlu0 %98, %v83
  %v100 = vpop.permute.xlu0 %99
  %103 = vset.pattern.permute.xlu0 0
  %104 = vperm.xlu0 %103, %v84
  %v105 = vpop.permute.xlu0 %104
  %108 = vset.pattern.permute.xlu0 0
  %109 = vperm.xlu0 %108, %v85
  %v110 = vpop.permute.xlu0 %109
  %113 = vset.pattern.permute.xlu0 0
  %114 = vperm.xlu0 %113, %v86
  %v115 = vpop.permute.xlu0 %114
  %v129 = vunpack.c.l.b16 %v15
  %v130 = vunpack.c.h.b16 %v15
  %v131 = vunpack.c.l.b16 %v16
  %v132 = vunpack.c.h.b16 %v16
  %v133 = vunpack.c.l.b16 %v17
  %v134 = vunpack.c.h.b16 %v17
  %v135 = vunpack.c.l.b16 %v18
  %v136 = vunpack.c.h.b16 %v18
  %v137 = vunpack.c.l.b16 %v19
  %v138 = vunpack.c.h.b16 %v19
  %v139 = vunpack.c.l.b16 %v20
  %v140 = vunpack.c.h.b16 %v20
  %v141 = vunpack.c.l.b16 %v21
  %v142 = vunpack.c.h.b16 %v21
  %v143 = vunpack.c.l.b16 %v22
  %v144 = vunpack.c.h.b16 %v22
  %v145 = vunpack.c.l.b16 %v23
  %v146 = vunpack.c.h.b16 %v23
  %v147 = vunpack.c.l.b16 %v24
  %v148 = vunpack.c.h.b16 %v24
  %v149 = vunpack.c.l.b16 %v25
  %v150 = vunpack.c.h.b16 %v25
  %v151 = vunpack.c.l.b16 %v26
  %v152 = vunpack.c.h.b16 %v26
  %v153 = vpack.c.b16 %v133, %v129
  %v154 = vpack.c.b16 %v134, %v130
  %v155 = vpack.c.b16 %v135, %v131
  %v156 = vpack.c.b16 %v136, %v132
  %v157 = vpack.c.b16 %v141, %v137
  %v158 = vpack.c.b16 %v142, %v138
  %v159 = vpack.c.b16 %v143, %v139
  %v160 = vpack.c.b16 %v144, %v140
  %v161 = vpack.c.b16 %v149, %v145
  %v162 = vpack.c.b16 %v150, %v146
  %v163 = vpack.c.b16 %v151, %v147
  %v164 = vpack.c.b16 %v152, %v148
  %v228 = vunpack.c.l.b16 %v27
  %v229 = vunpack.c.l.b16 %v28
  %v230 = vunpack.c.l.b16 %v29
  %v231 = vunpack.c.l.b16 %v30
  %v232 = vunpack.c.l.b16 %v31
  %v233 = vunpack.c.l.b16 %v32
  %v234 = vunpack.c.l.b16 %v33
  %v235 = vunpack.c.l.b16 %v34
  %v236 = vunpack.c.l.b16 %v35
  %v237 = vunpack.c.l.b16 %v36
  %v238 = vunpack.c.l.b16 %v37
  %v239 = vunpack.c.l.b16 %v38
  %v240 = vunpack.c.l.b16 %v39
  %v241 = vunpack.c.l.b16 %v40
  %v242 = vunpack.c.l.b16 %v41
  %v243 = vunpack.c.l.b16 %v42
  %v244 = vunpack.c.l.b16 %v43
  %v245 = vunpack.c.l.b16 %v44
  %v246 = vunpack.c.l.b16 %v45
  %v247 = vunpack.c.l.b16 %v46
  %v248 = vunpack.c.l.b16 %v47
  %v249 = vunpack.c.l.b16 %v48
  %v250 = vunpack.c.l.b16 %v49
  %v251 = vunpack.c.l.b16 %v50
  %v252 = vunpack.c.l.b16 %v51
  %v253 = vunpack.c.l.b16 %v52
  %v254 = vunpack.c.l.b16 %v53
  %v255 = vunpack.c.l.b16 %v54
  %v256 = vunpack.c.l.b16 %v55
  %v257 = vunpack.c.l.b16 %v56
  %v258 = vunpack.c.l.b16 %v57
  %v259 = vunpack.c.l.b16 %v58
  %v260 = vunpack.c.l.b16 %v59
  %v261 = vunpack.c.l.b16 %v60
  %v262 = vunpack.c.l.b16 %v61
  %v263 = vunpack.c.l.b16 %v62
  %v264 = vunpack.c.l.b16 %v63
  %v265 = vunpack.c.l.b16 %v64
  %v266 = vunpack.c.l.b16 %v65
  %v267 = vunpack.c.l.b16 %v66
  %v268 = vunpack.c.l.b16 %v67
  %v269 = vunpack.c.l.b16 %v68
  %v270 = vunpack.c.l.b16 %v69
  %v271 = vunpack.c.l.b16 %v70
  %v272 = vunpack.c.l.b16 %v71
  %v273 = vunpack.c.l.b16 %v72
  %v274 = vunpack.c.l.b16 %v73
  %v275 = vunpack.c.l.b16 %v74
  %v276 = vunpack.c.l.b16 %v75
  %v277 = vunpack.c.l.b16 %v76
  %v278 = vunpack.c.l.b16 %v77
  %v279 = vunpack.c.l.b16 %v78
  %v280 = vunpack.c.l.b16 %v79
  %v281 = vunpack.c.l.b16 %v80
  %v282 = vpack.c.b16 %v229, %v228
  %v283 = vpack.c.b16 %v231, %v230
  %v284 = vpack.c.b16 %v233, %v232
  %v285 = vpack.c.b16 %v235, %v234
  %v286 = vpack.c.b16 %v237, %v236
  %v287 = vpack.c.b16 %v239, %v238
  %v288 = vpack.c.b16 %v241, %v240
  %v289 = vpack.c.b16 %v243, %v242
  %v290 = vpack.c.b16 %v245, %v244
  %v291 = vpack.c.b16 %v247, %v246
  %v292 = vpack.c.b16 %v249, %v248
  %v293 = vpack.c.b16 %v251, %v250
  %v294 = vpack.c.b16 %v253, %v252
  %v295 = vpack.c.b16 %v255, %v254
  %v296 = vpack.c.b16 %v257, %v256
  %v297 = vpack.c.b16 %v259, %v258
  %v298 = vpack.c.b16 %v261, %v260
  %v299 = vpack.c.b16 %v263, %v262
  %v300 = vpack.c.b16 %v265, %v264
  %v301 = vpack.c.b16 %v267, %v266
  %v302 = vpack.c.b16 %v269, %v268
  %v303 = vpack.c.b16 %v271, %v270
  %v304 = vpack.c.b16 %v273, %v272
  %v305 = vpack.c.b16 %v275, %v274
  %v306 = vpack.c.b16 %v277, %v276
  %v307 = vpack.c.b16 %v279, %v278
  %v308 = vpack.c.b16 %v281, %v280
  %vm336 = vcmask 392192
  %v338 = vsel %vm336, %v156, 0
  %v341 = vsel %vm336, %v160, 0
  %v344 = vsel %vm336, %v164, 0
  %346 = vmatpush.bf16.msra.mxu0 %v289
  %347 = vmatpush.bf16.msra.mxu0 %v288
  %348 = vmatpush.bf16.msra.mxu0 %v287
  %349 = vmatpush.bf16.msra.mxu0 %v286
  %350 = vmatpush.bf16.msra.mxu0 %v285
  %351 = vmatpush.bf16.msra.mxu0 %v284
  %352 = vmatpush.bf16.msra.mxu0 %v283
  %353 = vmatpush.bf16.msra.mxu0 %v282
  %354 = vmatmul.bf16.gmra.mxu0 %v153
  %v355 = vpop.f32.mrf.mxu0
  %v356 = vadd.f32 %v90, %v355
  %v357 = vpop.f32.mrf.mxu0
  %v358 = vadd.f32 %v95, %v357
  %359 = vmatmul.bf16.gmra.mxu0 %v157
  %v360 = vpop.f32.mrf.mxu0
  %v361 = vadd.f32 %v100, %v360
  %v362 = vpop.f32.mrf.mxu0
  %v363 = vadd.f32 %v105, %v362
  %364 = vmatmul.bf16.gmra.mxu0 %v161
  %v365 = vpop.f32.mrf.mxu0
  %v366 = vadd.f32 %v110, %v365
  %v367 = vpop.f32.mrf.mxu0
  %v368 = vadd.f32 %v115, %v367
  %369 = vdwg.mxu0
  %370 = vmatpush.bf16.msra.mxu0 %v297
  %371 = vmatpush.bf16.msra.mxu0 %v296
  %372 = vmatpush.bf16.msra.mxu0 %v295
  %373 = vmatpush.bf16.msra.mxu0 %v294
  %374 = vmatpush.bf16.msra.mxu0 %v293
  %375 = vmatpush.bf16.msra.mxu0 %v292
  %376 = vmatpush.bf16.msra.mxu0 %v291
  %377 = vmatpush.bf16.msra.mxu0 %v290
  %378 = vmatmul.bf16.gmra.mxu0 %v154
  %v379 = vpop.f32.mrf.mxu0
  %v380 = vadd.f32 %v356, %v379
  %v381 = vpop.f32.mrf.mxu0
  %v382 = vadd.f32 %v358, %v381
  %383 = vmatmul.bf16.gmra.mxu0 %v158
  %v384 = vpop.f32.mrf.mxu0
  %v385 = vadd.f32 %v361, %v384
  %v386 = vpop.f32.mrf.mxu0
  %v387 = vadd.f32 %v363, %v386
  %388 = vmatmul.bf16.gmra.mxu0 %v162
  %v389 = vpop.f32.mrf.mxu0
  %v390 = vadd.f32 %v366, %v389
  %v391 = vpop.f32.mrf.mxu0
  %v392 = vadd.f32 %v368, %v391
  %393 = vdwg.mxu0
  %394 = vmatpush.bf16.msra.mxu0 %v305
  %395 = vmatpush.bf16.msra.mxu0 %v304
  %396 = vmatpush.bf16.msra.mxu0 %v303
  %397 = vmatpush.bf16.msra.mxu0 %v302
  %398 = vmatpush.bf16.msra.mxu0 %v301
  %399 = vmatpush.bf16.msra.mxu0 %v300
  %400 = vmatpush.bf16.msra.mxu0 %v299
  %401 = vmatpush.bf16.msra.mxu0 %v298
  %402 = vmatmul.bf16.gmra.mxu0 %v155
  %v403 = vpop.f32.mrf.mxu0
  %v404 = vadd.f32 %v380, %v403
  %v405 = vpop.f32.mrf.mxu0
  %v406 = vadd.f32 %v382, %v405
  %407 = vmatmul.bf16.gmra.mxu0 %v159
  %v408 = vpop.f32.mrf.mxu0
  %v409 = vadd.f32 %v385, %v408
  %v410 = vpop.f32.mrf.mxu0
  %v411 = vadd.f32 %v387, %v410
  %412 = vmatmul.bf16.gmra.mxu0 %v163
  %v413 = vpop.f32.mrf.mxu0
  %v414 = vadd.f32 %v390, %v413
  %v415 = vpop.f32.mrf.mxu0
  %v416 = vadd.f32 %v392, %v415
  %417 = vdwg.mxu0
  %418 = vmatpush.bf16.msra.mxu0 0
  %419 = vmatpush.bf16.msra.mxu0 0
  %420 = vmatpush.bf16.msra.mxu0 0
  %421 = vmatpush.bf16.msra.mxu0 0
  %422 = vmatpush.bf16.msra.mxu0 0
  %423 = vmatpush.bf16.msra.mxu0 %v308
  %424 = vmatpush.bf16.msra.mxu0 %v307
  %425 = vmatpush.bf16.msra.mxu0 %v306
  %426 = vmatmul.bf16.gmra.mxu0 %v338
  %v427 = vpop.f32.mrf.mxu0
  %v428 = vadd.f32 %v404, %v427
  %v429 = vpop.f32.mrf.mxu0
  %v430 = vadd.f32 %v406, %v429
  %431 = vmatmul.bf16.gmra.mxu0 %v341
  %v432 = vpop.f32.mrf.mxu0
  %v433 = vadd.f32 %v409, %v432
  %v434 = vpop.f32.mrf.mxu0
  %v435 = vadd.f32 %v411, %v434
  %436 = vmatmul.bf16.gmra.mxu0 %v344
  %v437 = vpop.f32.mrf.mxu0
  %v438 = vadd.f32 %v414, %v437
  %v439 = vpop.f32.mrf.mxu0
  %v440 = vadd.f32 %v416, %v439
  %441 = vdwg.mxu0
  %v442 = vmax.f32 %v428, 0.0
  %v443 = vmax.f32 %v430, 0.0
  %v444 = vmax.f32 %v433, 0.0
  %v445 = vmax.f32 %v435, 0.0
  %v446 = vmax.f32 %v438, 0.0
  %v447 = vmax.f32 %v440, 0.0
  %v448 = vpack.c.bf16 %v442, %v442
  %v449 = vpack.c.bf16 %v443, %v443
  %v450 = vpack.c.bf16 %v444, %v444
  %v451 = vpack.c.bf16 %v445, %v445
  %v452 = vpack.c.bf16 %v446, %v446
  %v453 = vpack.c.bf16 %v447, %v447
  %454 = vst [vmem:[%s3] sm:$0xf] %v448
  %455 = vst [vmem:[%s3 + $0x4] sm:$0xf] %v449
  %456 = vst [vmem:[%s3 + $0x8] sm:$0xf] %v450
  %457 = vst [vmem:[%s3 + $0xc] sm:$0xf] %v451
  %458 = vst [vmem:[%s3 + $0x10] sm:$0xf] %v452
  %459 = vst [vmem:[%s3 + $0x14] sm:$0xf] %v453
  // Predicated region
  $region14: #{alexnet_forward.9} parent=0 // pred_check
    _
  $region15: #{alexnet_forward.9} parent=0 // pred_check_branch
    %461 = sbr.rel (0) target = $region17
  $region16: #{alexnet_forward.9} parent=0 // pred_region
    _
  $region17: #{alexnet_forward.9} parent=0 // pred_fallthru
    _
  // Predicated region
  $region18: #{alexnet_forward.9} parent=0 // pred_check
    _
  $region19: #{alexnet_forward.9} parent=0 // pred_check_branch
    %463 = sbr.rel (0) target = $region21
  $region20: #{alexnet_forward.9} parent=0 // pred_region
    _
  $region21: #{alexnet_forward.9} parent=0 // pred_fallthru
    _

// kernel: alexnet_forward.11
$region0: #{alexnet_forward.11}
  #allocation0 [shape = 'u32[]', space=smem, size = 0x4, offset = 0x4, fixed_abs, tag = 'smem constant byte address 0x4 - core index']
  #allocation1 [shape = 'u32[72,128]{1,0:T(1,128)}', space=vmem, size = 0x9000, scoped, tag = 'internal scratch']
  %s0 = inlined_call_operand.vmem [shape: bf16[2,512], index: 0, kind: input, shape index: {}]
  %s1 = inlined_call_operand.vmem [shape: bf16[512,64], index: 1, kind: input, shape index: {}]
  %s2 = inlined_call_operand.vmem [shape: f32[1,64], index: 2, kind: input, shape index: {}]
  %s3 = inlined_call_operand.vmem [shape: bf16[64,64], index: 3, kind: input, shape index: {}]
  %s4 = inlined_call_operand.vmem [shape: f32[1,64], index: 4, kind: input, shape index: {}]
  %s5 = inlined_call_operand.vmem [shape: bf16[64,10], index: 5, kind: input, shape index: {}]
  %s6 = inlined_call_operand.vmem [shape: f32[1,10], index: 6, kind: input, shape index: {}]
  %s7 = inlined_call_operand.hbm [shape: f32[2,10], index: 7, kind: output, shape index: {}]
  %s8 = sld [smem:[#allocation0]]
  $region38: #{alexnet_forward.11} parent=0
    _
  %s10 = ssub.s32 1, %s8
  %s11 = scalar_select 0, %s10, %s8
  $region1: #{alexnet_forward.11} parent=0
    #allocation2 [shape = 'u8[1024]{0}', space=vmem, size = 0x400, scoped, tag = 'output window, operand 0, single buffered']
    #allocation3 [shape = 's32[1]{0}', space=sflag, size = 0x4, scoped, tag = 'scoped memory for alexnet_forward.11']
    %12 = vsyncpa [#allocation3], 0
    // Predicated region
    $region2: #{alexnet_forward.11} parent=1 // pred_check
      _
    $region3: #{alexnet_forward.11} parent=1 // pred_check_branch
      %14 = sbr.rel (0) target = $region5
    $region4: #{alexnet_forward.11} parent=1 // pred_region
      _
    $region5: #{alexnet_forward.11} parent=1 // pred_fallthru
      _
    // Predicated region
    $region6: #{alexnet_forward.11} parent=1 // pred_check
      _
    $region7: #{alexnet_forward.11} parent=1 // pred_check_branch
      %16 = sbr.rel (0) target = $region9
    $region8: #{alexnet_forward.11} parent=1 // pred_region
      _
    $region9: #{alexnet_forward.11} parent=1 // pred_fallthru
      _
    // Predicated region
    $region10: #{alexnet_forward.11} parent=1 // pred_check
      _
    $region11: #{alexnet_forward.11} parent=1 // pred_check_branch
      %18 = sbr.rel (0) target = $region13
    $region12: #{alexnet_forward.11} parent=1 // pred_region
      _
    $region13: #{alexnet_forward.11} parent=1 // pred_fallthru
      _
    // Predicated region
    $region14: #{alexnet_forward.11} parent=1 // pred_check
      _
    $region15: #{alexnet_forward.11} parent=1 // pred_check_branch
      %20 = sbr.rel (0) target = $region17
    $region16: #{alexnet_forward.11} parent=1 // pred_region
      _
    $region17: #{alexnet_forward.11} parent=1 // pred_fallthru
      _
    // Predicated region
    $region18: #{alexnet_forward.11} parent=1 // pred_check
      _
    $region19: #{alexnet_forward.11} parent=1 // pred_check_branch
      %22 = sbr.rel (0) target = $region21
    $region20: #{alexnet_forward.11} parent=1 // pred_region
      _
    $region21: #{alexnet_forward.11} parent=1 // pred_fallthru
      _
    // Predicated region
    $region22: #{alexnet_forward.11} parent=1 // pred_check
      _
    $region23: #{alexnet_forward.11} parent=1 // pred_check_branch
      %24 = sbr.rel (0) target = $region25
    $region24: #{alexnet_forward.11} parent=1 // pred_region
      _
    $region25: #{alexnet_forward.11} parent=1 // pred_fallthru
      _
    // Predicated region
    $region26: #{alexnet_forward.11} parent=1 // pred_check
      _
    $region27: #{alexnet_forward.11} parent=1 // pred_check_branch
      %26 = sbr.rel (0) target = $region29
    $region28: #{alexnet_forward.11} parent=1 // pred_region
      _
    $region29: #{alexnet_forward.11} parent=1 // pred_fallthru
      _
    %v28 = vld [vmem:[%s0] sm:$0xf]
    %v29 = vld [vmem:[%s1] sm:$0xf]
    %v30 = vld [vmem:[%s1 + $0x4] sm:$0xf]
    %v31 = vld [vmem:[%s1 + $0x8] sm:$0xf]
    %v32 = vld [vmem:[%s1 + $0xc] sm:$0xf]
    %v33 = vld [vmem:[%s1 + $0x10] sm:$0xf]
    %v34 = vld [vmem:[%s1 + $0x14] sm:$0xf]
    %v35 = vld [vmem:[%s1 + $0x18] sm:$0xf]
    %v36 = vld [vmem:[%s1 + $0x1c] sm:$0xf]
    %v37 = vld [vmem:[%s1 + $0x20] sm:$0xf]
    %v38 = vld [vmem:[%s1 + $0x24] sm:$0xf]
    %v39 = vld [vmem:[%s1 + $0x28] sm:$0xf]
    %v40 = vld [vmem:[%s1 + $0x2c] sm:$0xf]
    %v41 = vld [vmem:[%s1 + $0x30] sm:$0xf]
    %v42 = vld [vmem:[%s1 + $0x34] sm:$0xf]
    %v43 = vld [vmem:[%s1 + $0x38] sm:$0xf]
    %v44 = vld [vmem:[%s1 + $0x3c] sm:$0xf]
    %v45 = vld [vmem:[%s1 + $0x40] sm:$0xf]
    %v46 = vld [vmem:[%s1 + $0x44] sm:$0xf]
    %v47 = vld [vmem:[%s1 + $0x48] sm:$0xf]
    %v48 = vld [vmem:[%s1 + $0x4c] sm:$0xf]
    %v49 = vld [vmem:[%s1 + $0x50] sm:$0xf]
    %v50 = vld [vmem:[%s1 + $0x54] sm:$0xf]
    %v51 = vld [vmem:[%s1 + $0x58] sm:$0xf]
    %v52 = vld [vmem:[%s1 + $0x5c] sm:$0xf]
    %v53 = vld [vmem:[%s1 + $0x60] sm:$0xf]
    %v54 = vld [vmem:[%s1 + $0x64] sm:$0xf]
    %v55 = vld [vmem:[%s1 + $0x68] sm:$0xf]
    %v56 = vld [vmem:[%s1 + $0x6c] sm:$0xf]
    %v57 = vld [vmem:[%s1 + $0x70] sm:$0xf]
    %v58 = vld [vmem:[%s1 + $0x74] sm:$0xf]
    %v59 = vld [vmem:[%s1 + $0x78] sm:$0xf]
    %v60 = vld [vmem:[%s1 + $0x7c] sm:$0xf]
    %v61 = vld [vmem:[%s1 + $0x80] sm:$0xf]
    %v62 = vld [vmem:[%s1 + $0x84] sm:$0xf]
    %v63 = vld [vmem:[%s1 + $0x88] sm:$0xf]
    %v64 = vld [vmem:[%s1 + $0x8c] sm:$0xf]
    %v65 = vld [vmem:[%s1 + $0x90] sm:$0xf]
    %v66 = vld [vmem:[%s1 + $0x94] sm:$0xf]
    %v67 = vld [vmem:[%s1 + $0x98] sm:$0xf]
    %v68 = vld [vmem:[%s1 + $0x9c] sm:$0xf]
    %v69 = vld [vmem:[%s1 + $0xa0] sm:$0xf]
    %v70 = vld [vmem:[%s1 + $0xa4] sm:$0xf]
    %v71 = vld [vmem:[%s1 + $0xa8] sm:$0xf]
    %v72 = vld [vmem:[%s1 + $0xac] sm:$0xf]
    %v73 = vld [vmem:[%s1 + $0xb0] sm:$0xf]
    %v74 = vld [vmem:[%s1 + $0xb4] sm:$0xf]
    %v75 = vld [vmem:[%s1 + $0xb8] sm:$0xf]
    %v76 = vld [vmem:[%s1 + $0xbc] sm:$0xf]
    %v77 = vld [vmem:[%s1 + $0xc0] sm:$0xf]
    %v78 = vld [vmem:[%s1 + $0xc4] sm:$0xf]
    %v79 = vld [vmem:[%s1 + $0xc8] sm:$0xf]
    %v80 = vld [vmem:[%s1 + $0xcc] sm:$0xf]
    %v81 = vld [vmem:[%s1 + $0xd0] sm:$0xf]
    %v82 = vld [vmem:[%s1 + $0xd4] sm:$0xf]
    %v83 = vld [vmem:[%s1 + $0xd8] sm:$0xf]
    %v84 = vld [vmem:[%s1 + $0xdc] sm:$0xf]
    %v85 = vld [vmem:[%s1 + $0xe0] sm:$0xf]
    %v86 = vld [vmem:[%s1 + $0xe4] sm:$0xf]
    %v87 = vld [vmem:[%s1 + $0xe8] sm:$0xf]
    %v88 = vld [vmem:[%s1 + $0xec] sm:$0xf]
    %v89 = vld [vmem:[%s1 + $0xf0] sm:$0xf]
    %v90 = vld [vmem:[%s1 + $0xf4] sm:$0xf]
    %v91 = vld [vmem:[%s1 + $0xf8] sm:$0xf]
    %v92 = vld [vmem:[%s1 + $0xfc] sm:$0xf]
    %v93 = vld [vmem:[%s2] sm:$0x1]
    %v95 = vperm.slane %v93, 0
    %98 = vst [vmem:[#allocation1] ss:$9 sm:$0xff] %v28
    %v99 = vld [vmem:[#allocation1] sm:$0xff]
    %v100 = vld [vmem:[#allocation1 + $0x9] sm:$0xff]
    %v101 = vld [vmem:[#allocation1 + $0x12] sm:$0xff]
    %v102 = vld [vmem:[#allocation1 + $0x1b] sm:$0xff]
    %v171 = vunpack.c.l.b16 %v29
    %v172 = vunpack.c.l.b16 %v30
    %v173 = vunpack.c.l.b16 %v31
    %v174 = vunpack.c.l.b16 %v32
    %v175 = vunpack.c.l.b16 %v33
    %v176 = vunpack.c.l.b16 %v34
    %v177 = vunpack.c.l.b16 %v35
    %v178 = vunpack.c.l.b16 %v36
    %v179 = vunpack.c.l.b16 %v37
    %v180 = vunpack.c.l.b16 %v38
    %v181 = vunpack.c.l.b16 %v39
    %v182 = vunpack.c.l.b16 %v40
    %v183 = vunpack.c.l.b16 %v41
    %v184 = vunpack.c.l.b16 %v42
    %v185 = vunpack.c.l.b16 %v43
    %v186 = vunpack.c.l.b16 %v44
    %v187 = vunpack.c.l.b16 %v45
    %v188 = vunpack.c.l.b16 %v46
    %v189 = vunpack.c.l.b16 %v47
    %v190 = vunpack.c.l.b16 %v48
    %v191 = vunpack.c.l.b16 %v49
    %v192 = vunpack.c.l.b16 %v50
    %v193 = vunpack.c.l.b16 %v51
    %v194 = vunpack.c.l.b16 %v52
    %v195 = vunpack.c.l.b16 %v53
    %v196 = vunpack.c.l.b16 %v54
    %v197 = vunpack.c.l.b16 %v55
    %v198 = vunpack.c.l.b16 %v56
    %v199 = vunpack.c.l.b16 %v57
    %v200 = vunpack.c.l.b16 %v58
    %v201 = vunpack.c.l.b16 %v59
    %v202 = vunpack.c.l.b16 %v60
    %v203 = vunpack.c.l.b16 %v61
    %v204 = vunpack.c.l.b16 %v62
    %v205 = vunpack.c.l.b16 %v63
    %v206 = vunpack.c.l.b16 %v64
    %v207 = vunpack.c.l.b16 %v65
    %v208 = vunpack.c.l.b16 %v66
    %v209 = vunpack.c.l.b16 %v67
    %v210 = vunpack.c.l.b16 %v68
    %v211 = vunpack.c.l.b16 %v69
    %v212 = vunpack.c.l.b16 %v70
    %v213 = vunpack.c.l.b16 %v71
    %v214 = vunpack.c.l.b16 %v72
    %v215 = vunpack.c.l.b16 %v73
    %v216 = vunpack.c.l.b16 %v74
    %v217 = vunpack.c.l.b16 %v75
    %v218 = vunpack.c.l.b16 %v76
    %v219 = vunpack.c.l.b16 %v77
    %v220 = vunpack.c.l.b16 %v78
    %v221 = vunpack.c.l.b16 %v79
    %v222 = vunpack.c.l.b16 %v80
    %v223 = vunpack.c.l.b16 %v81
    %v224 = vunpack.c.l.b16 %v82
    %v225 = vunpack.c.l.b16 %v83
    %v226 = vunpack.c.l.b16 %v84
    %v227 = vunpack.c.l.b16 %v85
    %v228 = vunpack.c.l.b16 %v86
    %v229 = vunpack.c.l.b16 %v87
    %v230 = vunpack.c.l.b16 %v88
    %v231 = vunpack.c.l.b16 %v89
    %v232 = vunpack.c.l.b16 %v90
    %v233 = vunpack.c.l.b16 %v91
    %v234 = vunpack.c.l.b16 %v92
    %v235 = vpack.c.b16 %v172, %v171
    %v236 = vpack.c.b16 %v174, %v173
    %v237 = vpack.c.b16 %v176, %v175
    %v238 = vpack.c.b16 %v178, %v177
    %v239 = vpack.c.b16 %v180, %v179
    %v240 = vpack.c.b16 %v182, %v181
    %v241 = vpack.c.b16 %v184, %v183
    %v242 = vpack.c.b16 %v186, %v185
    %v243 = vpack.c.b16 %v188, %v187
    %v244 = vpack.c.b16 %v190, %v189
    %v245 = vpack.c.b16 %v192, %v191
    %v246 = vpack.c.b16 %v194, %v193
    %v247 = vpack.c.b16 %v196, %v195
    %v248 = vpack.c.b16 %v198, %v197
    %v249 = vpack.c.b16 %v200, %v199
    %v250 = vpack.c.b16 %v202, %v201
    %v251 = vpack.c.b16 %v204, %v203
    %v252 = vpack.c.b16 %v206, %v205
    %v253 = vpack.c.b16 %v208, %v207
    %v254 = vpack.c.b16 %v210, %v209
    %v255 = vpack.c.b16 %v212, %v211
    %v256 = vpack.c.b16 %v214, %v213
    %v257 = vpack.c.b16 %v216, %v215
    %v258 = vpack.c.b16 %v218, %v217
    %v259 = vpack.c.b16 %v220, %v219
    %v260 = vpack.c.b16 %v222, %v221
    %v261 = vpack.c.b16 %v224, %v223
    %v262 = vpack.c.b16 %v226, %v225
    %v263 = vpack.c.b16 %v228, %v227
    %v264 = vpack.c.b16 %v230, %v229
    %v265 = vpack.c.b16 %v232, %v231
    %v266 = vpack.c.b16 %v234, %v233
    %299 = vmatpush.bf16.msra.mxu0 %v242
    %300 = vmatpush.bf16.msra.mxu0 %v241
    %301 = vmatpush.bf16.msra.mxu0 %v240
    %302 = vmatpush.bf16.msra.mxu0 %v239
    %303 = vmatpush.bf16.msra.mxu0 %v238
    %304 = vmatpush.bf16.msra.mxu0 %v237
    %305 = vmatpush.bf16.msra.mxu0 %v236
    %306 = vmatpush.bf16.msra.mxu0 %v235
    %307 = vmatmul.bf16.gmra.mxu0 %v99
    %v308 = vpop.f32.mrf.mxu0
    %v309 = vadd.f32 %v95, %v308
    %v310 = vpop.f32.mrf.mxu0
    %311 = vdwg.mxu0
    %312 = vmatpush.bf16.msra.mxu0 %v250
    %313 = vmatpush.bf16.msra.mxu0 %v249
    %314 = vmatpush.bf16.msra.mxu0 %v248
    %315 = vmatpush.bf16.msra.mxu0 %v247
    %316 = vmatpush.bf16.msra.mxu0 %v246
    %317 = vmatpush.bf16.msra.mxu0 %v245
    %318 = vmatpush.bf16.msra.mxu0 %v244
    %319 = vmatpush.bf16.msra.mxu0 %v243
    %320 = vmatmul.bf16.gmra.mxu0 %v100
    %v321 = vpop.f32.mrf.mxu0
    %v322 = vadd.f32 %v309, %v321
    %v323 = vpop.f32.mrf.mxu0
    %324 = vdwg.mxu0
    %325 = vmatpush.bf16.msra.mxu0 %v258
    %326 = vmatpush.bf16.msra.mxu0 %v257
    %327 = vmatpush.bf16.msra.mxu0 %v256
    %328 = vmatpush.bf16.msra.mxu0 %v255
    %329 = vmatpush.bf16.msra.mxu0 %v254
    %330 = vmatpush.bf16.msra.mxu0 %v253
    %331 = vmatpush.bf16.msra.mxu0 %v252
    %332 = vmatpush.bf16.msra.mxu0 %v251
    %333 = vmatmul.bf16.gmra.mxu0 %v101
    %v334 = vpop.f32.mrf.mxu0
    %v335 = vadd.f32 %v322, %v334
    %v336 = vpop.f32.mrf.mxu0
    %337 = vdwg.mxu0
    %338 = vmatpush.bf16.msra.mxu0 %v266
    %339 = vmatpush.bf16.msra.mxu0 %v265
    %340 = vmatpush.bf16.msra.mxu0 %v264
    %341 = vmatpush.bf16.msra.mxu0 %v263
    %342 = vmatpush.bf16.msra.mxu0 %v262
    %343 = vmatpush.bf16.msra.mxu0 %v261
    %344 = vmatpush.bf16.msra.mxu0 %v260
    %345 = vmatpush.bf16.msra.mxu0 %v259
    %346 = vmatmul.bf16.gmra.mxu0 %v102
    %v347 = vpop.f32.mrf.mxu0
    %v348 = vadd.f32 %v335, %v347
    %v349 = vpop.f32.mrf.mxu0
    %350 = vdwg.mxu0
    %v351 = vmax.f32 %v348, 0.0
    %v352 = vpack.c.bf16 %v351, %v351
    %v353 = vld [vmem:[%s3] sm:$0xf]
    %v354 = vld [vmem:[%s3 + $0x4] sm:$0xf]
    %v355 = vld [vmem:[%s3 + $0x8] sm:$0xf]
    %v356 = vld [vmem:[%s3 + $0xc] sm:$0xf]
    %v357 = vld [vmem:[%s3 + $0x10] sm:$0xf]
    %v358 = vld [vmem:[%s3 + $0x14] sm:$0xf]
    %v359 = vld [vmem:[%s3 + $0x18] sm:$0xf]
    %v360 = vld [vmem:[%s3 + $0x1c] sm:$0xf]
    %v361 = vld [vmem:[%s4] sm:$0x1]
    %v363 = vperm.slane %v361, 0
    %v373 = vunpack.c.l.b16 %v353
    %v374 = vunpack.c.l.b16 %v354
    %v375 = vunpack.c.l.b16 %v355
    %v376 = vunpack.c.l.b16 %v356
    %v377 = vunpack.c.l.b16 %v357
    %v378 = vunpack.c.l.b16 %v358
    %v379 = vunpack.c.l.b16 %v359
    %v380 = vunpack.c.l.b16 %v360
    %v381 = vpack.c.b16 %v374, %v373
    %v382 = vpack.c.b16 %v376, %v375
    %v383 = vpack.c.b16 %v378, %v377
    %v384 = vpack.c.b16 %v380, %v379
    %vm389 = vcmask 523264
    %v391 = vsel %vm389, %v352, 0
    %393 = vmatpush.bf16.msra.mxu0 0
    %394 = vmatpush.bf16.msra.mxu0 0
    %395 = vmatpush.bf16.msra.mxu0 0
    %396 = vmatpush.bf16.msra.mxu0 0
    %397 = vmatpush.bf16.msra.mxu0 %v384
    %398 = vmatpush.bf16.msra.mxu0 %v383
    %399 = vmatpush.bf16.msra.mxu0 %v382
    %400 = vmatpush.bf16.msra.mxu0 %v381
    %401 = vmatmul.bf16.gmra.mxu0 %v391
    %v402 = vpop.f32.mrf.mxu0
    %v403 = vadd.f32 %v363, %v402
    %v404 = vpop.f32.mrf.mxu0
    %405 = vdwg.mxu0
    %v406 = vmax.f32 %v403, 0.0
    %v407 = vpack.c.bf16 %v406, %v406
    %v408 = vld [vmem:[%s5] sm:$0xf]
    %v409 = vld [vmem:[%s5 + $0x4] sm:$0xf]
    %v410 = vld [vmem:[%s5 + $0x8] sm:$0xf]
    %v411 = vld [vmem:[%s5 + $0xc] sm:$0xf]
    %v412 = vld [vmem:[%s5 + $0x10] sm:$0xf]
    %v413 = vld [vmem:[%s5 + $0x14] sm:$0xf]
    %v414 = vld [vmem:[%s5 + $0x18] sm:$0xf]
    %v415 = vld [vmem:[%s5 + $0x1c] sm:$0xf]
    %v416 = vld [vmem:[%s6] sm:$0x1]
    %v418 = vperm.slane %v416, 0
    %v428 = vunpack.c.l.b16 %v408
    %v429 = vunpack.c.l.b16 %v409
    %v430 = vunpack.c.l.b16 %v410
    %v431 = vunpack.c.l.b16 %v411
    %v432 = vunpack.c.l.b16 %v412
    %v433 = vunpack.c.l.b16 %v413
    %v434 = vunpack.c.l.b16 %v414
    %v435 = vunpack.c.l.b16 %v415
    %v436 = vpack.c.b16 %v429, %v428
    %v437 = vpack.c.b16 %v431, %v430
    %v438 = vpack.c.b16 %v433, %v432
    %v439 = vpack.c.b16 %v435, %v434
    %v445 = vsel %vm389, %v407, 0
    %447 = vmatpush.bf16.msra.mxu0 0
    %448 = vmatpush.bf16.msra.mxu0 0
    %449 = vmatpush.bf16.msra.mxu0 0
    %450 = vmatpush.bf16.msra.mxu0 0
    %451 = vmatpush.bf16.msra.mxu0 %v439
    %452 = vmatpush.bf16.msra.mxu0 %v438
    %453 = vmatpush.bf16.msra.mxu0 %v437
    %454 = vmatpush.bf16.msra.mxu0 %v436
    %455 = vmatmul.bf16.gmra.mxu0 %v445
    %v456 = vpop.f32.mrf.mxu0
    %v457 = vadd.f32 %v418, %v456
    %v458 = vpop.f32.mrf.mxu0
    %459 = vdwg.mxu0
    %vm460 = vcmask 74752
    %461 = vst.msk [vmem:[#allocation2] sm:$0x3] %vm460, %v457
    // Predicated region
    $region30: #{alexnet_forward.11} parent=1 // pred_check
      _
    $region31: #{alexnet_forward.11} parent=1 // pred_check_branch
      %463 = sbr.rel (0) target = $region33
    $region32: #{alexnet_forward.11} parent=1 // pred_region
      %465 = vsyncadd [#allocation3], 0
      %s467 = sshll.u32 [#allocation2], 4
      %s468 = int_to_ptr.vmem [resolvable:$true] %s467
      %s469 = sshll.u32 %s7, 4
      %s470 = int_to_ptr.hbm [resolvable:$true] %s469
      %472 = dma.vmem_to_hbm [thread:$0]  %s468, 32, %s470, [#allocation3]
    $region33: #{alexnet_forward.11} parent=1 // pred_fallthru
      _
    // Predicated region
    $region34: #{alexnet_forward.11} parent=1 // pred_check
      _
    $region35: #{alexnet_forward.11} parent=1 // pred_check_branch
      %474 = sbr.rel (0) target = $region37
    $region36: #{alexnet_forward.11} parent=1 // pred_region
      %476 = dma.done [#allocation3], 32
    $region37: #{alexnet_forward.11} parent=1 // pred_fallthru
      _
    %477 = vsyncpa [#allocation3], 1

// kernel: alexnet_forward.10
$region0: #{alexnet_forward.10}
  #allocation0 [shape = 'u32[]', space=smem, size = 0x4, offset = 0x4, fixed_abs, tag = 'smem constant byte address 0x4 - core index']
  #allocation1 [shape = 'u32[72,128]{1,0:T(1,128)}', space=vmem, size = 0x9000, scoped, tag = 'internal scratch']
  %s0 = inlined_call_operand.vmem [shape: bf16[32,432], index: 0, kind: input, shape index: {}]
  %s1 = inlined_call_operand.vmem [shape: f32[32,1], index: 1, kind: input, shape index: {}]
  %s2 = inlined_call_operand.vmem [shape: bf16[432,32], index: 2, kind: input, shape index: {}]
  %s3 = inlined_call_operand.vmem [shape: bf16[432,32], index: 3, kind: input, shape index: {}]
  %s4 = inlined_call_operand.vmem [shape: bf16[432,32], index: 4, kind: input, shape index: {}]
  %s5 = inlined_call_operand.vmem [shape: bf16[432,32], index: 5, kind: input, shape index: {}]
  %s6 = inlined_call_operand.vmem [shape: bf16[32,32], index: 6, kind: output, shape index: {}]
  %s7 = sld [smem:[#allocation0]]
  $region34: #{alexnet_forward.10} parent=0
    _
  %s9 = ssub.s32 1, %s7
  %s10 = scalar_select 0, %s9, %s7
  // Predicated region
  $region2: #{alexnet_forward.10} parent=0 // pred_check
    _
  $region3: #{alexnet_forward.10} parent=0 // pred_check_branch
    %12 = sbr.rel (0) target = $region5
  $region4: #{alexnet_forward.10} parent=0 // pred_region
    _
  $region5: #{alexnet_forward.10} parent=0 // pred_fallthru
    _
  // Predicated region
  $region6: #{alexnet_forward.10} parent=0 // pred_check
    _
  $region7: #{alexnet_forward.10} parent=0 // pred_check_branch
    %14 = sbr.rel (0) target = $region9
  $region8: #{alexnet_forward.10} parent=0 // pred_region
    _
  $region9: #{alexnet_forward.10} parent=0 // pred_fallthru
    _
  // Predicated region
  $region10: #{alexnet_forward.10} parent=0 // pred_check
    _
  $region11: #{alexnet_forward.10} parent=0 // pred_check_branch
    %16 = sbr.rel (0) target = $region13
  $region12: #{alexnet_forward.10} parent=0 // pred_region
    _
  $region13: #{alexnet_forward.10} parent=0 // pred_fallthru
    _
  // Predicated region
  $region14: #{alexnet_forward.10} parent=0 // pred_check
    _
  $region15: #{alexnet_forward.10} parent=0 // pred_check_branch
    %18 = sbr.rel (0) target = $region17
  $region16: #{alexnet_forward.10} parent=0 // pred_region
    _
  $region17: #{alexnet_forward.10} parent=0 // pred_fallthru
    _
  // Predicated region
  $region18: #{alexnet_forward.10} parent=0 // pred_check
    _
  $region19: #{alexnet_forward.10} parent=0 // pred_check_branch
    %20 = sbr.rel (0) target = $region21
  $region20: #{alexnet_forward.10} parent=0 // pred_region
    _
  $region21: #{alexnet_forward.10} parent=0 // pred_fallthru
    _
  // Predicated region
  $region22: #{alexnet_forward.10} parent=0 // pred_check
    _
  $region23: #{alexnet_forward.10} parent=0 // pred_check_branch
    %22 = sbr.rel (0) target = $region25
  $region24: #{alexnet_forward.10} parent=0 // pred_region
    _
  $region25: #{alexnet_forward.10} parent=0 // pred_fallthru
    _
  %v24 = vld [vmem:[%s0] sm:$0xff]
  %v25 = vld [vmem:[%s0 + $0x8] sm:$0xff]
  %v26 = vld [vmem:[%s0 + $0x10] sm:$0xff]
  %v27 = vld [vmem:[%s0 + $0x18] sm:$0xff]
  %v28 = vld [vmem:[%s0 + $0x20] sm:$0xff]
  %v29 = vld [vmem:[%s0 + $0x28] sm:$0xff]
  %v30 = vld [vmem:[%s0 + $0x30] sm:$0xff]
  %v31 = vld [vmem:[%s0 + $0x38] sm:$0xff]
  %v32 = vld [vmem:[%s2] sm:$0xf]
  %v33 = vld [vmem:[%s2 + $0x4] sm:$0xf]
  %v34 = vld [vmem:[%s2 + $0x8] sm:$0xf]
  %v35 = vld [vmem:[%s2 + $0xc] sm:$0xf]
  %v36 = vld [vmem:[%s2 + $0x10] sm:$0xf]
  %v37 = vld [vmem:[%s2 + $0x14] sm:$0xf]
  %v38 = vld [vmem:[%s2 + $0x18] sm:$0xf]
  %v39 = vld [vmem:[%s2 + $0x1c] sm:$0xf]
  %v40 = vld [vmem:[%s2 + $0x20] sm:$0xf]
  %v41 = vld [vmem:[%s2 + $0x24] sm:$0xf]
  %v42 = vld [vmem:[%s2 + $0x28] sm:$0xf]
  %v43 = vld [vmem:[%s2 + $0x2c] sm:$0xf]
  %v44 = vld [vmem:[%s2 + $0x30] sm:$0xf]
  %v45 = vld [vmem:[%s2 + $0x34] sm:$0xf]
  %v46 = vld [vmem:[%s2 + $0x38] sm:$0xf]
  %v47 = vld [vmem:[%s2 + $0x3c] sm:$0xf]
  %v48 = vld [vmem:[%s2 + $0x40] sm:$0xf]
  %v49 = vld [vmem:[%s2 + $0x44] sm:$0xf]
  %v50 = vld [vmem:[%s2 + $0x48] sm:$0xf]
  %v51 = vld [vmem:[%s2 + $0x4c] sm:$0xf]
  %v52 = vld [vmem:[%s2 + $0x50] sm:$0xf]
  %v53 = vld [vmem:[%s2 + $0x54] sm:$0xf]
  %v54 = vld [vmem:[%s2 + $0x58] sm:$0xf]
  %v55 = vld [vmem:[%s2 + $0x5c] sm:$0xf]
  %v56 = vld [vmem:[%s2 + $0x60] sm:$0xf]
  %v57 = vld [vmem:[%s2 + $0x64] sm:$0xf]
  %v58 = vld [vmem:[%s2 + $0x68] sm:$0xf]
  %v59 = vld [vmem:[%s2 + $0x6c] sm:$0xf]
  %v60 = vld [vmem:[%s2 + $0x70] sm:$0xf]
  %v61 = vld [vmem:[%s2 + $0x74] sm:$0xf]
  %v62 = vld [vmem:[%s2 + $0x78] sm:$0xf]
  %v63 = vld [vmem:[%s2 + $0x7c] sm:$0xf]
  %v64 = vld [vmem:[%s2 + $0x80] sm:$0xf]
  %v65 = vld [vmem:[%s2 + $0x84] sm:$0xf]
  %v66 = vld [vmem:[%s2 + $0x88] sm:$0xf]
  %v67 = vld [vmem:[%s2 + $0x8c] sm:$0xf]
  %v68 = vld [vmem:[%s2 + $0x90] sm:$0xf]
  %v69 = vld [vmem:[%s2 + $0x94] sm:$0xf]
  %v70 = vld [vmem:[%s2 + $0x98] sm:$0xf]
  %v71 = vld [vmem:[%s2 + $0x9c] sm:$0xf]
  %v72 = vld [vmem:[%s2 + $0xa0] sm:$0xf]
  %v73 = vld [vmem:[%s2 + $0xa4] sm:$0xf]
  %v74 = vld [vmem:[%s2 + $0xa8] sm:$0xf]
  %v75 = vld [vmem:[%s2 + $0xac] sm:$0xf]
  %v76 = vld [vmem:[%s2 + $0xb0] sm:$0xf]
  %v77 = vld [vmem:[%s2 + $0xb4] sm:$0xf]
  %v78 = vld [vmem:[%s2 + $0xb8] sm:$0xf]
  %v79 = vld [vmem:[%s2 + $0xbc] sm:$0xf]
  %v80 = vld [vmem:[%s2 + $0xc0] sm:$0xf]
  %v81 = vld [vmem:[%s2 + $0xc4] sm:$0xf]
  %v82 = vld [vmem:[%s2 + $0xc8] sm:$0xf]
  %v83 = vld [vmem:[%s2 + $0xcc] sm:$0xf]
  %v84 = vld [vmem:[%s2 + $0xd0] sm:$0xf]
  %v85 = vld [vmem:[%s2 + $0xd4] sm:$0xf]
  %v94 = vunpack.c.l.b16 %v24
  %v95 = vunpack.c.h.b16 %v24
  %v96 = vunpack.c.l.b16 %v25
  %v97 = vunpack.c.h.b16 %v25
  %v98 = vunpack.c.l.b16 %v26
  %v99 = vunpack.c.h.b16 %v26
  %v100 = vunpack.c.l.b16 %v27
  %v101 = vunpack.c.h.b16 %v27
  %v102 = vunpack.c.l.b16 %v28
  %v103 = vunpack.c.h.b16 %v28
  %v104 = vunpack.c.l.b16 %v29
  %v105 = vunpack.c.h.b16 %v29
  %v106 = vunpack.c.l.b16 %v30
  %v107 = vunpack.c.h.b16 %v30
  %v108 = vunpack.c.l.b16 %v31
  %v109 = vunpack.c.h.b16 %v31
  %v110 = vpack.c.b16 %v98, %v94
  %v111 = vpack.c.b16 %v99, %v95
  %v112 = vpack.c.b16 %v100, %v96
  %v113 = vpack.c.b16 %v101, %v97
  %v114 = vpack.c.b16 %v106, %v102
  %v115 = vpack.c.b16 %v107, %v103
  %v116 = vpack.c.b16 %v108, %v104
  %v117 = vpack.c.b16 %v109, %v105
  %v178 = vunpack.c.l.b16 %v32
  %v179 = vunpack.c.l.b16 %v33
  %v180 = vunpack.c.l.b16 %v34
  %v181 = vunpack.c.l.b16 %v35
  %v182 = vunpack.c.l.b16 %v36
  %v183 = vunpack.c.l.b16 %v37
  %v184 = vunpack.c.l.b16 %v38
  %v185 = vunpack.c.l.b16 %v39
  %v186 = vunpack.c.l.b16 %v40
  %v187 = vunpack.c.l.b16 %v41
  %v188 = vunpack.c.l.b16 %v42
  %v189 = vunpack.c.l.b16 %v43
  %v190 = vunpack.c.l.b16 %v44
  %v191 = vunpack.c.l.b16 %v45
  %v192 = vunpack.c.l.b16 %v46
  %v193 = vunpack.c.l.b16 %v47
  %v194 = vunpack.c.l.b16 %v48
  %v195 = vunpack.c.l.b16 %v49
  %v196 = vunpack.c.l.b16 %v50
  %v197 = vunpack.c.l.b16 %v51
  %v198 = vunpack.c.l.b16 %v52
  %v199 = vunpack.c.l.b16 %v53
  %v200 = vunpack.c.l.b16 %v54
  %v201 = vunpack.c.l.b16 %v55
  %v202 = vunpack.c.l.b16 %v56
  %v203 = vunpack.c.l.b16 %v57
  %v204 = vunpack.c.l.b16 %v58
  %v205 = vunpack.c.l.b16 %v59
  %v206 = vunpack.c.l.b16 %v60
  %v207 = vunpack.c.l.b16 %v61
  %v208 = vunpack.c.l.b16 %v62
  %v209 = vunpack.c.l.b16 %v63
  %v210 = vunpack.c.l.b16 %v64
  %v211 = vunpack.c.l.b16 %v65
  %v212 = vunpack.c.l.b16 %v66
  %v213 = vunpack.c.l.b16 %v67
  %v214 = vunpack.c.l.b16 %v68
  %v215 = vunpack.c.l.b16 %v69
  %v216 = vunpack.c.l.b16 %v70
  %v217 = vunpack.c.l.b16 %v71
  %v218 = vunpack.c.l.b16 %v72
  %v219 = vunpack.c.l.b16 %v73
  %v220 = vunpack.c.l.b16 %v74
  %v221 = vunpack.c.l.b16 %v75
  %v222 = vunpack.c.l.b16 %v76
  %v223 = vunpack.c.l.b16 %v77
  %v224 = vunpack.c.l.b16 %v78
  %v225 = vunpack.c.l.b16 %v79
  %v226 = vunpack.c.l.b16 %v80
  %v227 = vunpack.c.l.b16 %v81
  %v228 = vunpack.c.l.b16 %v82
  %v229 = vunpack.c.l.b16 %v83
  %v230 = vunpack.c.l.b16 %v84
  %v231 = vunpack.c.l.b16 %v85
  %v232 = vpack.c.b16 %v179, %v178
  %v233 = vpack.c.b16 %v181, %v180
  %v234 = vpack.c.b16 %v183, %v182
  %v235 = vpack.c.b16 %v185, %v184
  %v236 = vpack.c.b16 %v187, %v186
  %v237 = vpack.c.b16 %v189, %v188
  %v238 = vpack.c.b16 %v191, %v190
  %v239 = vpack.c.b16 %v193, %v192
  %v240 = vpack.c.b16 %v195, %v194
  %v241 = vpack.c.b16 %v197, %v196
  %v242 = vpack.c.b16 %v199, %v198
  %v243 = vpack.c.b16 %v201, %v200
  %v244 = vpack.c.b16 %v203, %v202
  %v245 = vpack.c.b16 %v205, %v204
  %v246 = vpack.c.b16 %v207, %v206
  %v247 = vpack.c.b16 %v209, %v208
  %v248 = vpack.c.b16 %v211, %v210
  %v249 = vpack.c.b16 %v213, %v212
  %v250 = vpack.c.b16 %v215, %v214
  %v251 = vpack.c.b16 %v217, %v216
  %v252 = vpack.c.b16 %v219, %v218
  %v253 = vpack.c.b16 %v221, %v220
  %v254 = vpack.c.b16 %v223, %v222
  %v255 = vpack.c.b16 %v225, %v224
  %v256 = vpack.c.b16 %v227, %v226
  %v257 = vpack.c.b16 %v229, %v228
  %v258 = vpack.c.b16 %v231, %v230
  %vm286 = vcmask 392192
  %v288 = vsel %vm286, %v113, 0
  %v291 = vsel %vm286, %v117, 0
  %293 = vmatpush.bf16.msra.mxu0 %v239
  %294 = vmatpush.bf16.msra.mxu0 %v238
  %295 = vmatpush.bf16.msra.mxu0 %v237
  %296 = vmatpush.bf16.msra.mxu0 %v236
  %297 = vmatpush.bf16.msra.mxu0 %v235
  %298 = vmatpush.bf16.msra.mxu0 %v234
  %299 = vmatpush.bf16.msra.mxu0 %v233
  %300 = vmatpush.bf16.msra.mxu0 %v232
  %301 = vmatmul.bf16.gmra.mxu0 %v110
  %v302 = vpop.f32.mrf.mxu0
  %v303 = vadd.f32 0.0, %v302
  %v304 = vpop.f32.mrf.mxu0
  %v305 = vadd.f32 0.0, %v304
  %306 = vmatmul.bf16.gmra.mxu0 %v114
  %v307 = vpop.f32.mrf.mxu0
  %v308 = vadd.f32 0.0, %v307
  %v309 = vpop.f32.mrf.mxu0
  %v310 = vadd.f32 0.0, %v309
  %311 = vdwg.mxu0
  %312 = vmatpush.bf16.msra.mxu0 %v247
  %313 = vmatpush.bf16.msra.mxu0 %v246
  %314 = vmatpush.bf16.msra.mxu0 %v245
  %315 = vmatpush.bf16.msra.mxu0 %v244
  %316 = vmatpush.bf16.msra.mxu0 %v243
  %317 = vmatpush.bf16.msra.mxu0 %v242
  %318 = vmatpush.bf16.msra.mxu0 %v241
  %319 = vmatpush.bf16.msra.mxu0 %v240
  %320 = vmatmul.bf16.gmra.mxu0 %v111
  %v321 = vpop.f32.mrf.mxu0
  %v322 = vadd.f32 %v303, %v321
  %v323 = vpop.f32.mrf.mxu0
  %v324 = vadd.f32 %v305, %v323
  %325 = vmatmul.bf16.gmra.mxu0 %v115
  %v326 = vpop.f32.mrf.mxu0
  %v327 = vadd.f32 %v308, %v326
  %v328 = vpop.f32.mrf.mxu0
  %v329 = vadd.f32 %v310, %v328
  %330 = vdwg.mxu0
  %331 = vmatpush.bf16.msra.mxu0 %v255
  %332 = vmatpush.bf16.msra.mxu0 %v254
  %333 = vmatpush.bf16.msra.mxu0 %v253
  %334 = vmatpush.bf16.msra.mxu0 %v252
  %335 = vmatpush.bf16.msra.mxu0 %v251
  %336 = vmatpush.bf16.msra.mxu0 %v250
  %337 = vmatpush.bf16.msra.mxu0 %v249
  %338 = vmatpush.bf16.msra.mxu0 %v248
  %339 = vmatmul.bf16.gmra.mxu0 %v112
  %v340 = vpop.f32.mrf.mxu0
  %v341 = vadd.f32 %v322, %v340
  %v342 = vpop.f32.mrf.mxu0
  %v343 = vadd.f32 %v324, %v342
  %344 = vmatmul.bf16.gmra.mxu0 %v116
  %v345 = vpop.f32.mrf.mxu0
  %v346 = vadd.f32 %v327, %v345
  %v347 = vpop.f32.mrf.mxu0
  %v348 = vadd.f32 %v329, %v347
  %349 = vdwg.mxu0
  %350 = vmatpush.bf16.msra.mxu0 0
  %351 = vmatpush.bf16.msra.mxu0 0
  %352 = vmatpush.bf16.msra.mxu0 0
  %353 = vmatpush.bf16.msra.mxu0 0
  %354 = vmatpush.bf16.msra.mxu0 0
  %355 = vmatpush.bf16.msra.mxu0 %v258
  %356 = vmatpush.bf16.msra.mxu0 %v257
  %357 = vmatpush.bf16.msra.mxu0 %v256
  %358 = vmatmul.bf16.gmra.mxu0 %v288
  %v359 = vpop.f32.mrf.mxu0
  %v360 = vadd.f32 %v341, %v359
  %v361 = vpop.f32.mrf.mxu0
  %v362 = vadd.f32 %v343, %v361
  %363 = vmatmul.bf16.gmra.mxu0 %v291
  %v364 = vpop.f32.mrf.mxu0
  %v365 = vadd.f32 %v346, %v364
  %v366 = vpop.f32.mrf.mxu0
  %v367 = vadd.f32 %v348, %v366
  %368 = vdwg.mxu0
  %v369 = vld [vmem:[%s3] sm:$0xf]
  %v370 = vld [vmem:[%s3 + $0x4] sm:$0xf]
  %v371 = vld [vmem:[%s3 + $0x8] sm:$0xf]
  %v372 = vld [vmem:[%s3 + $0xc] sm:$0xf]
  %v373 = vld [vmem:[%s3 + $0x10] sm:$0xf]
  %v374 = vld [vmem:[%s3 + $0x14] sm:$0xf]
  %v375 = vld [vmem:[%s3 + $0x18] sm:$0xf]
  %v376 = vld [vmem:[%s3 + $0x1c] sm:$0xf]
  %v377 = vld [vmem:[%s3 + $0x20] sm:$0xf]
  %v378 = vld [vmem:[%s3 + $0x24] sm:$0xf]
  %v379 = vld [vmem:[%s3 + $0x28] sm:$0xf]
  %v380 = vld [vmem:[%s3 + $0x2c] sm:$0xf]
  %v381 = vld [vmem:[%s3 + $0x30] sm:$0xf]
  %v382 = vld [vmem:[%s3 + $0x34] sm:$0xf]
  %v383 = vld [vmem:[%s3 + $0x38] sm:$0xf]
  %v384 = vld [vmem:[%s3 + $0x3c] sm:$0xf]
  %v385 = vld [vmem:[%s3 + $0x40] sm:$0xf]
  %v386 = vld [vmem:[%s3 + $0x44] sm:$0xf]
  %v387 = vld [vmem:[%s3 + $0x48] sm:$0xf]
  %v388 = vld [vmem:[%s3 + $0x4c] sm:$0xf]
  %v389 = vld [vmem:[%s3 + $0x50] sm:$0xf]
  %v390 = vld [vmem:[%s3 + $0x54] sm:$0xf]
  %v391 = vld [vmem:[%s3 + $0x58] sm:$0xf]
  %v392 = vld [vmem:[%s3 + $0x5c] sm:$0xf]
  %v393 = vld [vmem:[%s3 + $0x60] sm:$0xf]
  %v394 = vld [vmem:[%s3 + $0x64] sm:$0xf]
  %v395 = vld [vmem:[%s3 + $0x68] sm:$0xf]
  %v396 = vld [vmem:[%s3 + $0x6c] sm:$0xf]
  %v397 = vld [vmem:[%s3 + $0x70] sm:$0xf]
  %v398 = vld [vmem:[%s3 + $0x74] sm:$0xf]
  %v399 = vld [vmem:[%s3 + $0x78] sm:$0xf]
  %v400 = vld [vmem:[%s3 + $0x7c] sm:$0xf]
  %v401 = vld [vmem:[%s3 + $0x80] sm:$0xf]
  %v402 = vld [vmem:[%s3 + $0x84] sm:$0xf]
  %v403 = vld [vmem:[%s3 + $0x88] sm:$0xf]
  %v404 = vld [vmem:[%s3 + $0x8c] sm:$0xf]
  %v405 = vld [vmem:[%s3 + $0x90] sm:$0xf]
  %v406 = vld [vmem:[%s3 + $0x94] sm:$0xf]
  %v407 = vld [vmem:[%s3 + $0x98] sm:$0xf]
  %v408 = vld [vmem:[%s3 + $0x9c] sm:$0xf]
  %v409 = vld [vmem:[%s3 + $0xa0] sm:$0xf]
  %v410 = vld [vmem:[%s3 + $0xa4] sm:$0xf]
  %v411 = vld [vmem:[%s3 + $0xa8] sm:$0xf]
  %v412 = vld [vmem:[%s3 + $0xac] sm:$0xf]
  %v413 = vld [vmem:[%s3 + $0xb0] sm:$0xf]
  %v414 = vld [vmem:[%s3 + $0xb4] sm:$0xf]
  %v415 = vld [vmem:[%s3 + $0xb8] sm:$0xf]
  %v416 = vld [vmem:[%s3 + $0xbc] sm:$0xf]
  %v417 = vld [vmem:[%s3 + $0xc0] sm:$0xf]
  %v418 = vld [vmem:[%s3 + $0xc4] sm:$0xf]
  %v419 = vld [vmem:[%s3 + $0xc8] sm:$0xf]
  %v420 = vld [vmem:[%s3 + $0xcc] sm:$0xf]
  %v421 = vld [vmem:[%s3 + $0xd0] sm:$0xf]
  %v422 = vld [vmem:[%s3 + $0xd4] sm:$0xf]
  %v477 = vunpack.c.l.b16 %v369
  %v478 = vunpack.c.l.b16 %v370
  %v479 = vunpack.c.l.b16 %v371
  %v480 = vunpack.c.l.b16 %v372
  %v481 = vunpack.c.l.b16 %v373
  %v482 = vunpack.c.l.b16 %v374
  %v483 = vunpack.c.l.b16 %v375
  %v484 = vunpack.c.l.b16 %v376
  %v485 = vunpack.c.l.b16 %v377
  %v486 = vunpack.c.l.b16 %v378
  %v487 = vunpack.c.l.b16 %v379
  %v488 = vunpack.c.l.b16 %v380
  %v489 = vunpack.c.l.b16 %v381
  %v490 = vunpack.c.l.b16 %v382
  %v491 = vunpack.c.l.b16 %v383
  %v492 = vunpack.c.l.b16 %v384
  %v493 = vunpack.c.l.b16 %v385
  %v494 = vunpack.c.l.b16 %v386
  %v495 = vunpack.c.l.b16 %v387
  %v496 = vunpack.c.l.b16 %v388
  %v497 = vunpack.c.l.b16 %v389
  %v498 = vunpack.c.l.b16 %v390
  %v499 = vunpack.c.l.b16 %v391
  %v500 = vunpack.c.l.b16 %v392
  %v501 = vunpack.c.l.b16 %v393
  %v502 = vunpack.c.l.b16 %v394
  %v503 = vunpack.c.l.b16 %v395
  %v504 = vunpack.c.l.b16 %v396
  %v505 = vunpack.c.l.b16 %v397
  %v506 = vunpack.c.l.b16 %v398
  %v507 = vunpack.c.l.b16 %v399
  %v508 = vunpack.c.l.b16 %v400
  %v509 = vunpack.c.l.b16 %v401
  %v510 = vunpack.c.l.b16 %v402
  %v511 = vunpack.c.l.b16 %v403
  %v512 = vunpack.c.l.b16 %v404
  %v513 = vunpack.c.l.b16 %v405
  %v514 = vunpack.c.l.b16 %v406
  %v515 = vunpack.c.l.b16 %v407
  %v516 = vunpack.c.l.b16 %v408
  %v517 = vunpack.c.l.b16 %v409
  %v518 = vunpack.c.l.b16 %v410
  %v519 = vunpack.c.l.b16 %v411
  %v520 = vunpack.c.l.b16 %v412
  %v521 = vunpack.c.l.b16 %v413
  %v522 = vunpack.c.l.b16 %v414
  %v523 = vunpack.c.l.b16 %v415
  %v524 = vunpack.c.l.b16 %v416
  %v525 = vunpack.c.l.b16 %v417
  %v526 = vunpack.c.l.b16 %v418
  %v527 = vunpack.c.l.b16 %v419
  %v528 = vunpack.c.l.b16 %v420
  %v529 = vunpack.c.l.b16 %v421
  %v530 = vunpack.c.l.b16 %v422
  %v531 = vpack.c.b16 %v478, %v477
  %v532 = vpack.c.b16 %v480, %v479
  %v533 = vpack.c.b16 %v482, %v481
  %v534 = vpack.c.b16 %v484, %v483
  %v535 = vpack.c.b16 %v486, %v485
  %v536 = vpack.c.b16 %v488, %v487
  %v537 = vpack.c.b16 %v490, %v489
  %v538 = vpack.c.b16 %v492, %v491
  %v539 = vpack.c.b16 %v494, %v493
  %v540 = vpack.c.b16 %v496, %v495
  %v541 = vpack.c.b16 %v498, %v497
  %v542 = vpack.c.b16 %v500, %v499
  %v543 = vpack.c.b16 %v502, %v501
  %v544 = vpack.c.b16 %v504, %v503
  %v545 = vpack.c.b16 %v506, %v505
  %v546 = vpack.c.b16 %v508, %v507
  %v547 = vpack.c.b16 %v510, %v509
  %v548 = vpack.c.b16 %v512, %v511
  %v549 = vpack.c.b16 %v514, %v513
  %v550 = vpack.c.b16 %v516, %v515
  %v551 = vpack.c.b16 %v518, %v517
  %v552 = vpack.c.b16 %v520, %v519
  %v553 = vpack.c.b16 %v522, %v521
  %v554 = vpack.c.b16 %v524, %v523
  %v555 = vpack.c.b16 %v526, %v525
  %v556 = vpack.c.b16 %v528, %v527
  %v557 = vpack.c.b16 %v530, %v529
  %585 = vmatpush.bf16.msra.mxu0 %v538
  %586 = vmatpush.bf16.msra.mxu0 %v537
  %587 = vmatpush.bf16.msra.mxu0 %v536
  %588 = vmatpush.bf16.msra.mxu0 %v535
  %589 = vmatpush.bf16.msra.mxu0 %v534
  %590 = vmatpush.bf16.msra.mxu0 %v533
  %591 = vmatpush.bf16.msra.mxu0 %v532
  %592 = vmatpush.bf16.msra.mxu0 %v531
  %593 = vmatmul.bf16.gmra.mxu0 %v110
  %v594 = vpop.f32.mrf.mxu0
  %v595 = vadd.f32 0.0, %v594
  %v596 = vpop.f32.mrf.mxu0
  %v597 = vadd.f32 0.0, %v596
  %598 = vmatmul.bf16.gmra.mxu0 %v114
  %v599 = vpop.f32.mrf.mxu0
  %v600 = vadd.f32 0.0, %v599
  %v601 = vpop.f32.mrf.mxu0
  %v602 = vadd.f32 0.0, %v601
  %603 = vdwg.mxu0
  %604 = vmatpush.bf16.msra.mxu0 %v546
  %605 = vmatpush.bf16.msra.mxu0 %v545
  %606 = vmatpush.bf16.msra.mxu0 %v544
  %607 = vmatpush.bf16.msra.mxu0 %v543
  %608 = vmatpush.bf16.msra.mxu0 %v542
  %609 = vmatpush.bf16.msra.mxu0 %v541
  %610 = vmatpush.bf16.msra.mxu0 %v540
  %611 = vmatpush.bf16.msra.mxu0 %v539
  %612 = vmatmul.bf16.gmra.mxu0 %v111
  %v613 = vpop.f32.mrf.mxu0
  %v614 = vadd.f32 %v595, %v613
  %v615 = vpop.f32.mrf.mxu0
  %v616 = vadd.f32 %v597, %v615
  %617 = vmatmul.bf16.gmra.mxu0 %v115
  %v618 = vpop.f32.mrf.mxu0
  %v619 = vadd.f32 %v600, %v618
  %v620 = vpop.f32.mrf.mxu0
  %v621 = vadd.f32 %v602, %v620
  %622 = vdwg.mxu0
  %623 = vmatpush.bf16.msra.mxu0 %v554
  %624 = vmatpush.bf16.msra.mxu0 %v553
  %625 = vmatpush.bf16.msra.mxu0 %v552
  %626 = vmatpush.bf16.msra.mxu0 %v551
  %627 = vmatpush.bf16.msra.mxu0 %v550
  %628 = vmatpush.bf16.msra.mxu0 %v549
  %629 = vmatpush.bf16.msra.mxu0 %v548
  %630 = vmatpush.bf16.msra.mxu0 %v547
  %631 = vmatmul.bf16.gmra.mxu0 %v112
  %v632 = vpop.f32.mrf.mxu0
  %v633 = vadd.f32 %v614, %v632
  %v634 = vpop.f32.mrf.mxu0
  %v635 = vadd.f32 %v616, %v634
  %636 = vmatmul.bf16.gmra.mxu0 %v116
  %v637 = vpop.f32.mrf.mxu0
  %v638 = vadd.f32 %v619, %v637
  %v639 = vpop.f32.mrf.mxu0
  %v640 = vadd.f32 %v621, %v639
  %641 = vdwg.mxu0
  %642 = vmatpush.bf16.msra.mxu0 0
  %643 = vmatpush.bf16.msra.mxu0 0
  %644 = vmatpush.bf16.msra.mxu0 0
  %645 = vmatpush.bf16.msra.mxu0 0
  %646 = vmatpush.bf16.msra.mxu0 0
  %647 = vmatpush.bf16.msra.mxu0 %v557
  %648 = vmatpush.bf16.msra.mxu0 %v556
  %649 = vmatpush.bf16.msra.mxu0 %v555
  %650 = vmatmul.bf16.gmra.mxu0 %v288
  %v651 = vpop.f32.mrf.mxu0
  %v652 = vadd.f32 %v633, %v651
  %v653 = vpop.f32.mrf.mxu0
  %v654 = vadd.f32 %v635, %v653
  %655 = vmatmul.bf16.gmra.mxu0 %v291
  %v656 = vpop.f32.mrf.mxu0
  %v657 = vadd.f32 %v638, %v656
  %v658 = vpop.f32.mrf.mxu0
  %v659 = vadd.f32 %v640, %v658
  %660 = vdwg.mxu0
  %v661 = vmax.f32 %v360, %v652
  %v662 = vmax.f32 %v362, %v654
  %v663 = vmax.f32 %v365, %v657
  %v664 = vmax.f32 %v367, %v659
  %v665 = vld [vmem:[%s4] sm:$0xf]
  %v666 = vld [vmem:[%s4 + $0x4] sm:$0xf]
  %v667 = vld [vmem:[%s4 + $0x8] sm:$0xf]
  %v668 = vld [vmem:[%s4 + $0xc] sm:$0xf]
  %v669 = vld [vmem:[%s4 + $0x10] sm:$0xf]
  %v670 = vld [vmem:[%s4 + $0x14] sm:$0xf]
  %v671 = vld [vmem:[%s4 + $0x18] sm:$0xf]
  %v672 = vld [vmem:[%s4 + $0x1c] sm:$0xf]
  %v673 = vld [vmem:[%s4 + $0x20] sm:$0xf]
  %v674 = vld [vmem:[%s4 + $0x24] sm:$0xf]
  %v675 = vld [vmem:[%s4 + $0x28] sm:$0xf]
  %v676 = vld [vmem:[%s4 + $0x2c] sm:$0xf]
  %v677 = vld [vmem:[%s4 + $0x30] sm:$0xf]
  %v678 = vld [vmem:[%s4 + $0x34] sm:$0xf]
  %v679 = vld [vmem:[%s4 + $0x38] sm:$0xf]
  %v680 = vld [vmem:[%s4 + $0x3c] sm:$0xf]
  %v681 = vld [vmem:[%s4 + $0x40] sm:$0xf]
  %v682 = vld [vmem:[%s4 + $0x44] sm:$0xf]
  %v683 = vld [vmem:[%s4 + $0x48] sm:$0xf]
  %v684 = vld [vmem:[%s4 + $0x4c] sm:$0xf]
  %v685 = vld [vmem:[%s4 + $0x50] sm:$0xf]
  %v686 = vld [vmem:[%s4 + $0x54] sm:$0xf]
  %v687 = vld [vmem:[%s4 + $0x58] sm:$0xf]
  %v688 = vld [vmem:[%s4 + $0x5c] sm:$0xf]
  %v689 = vld [vmem:[%s4 + $0x60] sm:$0xf]
  %v690 = vld [vmem:[%s4 + $0x64] sm:$0xf]
  %v691 = vld [vmem:[%s4 + $0x68] sm:$0xf]
  %v692 = vld [vmem:[%s4 + $0x6c] sm:$0xf]
  %v693 = vld [vmem:[%s4 + $0x70] sm:$0xf]
  %v694 = vld [vmem:[%s4 + $0x74] sm:$0xf]
  %v695 = vld [vmem:[%s4 + $0x78] sm:$0xf]
  %v696 = vld [vmem:[%s4 + $0x7c] sm:$0xf]
  %v697 = vld [vmem:[%s4 + $0x80] sm:$0xf]
  %v698 = vld [vmem:[%s4 + $0x84] sm:$0xf]
  %v699 = vld [vmem:[%s4 + $0x88] sm:$0xf]
  %v700 = vld [vmem:[%s4 + $0x8c] sm:$0xf]
  %v701 = vld [vmem:[%s4 + $0x90] sm:$0xf]
  %v702 = vld [vmem:[%s4 + $0x94] sm:$0xf]
  %v703 = vld [vmem:[%s4 + $0x98] sm:$0xf]
  %v704 = vld [vmem:[%s4 + $0x9c] sm:$0xf]
  %v705 = vld [vmem:[%s4 + $0xa0] sm:$0xf]
  %v706 = vld [vmem:[%s4 + $0xa4] sm:$0xf]
  %v707 = vld [vmem:[%s4 + $0xa8] sm:$0xf]
  %v708 = vld [vmem:[%s4 + $0xac] sm:$0xf]
  %v709 = vld [vmem:[%s4 + $0xb0] sm:$0xf]
  %v710 = vld [vmem:[%s4 + $0xb4] sm:$0xf]
  %v711 = vld [vmem:[%s4 + $0xb8] sm:$0xf]
  %v712 = vld [vmem:[%s4 + $0xbc] sm:$0xf]
  %v713 = vld [vmem:[%s4 + $0xc0] sm:$0xf]
  %v714 = vld [vmem:[%s4 + $0xc4] sm:$0xf]
  %v715 = vld [vmem:[%s4 + $0xc8] sm:$0xf]
  %v716 = vld [vmem:[%s4 + $0xcc] sm:$0xf]
  %v717 = vld [vmem:[%s4 + $0xd0] sm:$0xf]
  %v718 = vld [vmem:[%s4 + $0xd4] sm:$0xf]
  %v773 = vunpack.c.l.b16 %v665
  %v774 = vunpack.c.l.b16 %v666
  %v775 = vunpack.c.l.b16 %v667
  %v776 = vunpack.c.l.b16 %v668
  %v777 = vunpack.c.l.b16 %v669
  %v778 = vunpack.c.l.b16 %v670
  %v779 = vunpack.c.l.b16 %v671
  %v780 = vunpack.c.l.b16 %v672
  %v781 = vunpack.c.l.b16 %v673
  %v782 = vunpack.c.l.b16 %v674
  %v783 = vunpack.c.l.b16 %v675
  %v784 = vunpack.c.l.b16 %v676
  %v785 = vunpack.c.l.b16 %v677
  %v786 = vunpack.c.l.b16 %v678
  %v787 = vunpack.c.l.b16 %v679
  %v788 = vunpack.c.l.b16 %v680
  %v789 = vunpack.c.l.b16 %v681
  %v790 = vunpack.c.l.b16 %v682
  %v791 = vunpack.c.l.b16 %v683
  %v792 = vunpack.c.l.b16 %v684
  %v793 = vunpack.c.l.b16 %v685
  %v794 = vunpack.c.l.b16 %v686
  %v795 = vunpack.c.l.b16 %v687
  %v796 = vunpack.c.l.b16 %v688
  %v797 = vunpack.c.l.b16 %v689
  %v798 = vunpack.c.l.b16 %v690
  %v799 = vunpack.c.l.b16 %v691
  %v800 = vunpack.c.l.b16 %v692
  %v801 = vunpack.c.l.b16 %v693
  %v802 = vunpack.c.l.b16 %v694
  %v803 = vunpack.c.l.b16 %v695
  %v804 = vunpack.c.l.b16 %v696
  %v805 = vunpack.c.l.b16 %v697
  %v806 = vunpack.c.l.b16 %v698
  %v807 = vunpack.c.l.b16 %v699
  %v808 = vunpack.c.l.b16 %v700
  %v809 = vunpack.c.l.b16 %v701
  %v810 = vunpack.c.l.b16 %v702
  %v811 = vunpack.c.l.b16 %v703
  %v812 = vunpack.c.l.b16 %v704
  %v813 = vunpack.c.l.b16 %v705
  %v814 = vunpack.c.l.b16 %v706
  %v815 = vunpack.c.l.b16 %v707
  %v816 = vunpack.c.l.b16 %v708
  %v817 = vunpack.c.l.b16 %v709
  %v818 = vunpack.c.l.b16 %v710
  %v819 = vunpack.c.l.b16 %v711
  %v820 = vunpack.c.l.b16 %v712
  %v821 = vunpack.c.l.b16 %v713
  %v822 = vunpack.c.l.b16 %v714
  %v823 = vunpack.c.l.b16 %v715
  %v824 = vunpack.c.l.b16 %v716
  %v825 = vunpack.c.l.b16 %v717
  %v826 = vunpack.c.l.b16 %v718
  %v827 = vpack.c.b16 %v774, %v773
  %v828 = vpack.c.b16 %v776, %v775
  %v829 = vpack.c.b16 %v778, %v777
  %v830 = vpack.c.b16 %v780, %v779
  %v831 = vpack.c.b16 %v782, %v781
  %v832 = vpack.c.b16 %v784, %v783
  %v833 = vpack.c.b16 %v786, %v785
  %v834 = vpack.c.b16 %v788, %v787
  %v835 = vpack.c.b16 %v790, %v789
  %v836 = vpack.c.b16 %v792, %v791
  %v837 = vpack.c.b16 %v794, %v793
  %v838 = vpack.c.b16 %v796, %v795
  %v839 = vpack.c.b16 %v798, %v797
  %v840 = vpack.c.b16 %v800, %v799
  %v841 = vpack.c.b16 %v802, %v801
  %v842 = vpack.c.b16 %v804, %v803
  %v843 = vpack.c.b16 %v806, %v805
  %v844 = vpack.c.b16 %v808, %v807
  %v845 = vpack.c.b16 %v810, %v809
  %v846 = vpack.c.b16 %v812, %v811
  %v847 = vpack.c.b16 %v814, %v813
  %v848 = vpack.c.b16 %v816, %v815
  %v849 = vpack.c.b16 %v818, %v817
  %v850 = vpack.c.b16 %v820, %v819
  %v851 = vpack.c.b16 %v822, %v821
  %v852 = vpack.c.b16 %v824, %v823
  %v853 = vpack.c.b16 %v826, %v825
  %881 = vmatpush.bf16.msra.mxu0 %v834
  %882 = vmatpush.bf16.msra.mxu0 %v833
  %883 = vmatpush.bf16.msra.mxu0 %v832
  %884 = vmatpush.bf16.msra.mxu0 %v831
  %885 = vmatpush.bf16.msra.mxu0 %v830
  %886 = vmatpush.bf16.msra.mxu0 %v829
  %887 = vmatpush.bf16.msra.mxu0 %v828
  %888 = vmatpush.bf16.msra.mxu0 %v827
  %889 = vmatmul.bf16.gmra.mxu0 %v110
  %v890 = vpop.f32.mrf.mxu0
  %v891 = vadd.f32 0.0, %v890
  %v892 = vpop.f32.mrf.mxu0
  %v893 = vadd.f32 0.0, %v892
  %894 = vmatmul.bf16.gmra.mxu0 %v114
  %v895 = vpop.f32.mrf.mxu0
  %v896 = vadd.f32 0.0, %v895
  %v897 = vpop.f32.mrf.mxu0
  %v898 = vadd.f32 0.0, %v897
  %899 = vdwg.mxu0
  %900 = vmatpush.bf16.msra.mxu0 %v842
  %901 = vmatpush.bf16.msra.mxu0 %v841
  %902 = vmatpush.bf16.msra.mxu0 %v840
  %903 = vmatpush.bf16.msra.mxu0 %v839
  %904 = vmatpush.bf16.msra.mxu0 %v838
  %905 = vmatpush.bf16.msra.mxu0 %v837
  %906 = vmatpush.bf16.msra.mxu0 %v836
  %907 = vmatpush.bf16.msra.mxu0 %v835
  %908 = vmatmul.bf16.gmra.mxu0 %v111
  %v909 = vpop.f32.mrf.mxu0
  %v910 = vadd.f32 %v891, %v909
  %v911 = vpop.f32.mrf.mxu0
  %v912 = vadd.f32 %v893, %v911
  %913 = vmatmul.bf16.gmra.mxu0 %v115
  %v914 = vpop.f32.mrf.mxu0
  %v915 = vadd.f32 %v896, %v914
  %v916 = vpop.f32.mrf.mxu0
  %v917 = vadd.f32 %v898, %v916
  %918 = vdwg.mxu0
  %919 = vmatpush.bf16.msra.mxu0 %v850
  %920 = vmatpush.bf16.msra.mxu0 %v849
  %921 = vmatpush.bf16.msra.mxu0 %v848
  %922 = vmatpush.bf16.msra.mxu0 %v847
  %923 = vmatpush.bf16.msra.mxu0 %v846
  %924 = vmatpush.bf16.msra.mxu0 %v845
  %925 = vmatpush.bf16.msra.mxu0 %v844
  %926 = vmatpush.bf16.msra.mxu0 %v843
  %927 = vmatmul.bf16.gmra.mxu0 %v112
  %v928 = vpop.f32.mrf.mxu0
  %v929 = vadd.f32 %v910, %v928
  %v930 = vpop.f32.mrf.mxu0
  %v931 = vadd.f32 %v912, %v930
  %932 = vmatmul.bf16.gmra.mxu0 %v116
  %v933 = vpop.f32.mrf.mxu0
  %v934 = vadd.f32 %v915, %v933
  %v935 = vpop.f32.mrf.mxu0
  %v936 = vadd.f32 %v917, %v935
  %937 = vdwg.mxu0
  %938 = vmatpush.bf16.msra.mxu0 0
  %939 = vmatpush.bf16.msra.mxu0 0
  %940 = vmatpush.bf16.msra.mxu0 0
  %941 = vmatpush.bf16.msra.mxu0 0
  %942 = vmatpush.bf16.msra.mxu0 0
  %943 = vmatpush.bf16.msra.mxu0 %v853
  %944 = vmatpush.bf16.msra.mxu0 %v852
  %945 = vmatpush.bf16.msra.mxu0 %v851
  %946 = vmatmul.bf16.gmra.mxu0 %v288
  %v947 = vpop.f32.mrf.mxu0
  %v948 = vadd.f32 %v929, %v947
  %v949 = vpop.f32.mrf.mxu0
  %v950 = vadd.f32 %v931, %v949
  %951 = vmatmul.bf16.gmra.mxu0 %v291
  %v952 = vpop.f32.mrf.mxu0
  %v953 = vadd.f32 %v934, %v952
  %v954 = vpop.f32.mrf.mxu0
  %v955 = vadd.f32 %v936, %v954
  %956 = vdwg.mxu0
  %v957 = vmax.f32 %v661, %v948
  %v958 = vmax.f32 %v662, %v950
  %v959 = vmax.f32 %v663, %v953
  %v960 = vmax.f32 %v664, %v955
  %v961 = vld [vmem:[%s5] sm:$0xf]
  %v962 = vld [vmem:[%s5 + $0x4] sm:$0xf]
  %v963 = vld [vmem:[%s5 + $0x8] sm:$0xf]
  %v964 = vld [vmem:[%s5 + $0xc] sm:$0xf]
  %v965 = vld [vmem:[%s5 + $0x10] sm:$0xf]
  %v966 = vld [vmem:[%s5 + $0x14] sm:$0xf]
  %v967 = vld [vmem:[%s5 + $0x18] sm:$0xf]
  %v968 = vld [vmem:[%s5 + $0x1c] sm:$0xf]
  %v969 = vld [vmem:[%s5 + $0x20] sm:$0xf]
  %v970 = vld [vmem:[%s5 + $0x24] sm:$0xf]
  %v971 = vld [vmem:[%s5 + $0x28] sm:$0xf]
  %v972 = vld [vmem:[%s5 + $0x2c] sm:$0xf]
  %v973 = vld [vmem:[%s5 + $0x30] sm:$0xf]
  %v974 = vld [vmem:[%s5 + $0x34] sm:$0xf]
  %v975 = vld [vmem:[%s5 + $0x38] sm:$0xf]
  %v976 = vld [vmem:[%s5 + $0x3c] sm:$0xf]
  %v977 = vld [vmem:[%s5 + $0x40] sm:$0xf]
  %v978 = vld [vmem:[%s5 + $0x44] sm:$0xf]
  %v979 = vld [vmem:[%s5 + $0x48] sm:$0xf]
  %v980 = vld [vmem:[%s5 + $0x4c] sm:$0xf]
  %v981 = vld [vmem:[%s5 + $0x50] sm:$0xf]
  %v982 = vld [vmem:[%s5 + $0x54] sm:$0xf]
  %v983 = vld [vmem:[%s5 + $0x58] sm:$0xf]
  %v984 = vld [vmem:[%s5 + $0x5c] sm:$0xf]
  %v985 = vld [vmem:[%s5 + $0x60] sm:$0xf]
  %v986 = vld [vmem:[%s5 + $0x64] sm:$0xf]
  %v987 = vld [vmem:[%s5 + $0x68] sm:$0xf]
  %v988 = vld [vmem:[%s5 + $0x6c] sm:$0xf]
  %v989 = vld [vmem:[%s5 + $0x70] sm:$0xf]
  %v990 = vld [vmem:[%s5 + $0x74] sm:$0xf]
  %v991 = vld [vmem:[%s5 + $0x78] sm:$0xf]
  %v992 = vld [vmem:[%s5 + $0x7c] sm:$0xf]
  %v993 = vld [vmem:[%s5 + $0x80] sm:$0xf]
  %v994 = vld [vmem:[%s5 + $0x84] sm:$0xf]
  %v995 = vld [vmem:[%s5 + $0x88] sm:$0xf]
  %v996 = vld [vmem:[%s5 + $0x8c] sm:$0xf]
  %v997 = vld [vmem:[%s5 + $0x90] sm:$0xf]
  %v998 = vld [vmem:[%s5 + $0x94] sm:$0xf]
  %v999 = vld [vmem:[%s5 + $0x98] sm:$0xf]
  %v1000 = vld [vmem:[%s5 + $0x9c] sm:$0xf]
  %v1001 = vld [vmem:[%s5 + $0xa0] sm:$0xf]
  %v1002 = vld [vmem:[%s5 + $0xa4] sm:$0xf]
  %v1003 = vld [vmem:[%s5 + $0xa8] sm:$0xf]
  %v1004 = vld [vmem:[%s5 + $0xac] sm:$0xf]
  %v1005 = vld [vmem:[%s5 + $0xb0] sm:$0xf]
  %v1006 = vld [vmem:[%s5 + $0xb4] sm:$0xf]
  %v1007 = vld [vmem:[%s5 + $0xb8] sm:$0xf]
  %v1008 = vld [vmem:[%s5 + $0xbc] sm:$0xf]
  %v1009 = vld [vmem:[%s5 + $0xc0] sm:$0xf]
  %v1010 = vld [vmem:[%s5 + $0xc4] sm:$0xf]
  %v1011 = vld [vmem:[%s5 + $0xc8] sm:$0xf]
  %v1012 = vld [vmem:[%s5 + $0xcc] sm:$0xf]
  %v1013 = vld [vmem:[%s5 + $0xd0] sm:$0xf]
  %v1014 = vld [vmem:[%s5 + $0xd4] sm:$0xf]
  %v1069 = vunpack.c.l.b16 %v961
  %v1070 = vunpack.c.l.b16 %v962
  %v1071 = vunpack.c.l.b16 %v963
  %v1072 = vunpack.c.l.b16 %v964
  %v1073 = vunpack.c.l.b16 %v965
  %v1074 = vunpack.c.l.b16 %v966
  %v1075 = vunpack.c.l.b16 %v967
  %v1076 = vunpack.c.l.b16 %v968
  %v1077 = vunpack.c.l.b16 %v969
  %v1078 = vunpack.c.l.b16 %v970
  %v1079 = vunpack.c.l.b16 %v971
  %v1080 = vunpack.c.l.b16 %v972
  %v1081 = vunpack.c.l.b16 %v973
  %v1082 = vunpack.c.l.b16 %v974
  %v1083 = vunpack.c.l.b16 %v975
  %v1084 = vunpack.c.l.b16 %v976
  %v1085 = vunpack.c.l.b16 %v977
  %v1086 = vunpack.c.l.b16 %v978
  %v1087 = vunpack.c.l.b16 %v979
  %v1088 = vunpack.c.l.b16 %v980
  %v1089 = vunpack.c.l.b16 %v981
  %v1090 = vunpack.c.l.b16 %v982
  %v1091 = vunpack.c.l.b16 %v983
  %v1092 = vunpack.c.l.b16 %v984
  %v1093 = vunpack.c.l.b16 %v985
  %v1094 = vunpack.c.l.b16 %v986
  %v1095 = vunpack.c.l.b16 %v987
  %v1096 = vunpack.c.l.b16 %v988
  %v1097 = vunpack.c.l.b16 %v989
  %v1098 = vunpack.c.l.b16 %v990
  %v1099 = vunpack.c.l.b16 %v991
  %v1100 = vunpack.c.l.b16 %v992
  %v1101 = vunpack.c.l.b16 %v993
  %v1102 = vunpack.c.l.b16 %v994
  %v1103 = vunpack.c.l.b16 %v995
  %v1104 = vunpack.c.l.b16 %v996
  %v1105 = vunpack.c.l.b16 %v997
  %v1106 = vunpack.c.l.b16 %v998
  %v1107 = vunpack.c.l.b16 %v999
  %v1108 = vunpack.c.l.b16 %v1000
  %v1109 = vunpack.c.l.b16 %v1001
  %v1110 = vunpack.c.l.b16 %v1002
  %v1111 = vunpack.c.l.b16 %v1003
  %v1112 = vunpack.c.l.b16 %v1004
  %v1113 = vunpack.c.l.b16 %v1005
  %v1114 = vunpack.c.l.b16 %v1006
  %v1115 = vunpack.c.l.b16 %v1007
  %v1116 = vunpack.c.l.b16 %v1008
  %v1117 = vunpack.c.l.b16 %v1009
  %v1118 = vunpack.c.l.b16 %v1010
  %v1119 = vunpack.c.l.b16 %v1011
  %v1120 = vunpack.c.l.b16 %v1012
  %v1121 = vunpack.c.l.b16 %v1013
  %v1122 = vunpack.c.l.b16 %v1014
  %v1123 = vpack.c.b16 %v1070, %v1069
  %v1124 = vpack.c.b16 %v1072, %v1071
  %v1125 = vpack.c.b16 %v1074, %v1073
  %v1126 = vpack.c.b16 %v1076, %v1075
  %v1127 = vpack.c.b16 %v1078, %v1077
  %v1128 = vpack.c.b16 %v1080, %v1079
  %v1129 = vpack.c.b16 %v1082, %v1081
  %v1130 = vpack.c.b16 %v1084, %v1083
  %v1131 = vpack.c.b16 %v1086, %v1085
  %v1132 = vpack.c.b16 %v1088, %v1087
  %v1133 = vpack.c.b16 %v1090, %v1089
  %v1134 = vpack.c.b16 %v1092, %v1091
  %v1135 = vpack.c.b16 %v1094, %v1093
  %v1136 = vpack.c.b16 %v1096, %v1095
  %v1137 = vpack.c.b16 %v1098, %v1097
  %v1138 = vpack.c.b16 %v1100, %v1099
  %v1139 = vpack.c.b16 %v1102, %v1101
  %v1140 = vpack.c.b16 %v1104, %v1103
  %v1141 = vpack.c.b16 %v1106, %v1105
  %v1142 = vpack.c.b16 %v1108, %v1107
  %v1143 = vpack.c.b16 %v1110, %v1109
  %v1144 = vpack.c.b16 %v1112, %v1111
  %v1145 = vpack.c.b16 %v1114, %v1113
  %v1146 = vpack.c.b16 %v1116, %v1115
  %v1147 = vpack.c.b16 %v1118, %v1117
  %v1148 = vpack.c.b16 %v1120, %v1119
  %v1149 = vpack.c.b16 %v1122, %v1121
  %1177 = vmatpush.bf16.msra.mxu0 %v1130
  %1178 = vmatpush.bf16.msra.mxu0 %v1129
  %1179 = vmatpush.bf16.msra.mxu0 %v1128
  %1180 = vmatpush.bf16.msra.mxu0 %v1127
  %1181 = vmatpush.bf16.msra.mxu0 %v1126
  %1182 = vmatpush.bf16.msra.mxu0 %v1125
  %1183 = vmatpush.bf16.msra.mxu0 %v1124
  %1184 = vmatpush.bf16.msra.mxu0 %v1123
  %1185 = vmatmul.bf16.gmra.mxu0 %v110
  %v1186 = vpop.f32.mrf.mxu0
  %v1187 = vadd.f32 0.0, %v1186
  %v1188 = vpop.f32.mrf.mxu0
  %v1189 = vadd.f32 0.0, %v1188
  %1190 = vmatmul.bf16.gmra.mxu0 %v114
  %v1191 = vpop.f32.mrf.mxu0
  %v1192 = vadd.f32 0.0, %v1191
  %v1193 = vpop.f32.mrf.mxu0
  %v1194 = vadd.f32 0.0, %v1193
  %1195 = vdwg.mxu0
  %1196 = vmatpush.bf16.msra.mxu0 %v1138
  %1197 = vmatpush.bf16.msra.mxu0 %v1137
  %1198 = vmatpush.bf16.msra.mxu0 %v1136
  %1199 = vmatpush.bf16.msra.mxu0 %v1135
  %1200 = vmatpush.bf16.msra.mxu0 %v1134
  %1201 = vmatpush.bf16.msra.mxu0 %v1133
  %1202 = vmatpush.bf16.msra.mxu0 %v1132
  %1203 = vmatpush.bf16.msra.mxu0 %v1131
  %1204 = vmatmul.bf16.gmra.mxu0 %v111
  %v1205 = vpop.f32.mrf.mxu0
  %v1206 = vadd.f32 %v1187, %v1205
  %v1207 = vpop.f32.mrf.mxu0
  %v1208 = vadd.f32 %v1189, %v1207
  %1209 = vmatmul.bf16.gmra.mxu0 %v115
  %v1210 = vpop.f32.mrf.mxu0
  %v1211 = vadd.f32 %v1192, %v1210
  %v1212 = vpop.f32.mrf.mxu0
  %v1213 = vadd.f32 %v1194, %v1212
  %1214 = vdwg.mxu0
  %1215 = vmatpush.bf16.msra.mxu0 %v1146
  %1216 = vmatpush.bf16.msra.mxu0 %v1145
  %1217 = vmatpush.bf16.msra.mxu0 %v1144
  %1218 = vmatpush.bf16.msra.mxu0 %v1143
  %1219 = vmatpush.bf16.msra.mxu0 %v1142
  %1220 = vmatpush.bf16.msra.mxu0 %v1141
  %1221 = vmatpush.bf16.msra.mxu0 %v1140
  %1222 = vmatpush.bf16.msra.mxu0 %v1139
  %1223 = vmatmul.bf16.gmra.mxu0 %v112
  %v1224 = vpop.f32.mrf.mxu0
  %v1225 = vadd.f32 %v1206, %v1224
  %v1226 = vpop.f32.mrf.mxu0
  %v1227 = vadd.f32 %v1208, %v1226
  %1228 = vmatmul.bf16.gmra.mxu0 %v116
  %v1229 = vpop.f32.mrf.mxu0
  %v1230 = vadd.f32 %v1211, %v1229
  %v1231 = vpop.f32.mrf.mxu0
  %v1232 = vadd.f32 %v1213, %v1231
  %1233 = vdwg.mxu0
  %1234 = vmatpush.bf16.msra.mxu0 0
  %1235 = vmatpush.bf16.msra.mxu0 0
  %1236 = vmatpush.bf16.msra.mxu0 0
  %1237 = vmatpush.bf16.msra.mxu0 0
  %1238 = vmatpush.bf16.msra.mxu0 0
  %1239 = vmatpush.bf16.msra.mxu0 %v1149
  %1240 = vmatpush.bf16.msra.mxu0 %v1148
  %1241 = vmatpush.bf16.msra.mxu0 %v1147
  %1242 = vmatmul.bf16.gmra.mxu0 %v288
  %v1243 = vpop.f32.mrf.mxu0
  %v1244 = vadd.f32 %v1225, %v1243
  %v1245 = vpop.f32.mrf.mxu0
  %v1246 = vadd.f32 %v1227, %v1245
  %1247 = vmatmul.bf16.gmra.mxu0 %v291
  %v1248 = vpop.f32.mrf.mxu0
  %v1249 = vadd.f32 %v1230, %v1248
  %v1250 = vpop.f32.mrf.mxu0
  %v1251 = vadd.f32 %v1232, %v1250
  %1252 = vdwg.mxu0
  %v1253 = vmax.f32 %v957, %v1244
  %v1254 = vmax.f32 %v958, %v1246
  %v1255 = vmax.f32 %v959, %v1249
  %v1256 = vmax.f32 %v960, %v1251
  %v1257 = vld [vmem:[%s1] sm:$0xff]
  %v1258 = vld [vmem:[%s1 + $0x8] sm:$0xff]
  %v1259 = vld [vmem:[%s1 + $0x10] sm:$0xff]
  %v1260 = vld [vmem:[%s1 + $0x18] sm:$0xff]
  %1262 = vset.pattern.permute.xlu0 0
  %1263 = vperm.xlu0 %1262, %v1257
  %v1264 = vpop.permute.xlu0 %1263
  %1267 = vset.pattern.permute.xlu0 0
  %1268 = vperm.xlu0 %1267, %v1258
  %v1269 = vpop.permute.xlu0 %1268
  %1272 = vset.pattern.permute.xlu0 0
  %1273 = vperm.xlu0 %1272, %v1259
  %v1274 = vpop.permute.xlu0 %1273
  %1277 = vset.pattern.permute.xlu0 0
  %1278 = vperm.xlu0 %1277, %v1260
  %v1279 = vpop.permute.xlu0 %1278
  %v1281 = vadd.f32 %v1253, %v1264
  %v1282 = vadd.f32 %v1254, %v1269
  %v1283 = vadd.f32 %v1255, %v1274
  %v1284 = vadd.f32 %v1256, %v1279
  %v1285 = vmax.f32 %v1281, 0.0
  %v1286 = vmax.f32 %v1282, 0.0
  %v1287 = vmax.f32 %v1283, 0.0
  %v1288 = vmax.f32 %v1284, 0.0
  %v1289 = vpack.c.bf16 %v1285, %v1285
  %v1290 = vpack.c.bf16 %v1286, %v1286
  %v1291 = vpack.c.bf16 %v1287, %v1287
  %v1292 = vpack.c.bf16 %v1288, %v1288
  %vm1293 = vcmask 257024
  %1294 = vst.msk [vmem:[%s6] sm:$0xf] %vm1293, %v1289
  %1295 = vst.msk [vmem:[%s6 + $0x4] sm:$0xf] %vm1293, %v1290
  %1296 = vst.msk [vmem:[%s6 + $0x8] sm:$0xf] %vm1293, %v1291
  %1297 = vst.msk [vmem:[%s6 + $0xc] sm:$0xf] %vm1293, %v1292
  // Predicated region
  $region26: #{alexnet_forward.10} parent=0 // pred_check
    _
  $region27: #{alexnet_forward.10} parent=0 // pred_check_branch
    %1299 = sbr.rel (0) target = $region29
  $region28: #{alexnet_forward.10} parent=0 // pred_region
    _
  $region29: #{alexnet_forward.10} parent=0 // pred_fallthru
    _
  // Predicated region
  $region30: #{alexnet_forward.10} parent=0 // pred_check
    _
  $region31: #{alexnet_forward.10} parent=0 // pred_check_branch
    %1301 = sbr.rel (0) target = $region33
  $region32: #{alexnet_forward.10} parent=0 // pred_region
    _
  $region33: #{alexnet_forward.10} parent=0 // pred_fallthru
    _

</llo_original>
